<compile_context>
chip_gen: v7x
topology: tpu7x:2x2x1
jax: 0.10.0
libtpu: 0.0.40
codegen_flags: <defaults>
</compile_context>

<pallas_src>
import functools

import jax
import jax.numpy as jnp
from jax.experimental import pallas as pl
from jax.experimental.pallas import tpu as pltpu


# ----------------------------- helpers ---------------------------------------

def _pick_tile(n, target):
    """Largest divisor of n that is <= target and a multiple of 8 (or n itself)."""
    if n <= target:
        return n
    for t in range(target, 7, -1):
        if n % t == 0 and t % 8 == 0:
            return t
    # TODO(synk): fall-through returns a single huge block; add masked tail
    # handling for awkward N before using at production scale (VMEM on v7x).
    return n


def fold_bn(w, b, gamma, beta, mean, var, eps=1e-5):
    """Fold eval-mode BatchNorm (per-channel) into the preceding Linear."""
    s = gamma / jnp.sqrt(var + eps)
    return w * s[None, :], (b - mean) * s + beta


# ----------------------------- Pallas kernels --------------------------------

def _proj_qkv_kernel(x_ref, prew_ref, preb_ref, qw_ref, qb_ref, kw_ref, kb_ref,
                     vw_ref, vb_ref, q_ref, k_ref, v_ref, *, md):
    # x: [tm, Cin] -> x1 = pre_fc(x); q/k/v = x1 @ {q,k,v}_w + b  (3 outputs).
    x1 = jnp.dot(x_ref[...].astype(md), prew_ref[...],
                 preferred_element_type=jnp.float32) + preb_ref[...]
    x1m = x1.astype(md)
    q = jnp.dot(x1m, qw_ref[...], preferred_element_type=jnp.float32) + qb_ref[...]
    k = jnp.dot(x1m, kw_ref[...], preferred_element_type=jnp.float32) + kb_ref[...]
    v = jnp.dot(x1m, vw_ref[...], preferred_element_type=jnp.float32) + vb_ref[...]
    q_ref[...] = q.astype(q_ref.dtype)
    k_ref[...] = k.astype(k_ref.dtype)
    v_ref[...] = v.astype(v_ref.dtype)


def pallas_fused_qkv(x, pre_w, pre_b, q_w, q_b, k_w, k_b, v_w, v_b,
                     tile_m=None, matmul_dtype=jnp.float32):
    B, N, Cin = x.shape
    D = pre_w.shape[1]
    BN = B * N
    tm = tile_m if tile_m is not None else _pick_tile(BN, 1024)
    md = matmul_dtype
    # Store k/v in bf16 when bf16 matmuls are requested: halves HBM traffic of the
    # K-x inflated gathered tensors downstream. q stays in x.dtype (small, f32).
    kv_dtype = jnp.bfloat16 if jnp.dtype(md) == jnp.dtype(jnp.bfloat16) else x.dtype

    w_spec = lambda shape: pl.BlockSpec(shape, lambda i: (0, 0))
    q_out, k_out, v_out = pl.pallas_call(
        functools.partial(_proj_qkv_kernel, md=md),
        out_shape=(jax.ShapeDtypeStruct((BN, D), x.dtype),
                   jax.ShapeDtypeStruct((BN, D), kv_dtype),
                   jax.ShapeDtypeStruct((BN, D), kv_dtype)),
        grid=(BN // tm,),
        in_specs=[
            pl.BlockSpec((tm, Cin), lambda i: (i, 0)),
            w_spec((Cin, D)), w_spec((1, D)),
            w_spec((D, D)), w_spec((1, D)),
            w_spec((D, D)), w_spec((1, D)),
            w_spec((D, D)), w_spec((1, D)),
        ],
        out_specs=(pl.BlockSpec((tm, D), lambda i: (i, 0)),
                   pl.BlockSpec((tm, D), lambda i: (i, 0)),
                   pl.BlockSpec((tm, D), lambda i: (i, 0))),
        compiler_params=pltpu.CompilerParams(dimension_semantics=("parallel",)),
    )(x.reshape(BN, Cin),
      pre_w.astype(md), pre_b.reshape(1, D),
      q_w.astype(md), q_b.reshape(1, D),
      k_w.astype(md), k_b.reshape(1, D),
      v_w.astype(md), v_b.reshape(1, D))
    return (q_out.reshape(B, N, D), k_out.reshape(B, N, D), v_out.reshape(B, N, D))


def _attn_post_kernel(q_ref, k_ref, v_ref, ph_ref, pc0_ref, res_ref,
                      pb1_ref, pw2_ref, pb2_ref,
                      aw1_ref, ab1_ref, aw2_ref, ab2_ref,
                      postw_ref, postb_ref,
                      o_ref, *, md):
    # q: [1,tn,D], k/v: [1,tn,K,D], ph (gathered pc@W1): [1,tn,K,Hp],
    # pc0 (pc@W1): [1,tn,Hp], res: [1,tn,Cin] -> post_fc(attention(.)) + res.
    _, tn, K, D = k_ref.shape
    Hp = ph_ref.shape[-1]

    # pos_fc: layer 1 was applied (linearly) to pc in glue and gathered; the
    # gather commutes with the linear map, so finish with bias + ReLU + layer 2.
    h = ph_ref[0] - pc0_ref[0][:, None, :] + pb1_ref[...]          # [tn,K,Hp]
    h = jnp.maximum(h, 0.0).reshape(tn * K, Hp)
    pos = (jnp.dot(h.astype(md), pw2_ref[...],
                   preferred_element_type=jnp.float32)
           + pb2_ref[...]).reshape(tn, K, D)                       # [tn,K,D]

    # attn_fc on (k - q + pos); elementwise in f32 (v5e has no bf16 VPU).
    q = q_ref[0].astype(jnp.float32)                               # [tn,D]
    k = k_ref[0].astype(jnp.float32)                               # [tn,K,D]
    attn_in = (k - q[:, None, :] + pos).reshape(tn * K, D)
    a = jnp.dot(attn_in.astype(md), aw1_ref[...],
                preferred_element_type=jnp.float32) + ab1_ref[...]
    a = jnp.maximum(a, 0.0)
    a = (jnp.dot(a.astype(md), aw2_ref[...],
                 preferred_element_type=jnp.float32)
         + ab2_ref[...]).reshape(tn, K, D)

    # softmax over the neighbor axis K (torch dim=-2); denominator on the EUP.
    a = a - jnp.max(a, axis=1, keepdims=True)
    e = jnp.exp(a)
    attn = e * pl.reciprocal(jnp.sum(e, axis=1, keepdims=True), approx=True)

    # weighted aggregation over neighbors + fused post_fc + residual
    v = v_ref[0].astype(jnp.float32)
    agg = jnp.sum((v + pos) * attn, axis=1)                        # [tn,D]
    y = (jnp.dot(agg.astype(md), postw_ref[...],
                 preferred_element_type=jnp.float32)
         + postb_ref[...] + res_ref[0])
    o_ref[0] = y.astype(o_ref.dtype)


def pallas_attn_post(q, k, v, pos_hg, pos_h0, residue,
                     pb1, pw2, pb2, aw1, ab1, aw2, ab2,
                     post_w, post_b, tile_n=None, matmul_dtype=jnp.float32,
                     vmem_limit_bytes=None):
    B, N, K, D = k.shape
    Cin = post_w.shape[1]
    Hp = pw2.shape[0]
    Ha = aw1.shape[1]
    md = matmul_dtype
    # v7x note: re-derive tn for 64 MiB VMEM and pass vmem_limit_bytes explicitly
    # at production shapes; defaults here are sized for the small test problem.
    tn = tile_n if tile_n is not None else _pick_tile(N, 128)
    assert N % tn == 0 and (tn % 8 == 0 or tn == N)

    w_spec = lambda shape: pl.BlockSpec(shape, lambda b, n: (0, 0))
    return pl.pallas_call(
        functools.partial(_attn_post_kernel, md=md),
        out_shape=jax.ShapeDtypeStruct((B, N, Cin), q.dtype),
        grid=(B, N // tn),
        in_specs=[
            pl.BlockSpec((1, tn, D), lambda b, n: (b, n, 0)),
            pl.BlockSpec((1, tn, K, D), lambda b, n: (b, n, 0, 0)),
            pl.BlockSpec((1, tn, K, D), lambda b, n: (b, n, 0, 0)),
            pl.BlockSpec((1, tn, K, Hp), lambda b, n: (b, n, 0, 0)),
            pl.BlockSpec((1, tn, Hp), lambda b, n: (b, n, 0)),
            pl.BlockSpec((1, tn, Cin), lambda b, n: (b, n, 0)),
            w_spec((1, Hp)),
            w_spec((Hp, D)), w_spec((1, D)),
            w_spec((D, Ha)), w_spec((1, Ha)),
            w_spec((Ha, D)), w_spec((1, D)),
            w_spec((D, Cin)), w_spec((1, Cin)),
        ],
        out_specs=pl.BlockSpec((1, tn, Cin), lambda b, n: (b, n, 0)),
        compiler_params=pltpu.CompilerParams(
            dimension_semantics=("parallel", "parallel"),
            vmem_limit_bytes=vmem_limit_bytes),
    )(q, k, v, pos_hg, pos_h0, residue,
      pb1.reshape(1, Hp),
      pw2.astype(md), pb2.reshape(1, D),
      aw1.astype(md), ab1.reshape(1, Ha),
      aw2.astype(md), ab2.reshape(1, D),
      post_w.astype(md), post_b.reshape(1, Cin))


# ------------------------------ JAX glue --------------------------------------

def dist_mat(pc1, pc2):
    return jnp.sum((pc1[:, :, None, :] - pc2[:, None, :, :]) ** 2, axis=-1)


def index(x, idx):
    # x: [B, M, C], idx: [B, N, K] -> [B, N, K, C]
    return jax.vmap(lambda a, i: a[i])(x, idx)


def query_group(x, pc1, pc2, grp_size, cat_pc=False):
    mat = dist_mat(pc1, pc2)
    # k smallest, sorted ascending (== torch.topk largest=False sorted=True)
    _, knn_idx = jax.lax.top_k(-mat, grp_size)
    knn_pc = index(pc2, knn_idx) - pc1[:, :, None, :]
    knn_x = index(x, knn_idx)
    if cat_pc:
        return jnp.concatenate([knn_pc, knn_x], axis=-1)
    return knn_x


def encoder_attn_forward(x, pc, p, knn_size, tile_n=None, tile_m=None,
                         matmul_dtype=jnp.float32):
    residue = x
    q, k, v = pallas_fused_qkv(x, p["pre_w"], p["pre_b"],
                               p["q_w"], p["q_b"], p["k_w"], p["k_b"],
                               p["v_w"], p["v_b"], tile_m, matmul_dtype)

    # kNN indices + row gathers are data-dependent -> stay in XLA glue.
    # TODO(synk): in-kernel gather (scalar-prefetched knn_idx + per-row DMA) would
    # remove the K-x inflated HBM round trip of kn/vg at production N.
    mat = dist_mat(pc, pc)
    _, knn_idx = jax.lax.top_k(-mat, knn_size)
    kn = index(k, knn_idx)                                 # [B,N,K,D]
    vg = index(v, knn_idx)                                 # [B,N,K,D]

    pw1, pb1 = fold_bn(p["pw1"], p["pb1"], p["pg"], p["pbeta"], p["pmean"], p["pvar"])
    aw1, ab1 = fold_bn(p["aw1"], p["ab1"], p["ag"], p["abeta"], p["amean"], p["avar"])

    # pos_fc layer 1 is linear, so it commutes with the gather:
    #   (gather(pc) - pc) @ W1 + b1  ==  gather(pc @ W1) - (pc @ W1) + b1.
    # Projecting pc to the Hp-wide hidden space in glue keeps the 3-wide axis
    # (terrible lane layout) out of the kernel and out of the gathered tensors.
    pos_h0 = jnp.einsum("bnc,ch->bnh", pc, pw1)            # [B,N,Hp]
    pos_hg = index(pos_h0, knn_idx)                        # [B,N,K,Hp]

    x_out = pallas_attn_post(q, kn, vg, pos_hg, pos_h0, residue,
                             pb1, p["pw2"], p["pb2"],
                             aw1, ab1, p["aw2"], p["ab2"],
                             p["post_w"], p["post_b"],
                             tile_n, matmul_dtype)
    return x_out, pc


# ----------------------- pure-JAX reference (for checking) --------------------

def ref_forward(x, pc, p, knn_size, eps=1e-5):
    def lin(t, w, b):
        return t @ w + b

    def bn(t, g, be, m, v):
        return (t - m) / jnp.sqrt(v + eps) * g + be

    residue = x
    x1 = lin(x, p["pre_w"], p["pre_b"])
    q = lin(x1, p["q_w"], p["q_b"])
    k = lin(x1, p["k_w"], p["k_b"])
    v = lin(x1, p["v_w"], p["v_b"])
    kg = query_group(k, pc, pc, knn_size, True)
    vg = query_group(v, pc, pc, knn_size, False)
    pos3, kn = kg[..., 0:3], kg[..., 3:]
    pos = lin(jnp.maximum(bn(lin(pos3, p["pw1"], p["pb1"]),
                             p["pg"], p["pbeta"], p["pmean"], p["pvar"]), 0.0),
              p["pw2"], p["pb2"])
    attn = kn - q[:, :, None, :] + pos
    attn = lin(jnp.maximum(bn(lin(attn, p["aw1"], p["ab1"]),
                              p["ag"], p["abeta"], p["amean"], p["avar"]), 0.0),
               p["aw2"], p["ab2"])
    attn = jax.nn.softmax(attn, axis=-2)
    out = jnp.sum((vg + pos) * attn, axis=2)
    return lin(out, p["post_w"], p["post_b"]) + residue


# --------------------------------- main ----------------------------------------

if __name__ == "__main__":
    B, N = 2, 32
    in_dim, dim, pos_hid, attn_hid, knn_size = 16, 32, 16, 16, 8
    tile_n, tile_m = 16, 32   # exercise both grid tilings (grid=(2,2) and (2,))

    key = jax.random.PRNGKey(0)
    ks = jax.random.split(key, 32)

    def W(k_, shape, scale=0.1):
        return (jax.random.normal(k_, shape) * scale).astype(jnp.float32)

    params = {
        "pre_w": W(ks[0], (in_dim, dim)),  "pre_b": W(ks[1], (dim,)),
        "q_w":   W(ks[2], (dim, dim)),     "q_b":   W(ks[3], (dim,)),
        "k_w":   W(ks[4], (dim, dim)),     "k_b":   W(ks[5], (dim,)),
        "v_w":   W(ks[6], (dim, dim)),     "v_b":   W(ks[7], (dim,)),
        # pos_fc: Linear(3, pos_hid) -> BN(pos_hid) -> ReLU -> Linear(pos_hid, dim)
        "pw1": W(ks[8], (3, pos_hid)),     "pb1": W(ks[9], (pos_hid,)),
        "pg":  0.5 + jax.random.uniform(ks[10], (pos_hid,), dtype=jnp.float32),
        "pbeta": W(ks[11], (pos_hid,)),
        "pmean": W(ks[12], (pos_hid,)),
        "pvar": 0.5 + jax.random.uniform(ks[13], (pos_hid,), dtype=jnp.float32),
        "pw2": W(ks[14], (pos_hid, dim)),  "pb2": W(ks[15], (dim,)),
        # attn_fc: Linear(dim, attn_hid) -> BN(attn_hid) -> ReLU -> Linear(attn_hid, dim)
        "aw1": W(ks[16], (dim, attn_hid)), "ab1": W(ks[17], (attn_hid,)),
        "ag":  0.5 + jax.random.uniform(ks[18], (attn_hid,), dtype=jnp.float32),
        "abeta": W(ks[19], (attn_hid,)),
        "amean": W(ks[20], (attn_hid,)),
        "avar": 0.5 + jax.random.uniform(ks[21], (attn_hid,), dtype=jnp.float32),
        "aw2": W(ks[22], (attn_hid, dim)), "ab2": W(ks[23], (dim,)),
        "post_w": W(ks[24], (dim, in_dim)), "post_b": W(ks[25], (in_dim,)),
    }

    x = jax.random.normal(ks[26], (B, N, in_dim), dtype=jnp.float32)
    pc = jax.random.normal(ks[27], (B, N, 3), dtype=jnp.float32)

    ref_x = ref_forward(x, pc, params, knn_size)

    # --- f32 matmuls (reference-accurate path) ---
    fwd = jax.jit(functools.partial(encoder_attn_forward, knn_size=knn_size,
                                    tile_n=tile_n, tile_m=tile_m,
                                    matmul_dtype=jnp.float32))
    out_x, out_pc = fwd(x, pc, params)
    out_x = jax.block_until_ready(out_x)
    assert out_x.shape == (B, N, in_dim)
    err = float(jnp.max(jnp.abs(out_x - ref_x)))
    assert jnp.allclose(out_x, ref_x, rtol=2e-3, atol=2e-3), err

    # --- bf16 MXU operands / bf16 k,v storage, f32 accumulation & elementwise ---
    fwd_bf16 = jax.jit(functools.partial(encoder_attn_forward, knn_size=knn_size,
                                         tile_n=tile_n, tile_m=tile_m,
                                         matmul_dtype=jnp.bfloat16))
    out_bf, _ = fwd_bf16(x, pc, params)
    out_bf = jax.block_until_ready(out_bf)
    err_bf = float(jnp.max(jnp.abs(out_bf - ref_x)))
    assert jnp.allclose(out_bf, ref_x, rtol=5e-2, atol=5e-2), err_bf

    print("KERNEL_OK")
</pallas_src>

<mosaic_0001>
module attributes {stable_mosaic.version = 11 : i64} {
  func.func @_proj_qkv_kernel(%arg0: i32, %arg1: memref<32x16xf32, #tpu.memory_space<vmem>>, %arg2: memref<16x32xf32, #tpu.memory_space<vmem>>, %arg3: memref<1x32xf32, #tpu.memory_space<vmem>>, %arg4: memref<32x32xf32, #tpu.memory_space<vmem>>, %arg5: memref<1x32xf32, #tpu.memory_space<vmem>>, %arg6: memref<32x32xf32, #tpu.memory_space<vmem>>, %arg7: memref<1x32xf32, #tpu.memory_space<vmem>>, %arg8: memref<32x32xf32, #tpu.memory_space<vmem>>, %arg9: memref<1x32xf32, #tpu.memory_space<vmem>>, %arg10: memref<32x32xf32, #tpu.memory_space<vmem>>, %arg11: memref<32x32xf32, #tpu.memory_space<vmem>>, %arg12: memref<32x32xf32, #tpu.memory_space<vmem>>) attributes {dimension_semantics = [#tpu.dimension_semantics<parallel>], iteration_bounds = array<i64: 2>, scalar_prefetch = 0 : i64, scratch_operands = 0 : i64, tpu.core_type = #tpu.core_type<tc>, window_params = [{transform_indices = @transform_0, window_bounds = array<i64: 32, 16>}, {pipeline_mode = #tpu.pipeline_mode<synchronous>, transform_indices = @transform_1, window_bounds = array<i64: 16, 32>}, {pipeline_mode = #tpu.pipeline_mode<synchronous>, transform_indices = @transform_2, window_bounds = array<i64: 1, 32>}, {pipeline_mode = #tpu.pipeline_mode<synchronous>, transform_indices = @transform_3, window_bounds = array<i64: 32, 32>}, {pipeline_mode = #tpu.pipeline_mode<synchronous>, transform_indices = @transform_4, window_bounds = array<i64: 1, 32>}, {pipeline_mode = #tpu.pipeline_mode<synchronous>, transform_indices = @transform_5, window_bounds = array<i64: 32, 32>}, {pipeline_mode = #tpu.pipeline_mode<synchronous>, transform_indices = @transform_6, window_bounds = array<i64: 1, 32>}, {pipeline_mode = #tpu.pipeline_mode<synchronous>, transform_indices = @transform_7, window_bounds = array<i64: 32, 32>}, {pipeline_mode = #tpu.pipeline_mode<synchronous>, transform_indices = @transform_8, window_bounds = array<i64: 1, 32>}, {transform_indices = @transform_9, window_bounds = array<i64: 32, 32>}, {transform_indices = @transform_10, window_bounds = array<i64: 32, 32>}, {transform_indices = @transform_11, window_bounds = array<i64: 32, 32>}]} {
    %c0 = arith.constant 0 : index
    %c0_0 = arith.constant 0 : index
    %0 = vector.load %arg1[%c0, %c0_0] : memref<32x16xf32, #tpu.memory_space<vmem>>, vector<32x16xf32>
    %c0_1 = arith.constant 0 : index
    %c0_2 = arith.constant 0 : index
    %1 = vector.load %arg2[%c0_1, %c0_2] : memref<16x32xf32, #tpu.memory_space<vmem>>, vector<16x32xf32>
    %cst = arith.constant dense<0.000000e+00> : vector<32x32xf32>
    %2 = tpu.matmul %0, %1, %cst {dimension_numbers = #tpu.dot_dimension_numbers<[1], [0], [0], [1], [0, 0, 1, 1], [], []>} : vector<32x16xf32>, vector<16x32xf32>, vector<32x32xf32> -> vector<32x32xf32>
    %c0_3 = arith.constant 0 : index
    %c0_4 = arith.constant 0 : index
    %3 = vector.load %arg3[%c0_3, %c0_4] : memref<1x32xf32, #tpu.memory_space<vmem>>, vector<1x32xf32>
    %4 = vector.broadcast %3 : vector<1x32xf32> to vector<32x32xf32>
    %5 = arith.addf %2, %4 : vector<32x32xf32>
    %c0_5 = arith.constant 0 : index
    %c0_6 = arith.constant 0 : index
    %6 = vector.load %arg4[%c0_5, %c0_6] : memref<32x32xf32, #tpu.memory_space<vmem>>, vector<32x32xf32>
    %cst_7 = arith.constant dense<0.000000e+00> : vector<32x32xf32>
    %7 = tpu.matmul %5, %6, %cst_7 {dimension_numbers = #tpu.dot_dimension_numbers<[1], [0], [0], [1], [0, 0, 1, 1], [], []>} : vector<32x32xf32>, vector<32x32xf32>, vector<32x32xf32> -> vector<32x32xf32>
    %c0_8 = arith.constant 0 : index
    %c0_9 = arith.constant 0 : index
    %8 = vector.load %arg5[%c0_8, %c0_9] : memref<1x32xf32, #tpu.memory_space<vmem>>, vector<1x32xf32>
    %9 = vector.broadcast %8 : vector<1x32xf32> to vector<32x32xf32>
    %10 = arith.addf %7, %9 : vector<32x32xf32>
    %c0_10 = arith.constant 0 : index
    %c0_11 = arith.constant 0 : index
    %11 = vector.load %arg6[%c0_10, %c0_11] : memref<32x32xf32, #tpu.memory_space<vmem>>, vector<32x32xf32>
    %cst_12 = arith.constant dense<0.000000e+00> : vector<32x32xf32>
    %12 = tpu.matmul %5, %11, %cst_12 {dimension_numbers = #tpu.dot_dimension_numbers<[1], [0], [0], [1], [0, 0, 1, 1], [], []>} : vector<32x32xf32>, vector<32x32xf32>, vector<32x32xf32> -> vector<32x32xf32>
    %c0_13 = arith.constant 0 : index
    %c0_14 = arith.constant 0 : index
    %13 = vector.load %arg7[%c0_13, %c0_14] : memref<1x32xf32, #tpu.memory_space<vmem>>, vector<1x32xf32>
    %14 = vector.broadcast %13 : vector<1x32xf32> to vector<32x32xf32>
    %15 = arith.addf %12, %14 : vector<32x32xf32>
    %c0_15 = arith.constant 0 : index
    %c0_16 = arith.constant 0 : index
    %16 = vector.load %arg8[%c0_15, %c0_16] : memref<32x32xf32, #tpu.memory_space<vmem>>, vector<32x32xf32>
    %cst_17 = arith.constant dense<0.000000e+00> : vector<32x32xf32>
    %17 = tpu.matmul %5, %16, %cst_17 {dimension_numbers = #tpu.dot_dimension_numbers<[1], [0], [0], [1], [0, 0, 1, 1], [], []>} : vector<32x32xf32>, vector<32x32xf32>, vector<32x32xf32> -> vector<32x32xf32>
    %c0_18 = arith.constant 0 : index
    %c0_19 = arith.constant 0 : index
    %18 = vector.load %arg9[%c0_18, %c0_19] : memref<1x32xf32, #tpu.memory_space<vmem>>, vector<1x32xf32>
    %19 = vector.broadcast %18 : vector<1x32xf32> to vector<32x32xf32>
    %20 = arith.addf %17, %19 : vector<32x32xf32>
    %c0_20 = arith.constant 0 : index
    %c0_21 = arith.constant 0 : index
    %21 = vector.load %arg10[%c0_20, %c0_21] : memref<32x32xf32, #tpu.memory_space<vmem>>, vector<32x32xf32>
    tpu.vector_store %arg10[%c0_20, %c0_21], %10 {strides = array<i32>} : memref<32x32xf32, #tpu.memory_space<vmem>>, vector<32x32xf32>,
    %c0_22 = arith.constant 0 : index
    %c0_23 = arith.constant 0 : index
    %22 = vector.load %arg11[%c0_22, %c0_23] : memref<32x32xf32, #tpu.memory_space<vmem>>, vector<32x32xf32>
    tpu.vector_store %arg11[%c0_22, %c0_23], %15 {strides = array<i32>} : memref<32x32xf32, #tpu.memory_space<vmem>>, vector<32x32xf32>,
    %c0_24 = arith.constant 0 : index
    %c0_25 = arith.constant 0 : index
    %23 = vector.load %arg12[%c0_24, %c0_25] : memref<32x32xf32, #tpu.memory_space<vmem>>, vector<32x32xf32>
    tpu.vector_store %arg12[%c0_24, %c0_25], %20 {strides = array<i32>} : memref<32x32xf32, #tpu.memory_space<vmem>>, vector<32x32xf32>,
    return
  }
  func.func @transform_0(%arg0: i32) -> (i32, i32) {
    %c0_i32 = arith.constant 0 : i32
    %c0_i32_0 = arith.constant 0 : i32
    return %arg0, %c0_i32 : i32, i32
  }
  func.func @transform_1(%arg0: i32) -> (i32, i32) {
    %c0_i32 = arith.constant 0 : i32
    %c0_i32_0 = arith.constant 0 : i32
    %c0_i32_1 = arith.constant 0 : i32
    return %c0_i32, %c0_i32_0 : i32, i32
  }
  func.func @transform_2(%arg0: i32) -> (i32, i32) {
    %c0_i32 = arith.constant 0 : i32
    %c0_i32_0 = arith.constant 0 : i32
    %c0_i32_1 = arith.constant 0 : i32
    return %c0_i32, %c0_i32_0 : i32, i32
  }
  func.func @transform_3(%arg0: i32) -> (i32, i32) {
    %c0_i32 = arith.constant 0 : i32
    %c0_i32_0 = arith.constant 0 : i32
    %c0_i32_1 = arith.constant 0 : i32
    return %c0_i32, %c0_i32_0 : i32, i32
  }
  func.func @transform_4(%arg0: i32) -> (i32, i32) {
    %c0_i32 = arith.constant 0 : i32
    %c0_i32_0 = arith.constant 0 : i32
    %c0_i32_1 = arith.constant 0 : i32
    return %c0_i32, %c0_i32_0 : i32, i32
  }
  func.func @transform_5(%arg0: i32) -> (i32, i32) {
    %c0_i32 = arith.constant 0 : i32
    %c0_i32_0 = arith.constant 0 : i32
    %c0_i32_1 = arith.constant 0 : i32
    return %c0_i32, %c0_i32_0 : i32, i32
  }
  func.func @transform_6(%arg0: i32) -> (i32, i32) {
    %c0_i32 = arith.constant 0 : i32
    %c0_i32_0 = arith.constant 0 : i32
    %c0_i32_1 = arith.constant 0 : i32
    return %c0_i32, %c0_i32_0 : i32, i32
  }
  func.func @transform_7(%arg0: i32) -> (i32, i32) {
    %c0_i32 = arith.constant 0 : i32
    %c0_i32_0 = arith.constant 0 : i32
    %c0_i32_1 = arith.constant 0 : i32
    return %c0_i32, %c0_i32_0 : i32, i32
  }
  func.func @transform_8(%arg0: i32) -> (i32, i32) {
    %c0_i32 = arith.constant 0 : i32
    %c0_i32_0 = arith.constant 0 : i32
    %c0_i32_1 = arith.constant 0 : i32
    return %c0_i32, %c0_i32_0 : i32, i32
  }
  func.func @transform_9(%arg0: i32) -> (i32, i32) {
    %c0_i32 = arith.constant 0 : i32
    %c0_i32_0 = arith.constant 0 : i32
    return %arg0, %c0_i32 : i32, i32
  }
  func.func @transform_10(%arg0: i32) -> (i32, i32) {
    %c0_i32 = arith.constant 0 : i32
    %c0_i32_0 = arith.constant 0 : i32
    return %arg0, %c0_i32 : i32, i32
  }
  func.func @transform_11(%arg0: i32) -> (i32, i32) {
    %c0_i32 = arith.constant 0 : i32
    %c0_i32_0 = arith.constant 0 : i32
    return %arg0, %c0_i32 : i32, i32
  }
}

module attributes {stable_mosaic.version = 11 : i64} {
  func.func @_attn_post_kernel(%arg0: i32, %arg1: i32, %arg2: memref<1x16x32xf32, #tpu.memory_space<vmem>>, %arg3: memref<1x16x8x32xf32, #tpu.memory_space<vmem>>, %arg4: memref<1x16x8x32xf32, #tpu.memory_space<vmem>>, %arg5: memref<1x16x8x16xf32, #tpu.memory_space<vmem>>, %arg6: memref<1x16x16xf32, #tpu.memory_space<vmem>>, %arg7: memref<1x16x16xf32, #tpu.memory_space<vmem>>, %arg8: memref<1x16xf32, #tpu.memory_space<vmem>>, %arg9: memref<16x32xf32, #tpu.memory_space<vmem>>, %arg10: memref<1x32xf32, #tpu.memory_space<vmem>>, %arg11: memref<32x16xf32, #tpu.memory_space<vmem>>, %arg12: memref<1x16xf32, #tpu.memory_space<vmem>>, %arg13: memref<16x32xf32, #tpu.memory_space<vmem>>, %arg14: memref<1x32xf32, #tpu.memory_space<vmem>>, %arg15: memref<32x16xf32, #tpu.memory_space<vmem>>, %arg16: memref<1x16xf32, #tpu.memory_space<vmem>>, %arg17: memref<1x16x16xf32, #tpu.memory_space<vmem>>) attributes {dimension_semantics = [#tpu.dimension_semantics<parallel>, #tpu.dimension_semantics<parallel>], iteration_bounds = array<i64: 2, 2>, scalar_prefetch = 0 : i64, scratch_operands = 0 : i64, tpu.core_type = #tpu.core_type<tc>, window_params = [{transform_indices = @transform_0, window_bounds = array<i64: 1, 16, 32>}, {transform_indices = @transform_1, window_bounds = array<i64: 1, 16, 8, 32>}, {transform_indices = @transform_2, window_bounds = array<i64: 1, 16, 8, 32>}, {transform_indices = @transform_3, window_bounds = array<i64: 1, 16, 8, 16>}, {transform_indices = @transform_4, window_bounds = array<i64: 1, 16, 16>}, {transform_indices = @transform_5, window_bounds = array<i64: 1, 16, 16>}, {pipeline_mode = #tpu.pipeline_mode<synchronous>, transform_indices = @transform_6, window_bounds = array<i64: 1, 16>}, {pipeline_mode = #tpu.pipeline_mode<synchronous>, transform_indices = @transform_7, window_bounds = array<i64: 16, 32>}, {pipeline_mode = #tpu.pipeline_mode<synchronous>, transform_indices = @transform_8, window_bounds = array<i64: 1, 32>}, {pipeline_mode = #tpu.pipeline_mode<synchronous>, transform_indices = @transform_9, window_bounds = array<i64: 32, 16>}, {pipeline_mode = #tpu.pipeline_mode<synchronous>, transform_indices = @transform_10, window_bounds = array<i64: 1, 16>}, {pipeline_mode = #tpu.pipeline_mode<synchronous>, transform_indices = @transform_11, window_bounds = array<i64: 16, 32>}, {pipeline_mode = #tpu.pipeline_mode<synchronous>, transform_indices = @transform_12, window_bounds = array<i64: 1, 32>}, {pipeline_mode = #tpu.pipeline_mode<synchronous>, transform_indices = @transform_13, window_bounds = array<i64: 32, 16>}, {pipeline_mode = #tpu.pipeline_mode<synchronous>, transform_indices = @transform_14, window_bounds = array<i64: 1, 16>}, {transform_indices = @transform_15, window_bounds = array<i64: 1, 16, 16>}]} {
    %c0 = arith.constant 0 : index
    %c0_0 = arith.constant 0 : index
    %c0_1 = arith.constant 0 : index
    %c0_2 = arith.constant 0 : index
    %0 = vector.load %arg5[%c0, %c0_0, %c0_1, %c0_2] : memref<1x16x8x16xf32, #tpu.memory_space<vmem>>, vector<1x16x8x16xf32>
    %1 = vector.shape_cast %0 : vector<1x16x8x16xf32> to vector<16x8x16xf32>
    %c0_3 = arith.constant 0 : index
    %c0_4 = arith.constant 0 : index
    %c0_5 = arith.constant 0 : index
    %2 = vector.load %arg6[%c0_3, %c0_4, %c0_5] : memref<1x16x16xf32, #tpu.memory_space<vmem>>, vector<1x16x16xf32>
    %3 = vector.shape_cast %2 : vector<1x16x16xf32> to vector<16x16xf32>
    %4 = vector.shape_cast %3 : vector<16x16xf32> to vector<16x1x16xf32>
    %5 = vector.broadcast %4 : vector<16x1x16xf32> to vector<16x8x16xf32>
    %6 = arith.subf %1, %5 : vector<16x8x16xf32>
    %c0_6 = arith.constant 0 : index
    %c0_7 = arith.constant 0 : index
    %7 = vector.load %arg8[%c0_6, %c0_7] : memref<1x16xf32, #tpu.memory_space<vmem>>, vector<1x16xf32>
    %8 = vector.shape_cast %7 : vector<1x16xf32> to vector<1x1x16xf32>
    %9 = vector.broadcast %8 : vector<1x1x16xf32> to vector<16x8x16xf32>
    %10 = arith.addf %6, %9 : vector<16x8x16xf32>
    %cst = arith.constant 0.000000e+00 : f32
    %11 = vector.broadcast %cst : f32 to vector<16x8x16xf32>
    %12 = arith.maximumf %10, %11 : vector<16x8x16xf32>
    %13 = vector.shape_cast %12 : vector<16x8x16xf32> to vector<128x16xf32>
    %c0_8 = arith.constant 0 : index
    %c0_9 = arith.constant 0 : index
    %14 = vector.load %arg9[%c0_8, %c0_9] : memref<16x32xf32, #tpu.memory_space<vmem>>, vector<16x32xf32>
    %cst_10 = arith.constant dense<0.000000e+00> : vector<128x32xf32>
    %15 = tpu.matmul %13, %14, %cst_10 {dimension_numbers = #tpu.dot_dimension_numbers<[1], [0], [0], [1], [0, 0, 1, 1], [], []>} : vector<128x16xf32>, vector<16x32xf32>, vector<128x32xf32> -> vector<128x32xf32>
    %c0_11 = arith.constant 0 : index
    %c0_12 = arith.constant 0 : index
    %16 = vector.load %arg10[%c0_11, %c0_12] : memref<1x32xf32, #tpu.memory_space<vmem>>, vector<1x32xf32>
    %17 = vector.broadcast %16 : vector<1x32xf32> to vector<128x32xf32>
    %18 = arith.addf %15, %17 : vector<128x32xf32>
    %19 = vector.shape_cast %18 : vector<128x32xf32> to vector<16x8x32xf32>
    %c0_13 = arith.constant 0 : index
    %c0_14 = arith.constant 0 : index
    %c0_15 = arith.constant 0 : index
    %20 = vector.load %arg2[%c0_13, %c0_14, %c0_15] : memref<1x16x32xf32, #tpu.memory_space<vmem>>, vector<1x16x32xf32>
    %21 = vector.shape_cast %20 : vector<1x16x32xf32> to vector<16x32xf32>
    %c0_16 = arith.constant 0 : index
    %c0_17 = arith.constant 0 : index
    %c0_18 = arith.constant 0 : index
    %c0_19 = arith.constant 0 : index
    %22 = vector.load %arg3[%c0_16, %c0_17, %c0_18, %c0_19] : memref<1x16x8x32xf32, #tpu.memory_space<vmem>>, vector<1x16x8x32xf32>
    %23 = vector.shape_cast %22 : vector<1x16x8x32xf32> to vector<16x8x32xf32>
    %24 = vector.shape_cast %21 : vector<16x32xf32> to vector<16x1x32xf32>
    %25 = vector.broadcast %24 : vector<16x1x32xf32> to vector<16x8x32xf32>
    %26 = arith.subf %23, %25 : vector<16x8x32xf32>
    %27 = arith.addf %26, %19 : vector<16x8x32xf32>
    %28 = vector.shape_cast %27 : vector<16x8x32xf32> to vector<128x32xf32>
    %c0_20 = arith.constant 0 : index
    %c0_21 = arith.constant 0 : index
    %29 = vector.load %arg11[%c0_20, %c0_21] : memref<32x16xf32, #tpu.memory_space<vmem>>, vector<32x16xf32>
    %cst_22 = arith.constant dense<0.000000e+00> : vector<128x16xf32>
    %30 = tpu.matmul %28, %29, %cst_22 {dimension_numbers = #tpu.dot_dimension_numbers<[1], [0], [0], [1], [0, 0, 1, 1], [], []>} : vector<128x32xf32>, vector<32x16xf32>, vector<128x16xf32> -> vector<128x16xf32>
    %c0_23 = arith.constant 0 : index
    %c0_24 = arith.constant 0 : index
    %31 = vector.load %arg12[%c0_23, %c0_24] : memref<1x16xf32, #tpu.memory_space<vmem>>, vector<1x16xf32>
    %32 = vector.broadcast %31 : vector<1x16xf32> to vector<128x16xf32>
    %33 = arith.addf %30, %32 : vector<128x16xf32>
    %cst_25 = arith.constant 0.000000e+00 : f32
    %34 = vector.broadcast %cst_25 : f32 to vector<128x16xf32>
    %35 = arith.maximumf %33, %34 : vector<128x16xf32>
    %c0_26 = arith.constant 0 : index
    %c0_27 = arith.constant 0 : index
    %36 = vector.load %arg13[%c0_26, %c0_27] : memref<16x32xf32, #tpu.memory_space<vmem>>, vector<16x32xf32>
    %cst_28 = arith.constant dense<0.000000e+00> : vector<128x32xf32>
    %37 = tpu.matmul %35, %36, %cst_28 {dimension_numbers = #tpu.dot_dimension_numbers<[1], [0], [0], [1], [0, 0, 1, 1], [], []>} : vector<128x16xf32>, vector<16x32xf32>, vector<128x32xf32> -> vector<128x32xf32>
    %c0_29 = arith.constant 0 : index
    %c0_30 = arith.constant 0 : index
    %38 = vector.load %arg14[%c0_29, %c0_30] : memref<1x32xf32, #tpu.memory_space<vmem>>, vector<1x32xf32>
    %39 = vector.broadcast %38 : vector<1x32xf32> to vector<128x32xf32>
    %40 = arith.addf %37, %39 : vector<128x32xf32>
    %41 = vector.shape_cast %40 : vector<128x32xf32> to vector<16x8x32xf32>
    %cst_31 = arith.constant dense<0xFF800000> : vector<16x32xf32>
    %42 = vector.multi_reduction <maximumf>, %41, %cst_31 [1] : vector<16x8x32xf32> to vector<16x32xf32>
    %43 = vector.shape_cast %42 : vector<16x32xf32> to vector<16x1x32xf32>
    %44 = vector.broadcast %43 : vector<16x1x32xf32> to vector<16x8x32xf32>
    %45 = arith.subf %41, %44 : vector<16x8x32xf32>
    %46 = math.exp %45 : vector<16x8x32xf32>
    %cst_32 = arith.constant dense<0.000000e+00> : vector<16x32xf32>
    %47 = vector.multi_reduction <add>, %46, %cst_32 [1] : vector<16x8x32xf32> to vector<16x32xf32>
    %48 = vector.shape_cast %47 : vector<16x32xf32> to vector<16x1x32xf32>
    %49 = tpu.reciprocal %48 {approx = true} : vector<16x1x32xf32> -> vector<16x1x32xf32>
    %50 = vector.broadcast %49 : vector<16x1x32xf32> to vector<16x8x32xf32>
    %51 = arith.mulf %46, %50 : vector<16x8x32xf32>
    %c0_33 = arith.constant 0 : index
    %c0_34 = arith.constant 0 : index
    %c0_35 = arith.constant 0 : index
    %c0_36 = arith.constant 0 : index
    %52 = vector.load %arg4[%c0_33, %c0_34, %c0_35, %c0_36] : memref<1x16x8x32xf32, #tpu.memory_space<vmem>>, vector<1x16x8x32xf32>
    %53 = vector.shape_cast %52 : vector<1x16x8x32xf32> to vector<16x8x32xf32>
    %54 = arith.addf %53, %19 : vector<16x8x32xf32>
    %55 = arith.mulf %54, %51 : vector<16x8x32xf32>
    %cst_37 = arith.constant dense<0.000000e+00> : vector<16x32xf32>
    %56 = vector.multi_reduction <add>, %55, %cst_37 [1] : vector<16x8x32xf32> to vector<16x32xf32>
    %c0_38 = arith.constant 0 : index
    %c0_39 = arith.constant 0 : index
    %57 = vector.load %arg15[%c0_38, %c0_39] : memref<32x16xf32, #tpu.memory_space<vmem>>, vector<32x16xf32>
    %cst_40 = arith.constant dense<0.000000e+00> : vector<16x16xf32>
    %58 = tpu.matmul %56, %57, %cst_40 {dimension_numbers = #tpu.dot_dimension_numbers<[1], [0], [0], [1], [0, 0, 1, 1], [], []>} : vector<16x32xf32>, vector<32x16xf32>, vector<16x16xf32> -> vector<16x16xf32>
    %c0_41 = arith.constant 0 : index
    %c0_42 = arith.constant 0 : index
    %59 = vector.load %arg16[%c0_41, %c0_42] : memref<1x16xf32, #tpu.memory_space<vmem>>, vector<1x16xf32>
    %60 = vector.broadcast %59 : vector<1x16xf32> to vector<16x16xf32>
    %61 = arith.addf %58, %60 : vector<16x16xf32>
    %c0_43 = arith.constant 0 : index
    %c0_44 = arith.constant 0 : index
    %c0_45 = arith.constant 0 : index
    %62 = vector.load %arg7[%c0_43, %c0_44, %c0_45] : memref<1x16x16xf32, #tpu.memory_space<vmem>>, vector<1x16x16xf32>
    %63 = vector.shape_cast %62 : vector<1x16x16xf32> to vector<16x16xf32>
    %64 = arith.addf %61, %63 : vector<16x16xf32>
    %c0_46 = arith.constant 0 : index
    %c0_47 = arith.constant 0 : index
    %c0_48 = arith.constant 0 : index
    %65 = vector.load %arg17[%c0_46, %c0_47, %c0_48] : memref<1x16x16xf32, #tpu.memory_space<vmem>>, vector<1x16x16xf32>
    %66 = vector.shape_cast %65 : vector<1x16x16xf32> to vector<16x16xf32>
    %67 = vector.shape_cast %64 : vector<16x16xf32> to vector<1x16x16xf32>
    tpu.vector_store %arg17[%c0_46, %c0_47, %c0_48], %67 {strides = array<i32>} : memref<1x16x16xf32, #tpu.memory_space<vmem>>, vector<1x16x16xf32>,
    return
  }
  func.func @transform_0(%arg0: i32, %arg1: i32) -> (i32, i32, i32) {
    %c0_i32 = arith.constant 0 : i32
    %c0_i32_0 = arith.constant 0 : i32
    return %arg0, %arg1, %c0_i32 : i32, i32, i32
  }
  func.func @transform_1(%arg0: i32, %arg1: i32) -> (i32, i32, i32, i32) {
    %c0_i32 = arith.constant 0 : i32
    %c0_i32_0 = arith.constant 0 : i32
    %c0_i32_1 = arith.constant 0 : i32
    return %arg0, %arg1, %c0_i32, %c0_i32_0 : i32, i32, i32, i32
  }
  func.func @transform_2(%arg0: i32, %arg1: i32) -> (i32, i32, i32, i32) {
    %c0_i32 = arith.constant 0 : i32
    %c0_i32_0 = arith.constant 0 : i32
    %c0_i32_1 = arith.constant 0 : i32
    return %arg0, %arg1, %c0_i32, %c0_i32_0 : i32, i32, i32, i32
  }
  func.func @transform_3(%arg0: i32, %arg1: i32) -> (i32, i32, i32, i32) {
    %c0_i32 = arith.constant 0 : i32
    %c0_i32_0 = arith.constant 0 : i32
    %c0_i32_1 = arith.constant 0 : i32
    return %arg0, %arg1, %c0_i32, %c0_i32_0 : i32, i32, i32, i32
  }
  func.func @transform_4(%arg0: i32, %arg1: i32) -> (i32, i32, i32) {
    %c0_i32 = arith.constant 0 : i32
    %c0_i32_0 = arith.constant 0 : i32
    return %arg0, %arg1, %c0_i32 : i32, i32, i32
  }
  func.func @transform_5(%arg0: i32, %arg1: i32) -> (i32, i32, i32) {
    %c0_i32 = arith.constant 0 : i32
    %c0_i32_0 = arith.constant 0 : i32
    return %arg0, %arg1, %c0_i32 : i32, i32, i32
  }
  func.func @transform_6(%arg0: i32, %arg1: i32) -> (i32, i32) {
    %c0_i32 = arith.constant 0 : i32
    %c0_i32_0 = arith.constant 0 : i32
    %c0_i32_1 = arith.constant 0 : i32
    return %c0_i32, %c0_i32_0 : i32, i32
  }
  func.func @transform_7(%arg0: i32, %arg1: i32) -> (i32, i32) {
    %c0_i32 = arith.constant 0 : i32
    %c0_i32_0 = arith.constant 0 : i32
    %c0_i32_1 = arith.constant 0 : i32
    return %c0_i32, %c0_i32_0 : i32, i32
  }
  func.func @transform_8(%arg0: i32, %arg1: i32) -> (i32, i32) {
    %c0_i32 = arith.constant 0 : i32
    %c0_i32_0 = arith.constant 0 : i32
    %c0_i32_1 = arith.constant 0 : i32
    return %c0_i32, %c0_i32_0 : i32, i32
  }
  func.func @transform_9(%arg0: i32, %arg1: i32) -> (i32, i32) {
    %c0_i32 = arith.constant 0 : i32
    %c0_i32_0 = arith.constant 0 : i32
    %c0_i32_1 = arith.constant 0 : i32
    return %c0_i32, %c0_i32_0 : i32, i32
  }
  func.func @transform_10(%arg0: i32, %arg1: i32) -> (i32, i32) {
    %c0_i32 = arith.constant 0 : i32
    %c0_i32_0 = arith.constant 0 : i32
    %c0_i32_1 = arith.constant 0 : i32
    return %c0_i32, %c0_i32_0 : i32, i32
  }
  func.func @transform_11(%arg0: i32, %arg1: i32) -> (i32, i32) {
    %c0_i32 = arith.constant 0 : i32
    %c0_i32_0 = arith.constant 0 : i32
    %c0_i32_1 = arith.constant 0 : i32
    return %c0_i32, %c0_i32_0 : i32, i32
  }
  func.func @transform_12(%arg0: i32, %arg1: i32) -> (i32, i32) {
    %c0_i32 = arith.constant 0 : i32
    %c0_i32_0 = arith.constant 0 : i32
    %c0_i32_1 = arith.constant 0 : i32
    return %c0_i32, %c0_i32_0 : i32, i32
  }
  func.func @transform_13(%arg0: i32, %arg1: i32) -> (i32, i32) {
    %c0_i32 = arith.constant 0 : i32
    %c0_i32_0 = arith.constant 0 : i32
    %c0_i32_1 = arith.constant 0 : i32
    return %c0_i32, %c0_i32_0 : i32, i32
  }
  func.func @transform_14(%arg0: i32, %arg1: i32) -> (i32, i32) {
    %c0_i32 = arith.constant 0 : i32
    %c0_i32_0 = arith.constant 0 : i32
    %c0_i32_1 = arith.constant 0 : i32
    return %c0_i32, %c0_i32_0 : i32, i32
  }
  func.func @transform_15(%arg0: i32, %arg1: i32) -> (i32, i32, i32) {
    %c0_i32 = arith.constant 0 : i32
    %c0_i32_0 = arith.constant 0 : i32
    return %arg0, %arg1, %c0_i32 : i32, i32, i32
  }
}

</mosaic_0001>

<llo_original>
// kernel: neg.1
$region0: #{neg.1}
  #allocation0 [shape = 's32[1]{0}', space=sflag, size = 0x4, scoped, tag = 'scoped memory for neg.1']
  %s0 = inlined_call_operand.vmem [shape: f32[2,32,32], index: 0, kind: input, shape index: {}]
  %s1 = inlined_call_operand.vmem [shape: f32[2,32,32], index: 1, kind: output, shape index: {}]
  %v2 = vld [vmem:[%s0] sm:$0xff]
  %3 = xla_tuple %v2
  %4 = xla_tuple %3
  %v5 = vxor.u32 %v2, 2147483648
  %6 = xla_tuple %v5
  %7 = vst [vmem:[%s1] sm:$0xff] %v5
  %s8 = scalar_lea.vmem %s0, 32
  %v9 = vld [vmem:[%s8] sm:$0xff]
  %10 = xla_tuple %v9
  %11 = xla_tuple %10
  %v12 = vxor.u32 %v9, 2147483648
  %13 = xla_tuple %v12
  %s14 = scalar_lea.vmem %s1, 32
  %15 = vst [vmem:[%s14] sm:$0xff] %v12
  %s16 = scalar_lea.vmem %s0, 8
  %v17 = vld [vmem:[%s16] sm:$0xff]
  %18 = xla_tuple %v17
  %19 = xla_tuple %18
  %v20 = vxor.u32 %v17, 2147483648
  %21 = xla_tuple %v20
  %s22 = scalar_lea.vmem %s1, 8
  %23 = vst [vmem:[%s22] sm:$0xff] %v20
  %s24 = scalar_lea.vmem %s0, 40
  %v25 = vld [vmem:[%s24] sm:$0xff]
  %26 = xla_tuple %v25
  %27 = xla_tuple %26
  %v28 = vxor.u32 %v25, 2147483648
  %29 = xla_tuple %v28
  %s30 = scalar_lea.vmem %s1, 40
  %31 = vst [vmem:[%s30] sm:$0xff] %v28
  %s32 = scalar_lea.vmem %s0, 16
  %v33 = vld [vmem:[%s32] sm:$0xff]
  %34 = xla_tuple %v33
  %35 = xla_tuple %34
  %v36 = vxor.u32 %v33, 2147483648
  %37 = xla_tuple %v36
  %s38 = scalar_lea.vmem %s1, 16
  %39 = vst [vmem:[%s38] sm:$0xff] %v36
  %s40 = scalar_lea.vmem %s0, 48
  %v41 = vld [vmem:[%s40] sm:$0xff]
  %42 = xla_tuple %v41
  %43 = xla_tuple %42
  %v44 = vxor.u32 %v41, 2147483648
  %45 = xla_tuple %v44
  %s46 = scalar_lea.vmem %s1, 48
  %47 = vst [vmem:[%s46] sm:$0xff] %v44
  %s48 = scalar_lea.vmem %s0, 24
  %v49 = vld [vmem:[%s48] sm:$0xff]
  %50 = xla_tuple %v49
  %51 = xla_tuple %50
  %v52 = vxor.u32 %v49, 2147483648
  %53 = xla_tuple %v52
  %s54 = scalar_lea.vmem %s1, 24
  %55 = vst [vmem:[%s54] sm:$0xff] %v52
  %s56 = scalar_lea.vmem %s0, 56
  %v57 = vld [vmem:[%s56] sm:$0xff]
  %58 = xla_tuple %v57
  %59 = xla_tuple %58
  %v60 = vxor.u32 %v57, 2147483648
  %61 = xla_tuple %v60
  %s62 = scalar_lea.vmem %s1, 56
  %63 = vst [vmem:[%s62] sm:$0xff] %v60

// kernel: encoder_attn_forward.2
$region0: #{encoder_attn_forward.2}
  #allocation0 [shape = 'u32[]', space=smem, size = 0x4, offset = 0x4, fixed_abs, tag = 'smem constant byte address 0x4 - core index']
  #allocation1 [shape = 'u32[144,128]{1,0:T(1,128)}', space=vmem, size = 0x12000, scoped, tag = 'internal scratch']
  %s0 = inlined_call_operand.vmem [shape: f32[64,16], index: 0, kind: input, shape index: {}]
  %s1 = inlined_call_operand.vmem [shape: f32[16,32], index: 1, kind: input, shape index: {}]
  %s2 = inlined_call_operand.vmem [shape: f32[1,32], index: 2, kind: input, shape index: {}]
  %s3 = inlined_call_operand.vmem [shape: f32[32,32], index: 3, kind: input, shape index: {}]
  %s4 = inlined_call_operand.vmem [shape: f32[1,32], index: 4, kind: input, shape index: {}]
  %s5 = inlined_call_operand.vmem [shape: f32[32,32], index: 5, kind: input, shape index: {}]
  %s6 = inlined_call_operand.vmem [shape: f32[1,32], index: 6, kind: input, shape index: {}]
  %s7 = inlined_call_operand.vmem [shape: f32[32,32], index: 7, kind: input, shape index: {}]
  %s8 = inlined_call_operand.vmem [shape: f32[1,32], index: 8, kind: input, shape index: {}]
  %s9 = inlined_call_operand.vmem [shape: f32[64,32], index: 9, kind: output, shape index: {0}]
  %s10 = inlined_call_operand.vmem [shape: f32[64,32], index: 10, kind: output, shape index: {1}]
  %s11 = inlined_call_operand.vmem [shape: f32[64,32], index: 11, kind: output, shape index: {2}]
  %12 = xla_tuple %s9, %s10, %s11
  %s13 = sld [smem:[#allocation0]]
  $region85: #{encoder_attn_forward.2} parent=0
    _
  %s15 = ssub.s32 1, %s13
  %s16 = scalar_select 0, %s15, %s13
  loop: start=0, step=1, limit=4
  $region2: #{encoder_attn_forward.2} parent=0 // loop_pre_header
    _
  $region3: #{encoder_attn_forward.2} parent=0 // loop_header
    %s18 = sphi 0, %s22
    %p19 = scmp.ge.s32.totalorder %s18, 4
    %s28 = sphi 0, %s30
    %s31 = sphi 0, %s28
    %s32 = sphi 0, %s31
    %s48 = sphi 0, %s32
    %s52 = sphi 0, %s52
    %s54 = sphi 0, %s52
    %s55 = sphi 0, %s54
    %s69 = sphi 0, %s55
    %s73 = sphi 0, %s73
    %s75 = sphi 0, %s73
    %s76 = sphi 0, %s75
    %s90 = sphi 0, %s76
    %s94 = sphi 0, %s94
    %s96 = sphi 0, %s94
    %s97 = sphi 0, %s96
    %s111 = sphi 0, %s97
    %s115 = sphi 0, %s115
    %s117 = sphi 0, %s115
    %s118 = sphi 0, %s117
    %s132 = sphi 0, %s118
    %s136 = sphi 0, %s136
    %s138 = sphi 0, %s136
    %s139 = sphi 0, %s138
    %s153 = sphi 0, %s139
    %s157 = sphi 0, %s157
    %s159 = sphi 0, %s157
    %s160 = sphi 0, %s159
    %s174 = sphi 0, %s160
    %s178 = sphi 0, %s178
    %s180 = sphi 0, %s178
    %s181 = sphi 0, %s180
    %s195 = sphi 0, %s181
    %s199 = sphi 0, %s199
    %s201 = sphi 0, %s199
    %s202 = sphi 0, %s201
    %s216 = sphi 0, %s202
    %s222 = sphi 0, %s224
    %s225 = sphi 0, %s222
    %s226 = sphi 0, %s225
    %s242 = sphi 0, %s226
    %s248 = sphi 0, %s250
    %s251 = sphi 0, %s248
    %s252 = sphi 0, %s251
    %s268 = sphi 0, %s252
    %s274 = sphi 0, %s276
    %s277 = sphi 0, %s274
    %s278 = sphi 0, %s277
    %s294 = sphi 0, %s278
  $region4: #{encoder_attn_forward.2} parent=0 // loop_header_branch
    %21 = sbr.rel (%p19) target = $region8
  $region5: #{encoder_attn_forward.2} parent=0 // loop_body
    %s23 = ssub.s32 %s18, 1
    %s24 = ssub.s32 %s18, 2
    %s25 = sadd.s32 %s18, 1
    %s26 = ssub.s32 %s18, %s25
    %p27 = scmp.eq.s32.totalorder %s26, 0
    %s29 = sadd.s32 %s28, 1
    %s30 = scalar_select %p27, %s28, %s29
    %p33 = pneg %p27
    %p34 = scmp.eq.s32.totalorder %s18, 1
    %p35 = por %p33, %p34
    %p36 = scmp.ne.s32.totalorder %s28, %s31
    %p37 = scmp.eq.s32.totalorder %s18, 0
    %p38 = por %p36, %p37
    %p39 = scmp.ne.s32.totalorder %s28, %s31
    %p40 = scmp.eq.s32.totalorder %s23, 1
    %p41 = por %p39, %p40
    %p42 = scmp.ne.s32.totalorder %s31, %s32
    %p43 = scmp.eq.s32.totalorder %s23, 0
    %p44 = por %p42, %p43
    %p45 = scmp.ne.s32.totalorder %s31, %s32
    %p46 = scmp.eq.s32.totalorder %s24, 1
    %p47 = por %p45, %p46
    %p49 = scmp.ne.s32.totalorder %s32, %s48
    %p50 = scmp.eq.s32.totalorder %s24, 0
    %p51 = por %p49, %p50
    %s53 = sadd.s32 %s52, 1
    %p56 = scmp.eq.s32.totalorder %s18, 1
    %p57 = scmp.ne.s32.totalorder %s52, %s54
    %p58 = scmp.eq.s32.totalorder %s18, 0
    %p59 = por %p57, %p58
    %p60 = scmp.ne.s32.totalorder %s52, %s54
    %p61 = scmp.eq.s32.totalorder %s23, 1
    %p62 = por %p60, %p61
    %p63 = scmp.ne.s32.totalorder %s54, %s55
    %p64 = scmp.eq.s32.totalorder %s23, 0
    %p65 = por %p63, %p64
    %p66 = scmp.ne.s32.totalorder %s54, %s55
    %p67 = scmp.eq.s32.totalorder %s24, 1
    %p68 = por %p66, %p67
    %p70 = scmp.ne.s32.totalorder %s55, %s69
    %p71 = scmp.eq.s32.totalorder %s24, 0
    %p72 = por %p70, %p71
    %s74 = sadd.s32 %s73, 1
    %p77 = scmp.eq.s32.totalorder %s18, 1
    %p78 = scmp.ne.s32.totalorder %s73, %s75
    %p79 = scmp.eq.s32.totalorder %s18, 0
    %p80 = por %p78, %p79
    %p81 = scmp.ne.s32.totalorder %s73, %s75
    %p82 = scmp.eq.s32.totalorder %s23, 1
    %p83 = por %p81, %p82
    %p84 = scmp.ne.s32.totalorder %s75, %s76
    %p85 = scmp.eq.s32.totalorder %s23, 0
    %p86 = por %p84, %p85
    %p87 = scmp.ne.s32.totalorder %s75, %s76
    %p88 = scmp.eq.s32.totalorder %s24, 1
    %p89 = por %p87, %p88
    %p91 = scmp.ne.s32.totalorder %s76, %s90
    %p92 = scmp.eq.s32.totalorder %s24, 0
    %p93 = por %p91, %p92
    %s95 = sadd.s32 %s94, 1
    %p98 = scmp.eq.s32.totalorder %s18, 1
    %p99 = scmp.ne.s32.totalorder %s94, %s96
    %p100 = scmp.eq.s32.totalorder %s18, 0
    %p101 = por %p99, %p100
    %p102 = scmp.ne.s32.totalorder %s94, %s96
    %p103 = scmp.eq.s32.totalorder %s23, 1
    %p104 = por %p102, %p103
    %p105 = scmp.ne.s32.totalorder %s96, %s97
    %p106 = scmp.eq.s32.totalorder %s23, 0
    %p107 = por %p105, %p106
    %p108 = scmp.ne.s32.totalorder %s96, %s97
    %p109 = scmp.eq.s32.totalorder %s24, 1
    %p110 = por %p108, %p109
    %p112 = scmp.ne.s32.totalorder %s97, %s111
    %p113 = scmp.eq.s32.totalorder %s24, 0
    %p114 = por %p112, %p113
    %s116 = sadd.s32 %s115, 1
    %p119 = scmp.eq.s32.totalorder %s18, 1
    %p120 = scmp.ne.s32.totalorder %s115, %s117
    %p121 = scmp.eq.s32.totalorder %s18, 0
    %p122 = por %p120, %p121
    %p123 = scmp.ne.s32.totalorder %s115, %s117
    %p124 = scmp.eq.s32.totalorder %s23, 1
    %p125 = por %p123, %p124
    %p126 = scmp.ne.s32.totalorder %s117, %s118
    %p127 = scmp.eq.s32.totalorder %s23, 0
    %p128 = por %p126, %p127
    %p129 = scmp.ne.s32.totalorder %s117, %s118
    %p130 = scmp.eq.s32.totalorder %s24, 1
    %p131 = por %p129, %p130
    %p133 = scmp.ne.s32.totalorder %s118, %s132
    %p134 = scmp.eq.s32.totalorder %s24, 0
    %p135 = por %p133, %p134
    %s137 = sadd.s32 %s136, 1
    %p140 = scmp.eq.s32.totalorder %s18, 1
    %p141 = scmp.ne.s32.totalorder %s136, %s138
    %p142 = scmp.eq.s32.totalorder %s18, 0
    %p143 = por %p141, %p142
    %p144 = scmp.ne.s32.totalorder %s136, %s138
    %p145 = scmp.eq.s32.totalorder %s23, 1
    %p146 = por %p144, %p145
    %p147 = scmp.ne.s32.totalorder %s138, %s139
    %p148 = scmp.eq.s32.totalorder %s23, 0
    %p149 = por %p147, %p148
    %p150 = scmp.ne.s32.totalorder %s138, %s139
    %p151 = scmp.eq.s32.totalorder %s24, 1
    %p152 = por %p150, %p151
    %p154 = scmp.ne.s32.totalorder %s139, %s153
    %p155 = scmp.eq.s32.totalorder %s24, 0
    %p156 = por %p154, %p155
    %s158 = sadd.s32 %s157, 1
    %p161 = scmp.eq.s32.totalorder %s18, 1
    %p162 = scmp.ne.s32.totalorder %s157, %s159
    %p163 = scmp.eq.s32.totalorder %s18, 0
    %p164 = por %p162, %p163
    %p165 = scmp.ne.s32.totalorder %s157, %s159
    %p166 = scmp.eq.s32.totalorder %s23, 1
    %p167 = por %p165, %p166
    %p168 = scmp.ne.s32.totalorder %s159, %s160
    %p169 = scmp.eq.s32.totalorder %s23, 0
    %p170 = por %p168, %p169
    %p171 = scmp.ne.s32.totalorder %s159, %s160
    %p172 = scmp.eq.s32.totalorder %s24, 1
    %p173 = por %p171, %p172
    %p175 = scmp.ne.s32.totalorder %s160, %s174
    %p176 = scmp.eq.s32.totalorder %s24, 0
    %p177 = por %p175, %p176
    %s179 = sadd.s32 %s178, 1
    %p182 = scmp.eq.s32.totalorder %s18, 1
    %p183 = scmp.ne.s32.totalorder %s178, %s180
    %p184 = scmp.eq.s32.totalorder %s18, 0
    %p185 = por %p183, %p184
    %p186 = scmp.ne.s32.totalorder %s178, %s180
    %p187 = scmp.eq.s32.totalorder %s23, 1
    %p188 = por %p186, %p187
    %p189 = scmp.ne.s32.totalorder %s180, %s181
    %p190 = scmp.eq.s32.totalorder %s23, 0
    %p191 = por %p189, %p190
    %p192 = scmp.ne.s32.totalorder %s180, %s181
    %p193 = scmp.eq.s32.totalorder %s24, 1
    %p194 = por %p192, %p193
    %p196 = scmp.ne.s32.totalorder %s181, %s195
    %p197 = scmp.eq.s32.totalorder %s24, 0
    %p198 = por %p196, %p197
    %s200 = sadd.s32 %s199, 1
    %p203 = scmp.eq.s32.totalorder %s18, 1
    %p204 = scmp.ne.s32.totalorder %s199, %s201
    %p205 = scmp.eq.s32.totalorder %s18, 0
    %p206 = por %p204, %p205
    %p207 = scmp.ne.s32.totalorder %s199, %s201
    %p208 = scmp.eq.s32.totalorder %s23, 1
    %p209 = por %p207, %p208
    %p210 = scmp.ne.s32.totalorder %s201, %s202
    %p211 = scmp.eq.s32.totalorder %s23, 0
    %p212 = por %p210, %p211
    %p213 = scmp.ne.s32.totalorder %s201, %s202
    %p214 = scmp.eq.s32.totalorder %s24, 1
    %p215 = por %p213, %p214
    %p217 = scmp.ne.s32.totalorder %s202, %s216
    %p218 = scmp.eq.s32.totalorder %s24, 0
    %p219 = por %p217, %p218
    %s220 = ssub.s32 %s18, %s25
    %p221 = scmp.eq.s32.totalorder %s220, 0
    %s223 = sadd.s32 %s222, 1
    %s224 = scalar_select %p221, %s222, %s223
    %p227 = pneg %p221
    %p228 = scmp.eq.s32.totalorder %s18, 1
    %p229 = por %p227, %p228
    %p230 = scmp.ne.s32.totalorder %s222, %s225
    %p231 = scmp.eq.s32.totalorder %s18, 0
    %p232 = por %p230, %p231
    %p233 = scmp.ne.s32.totalorder %s222, %s225
    %p234 = scmp.eq.s32.totalorder %s23, 1
    %p235 = por %p233, %p234
    %p236 = scmp.ne.s32.totalorder %s225, %s226
    %p237 = scmp.eq.s32.totalorder %s23, 0
    %p238 = por %p236, %p237
    %p239 = scmp.ne.s32.totalorder %s225, %s226
    %p240 = scmp.eq.s32.totalorder %s24, 1
    %p241 = por %p239, %p240
    %p243 = scmp.ne.s32.totalorder %s226, %s242
    %p244 = scmp.eq.s32.totalorder %s24, 0
    %p245 = por %p243, %p244
    %s246 = ssub.s32 %s18, %s25
    %p247 = scmp.eq.s32.totalorder %s246, 0
    %s249 = sadd.s32 %s248, 1
    %s250 = scalar_select %p247, %s248, %s249
    %p253 = pneg %p247
    %p254 = scmp.eq.s32.totalorder %s18, 1
    %p255 = por %p253, %p254
    %p256 = scmp.ne.s32.totalorder %s248, %s251
    %p257 = scmp.eq.s32.totalorder %s18, 0
    %p258 = por %p256, %p257
    %p259 = scmp.ne.s32.totalorder %s248, %s251
    %p260 = scmp.eq.s32.totalorder %s23, 1
    %p261 = por %p259, %p260
    %p262 = scmp.ne.s32.totalorder %s251, %s252
    %p263 = scmp.eq.s32.totalorder %s23, 0
    %p264 = por %p262, %p263
    %p265 = scmp.ne.s32.totalorder %s251, %s252
    %p266 = scmp.eq.s32.totalorder %s24, 1
    %p267 = por %p265, %p266
    %p269 = scmp.ne.s32.totalorder %s252, %s268
    %p270 = scmp.eq.s32.totalorder %s24, 0
    %p271 = por %p269, %p270
    %s272 = ssub.s32 %s18, %s25
    %p273 = scmp.eq.s32.totalorder %s272, 0
    %s275 = sadd.s32 %s274, 1
    %s276 = scalar_select %p273, %s274, %s275
    %p279 = pneg %p273
    %p280 = scmp.eq.s32.totalorder %s18, 1
    %p281 = por %p279, %p280
    %p282 = scmp.ne.s32.totalorder %s274, %s277
    %p283 = scmp.eq.s32.totalorder %s18, 0
    %p284 = por %p282, %p283
    %p285 = scmp.ne.s32.totalorder %s274, %s277
    %p286 = scmp.eq.s32.totalorder %s23, 1
    %p287 = por %p285, %p286
    %p288 = scmp.ne.s32.totalorder %s277, %s278
    %p289 = scmp.eq.s32.totalorder %s23, 0
    %p290 = por %p288, %p289
    %p291 = scmp.ne.s32.totalorder %s277, %s278
    %p292 = scmp.eq.s32.totalorder %s24, 1
    %p293 = por %p291, %p292
    %p295 = scmp.ne.s32.totalorder %s278, %s294
    %p296 = scmp.eq.s32.totalorder %s24, 0
    %p297 = por %p295, %p296
    %p298 = scmp.le.s32.totalorder 1, %s18
    %p299 = scmp.lt.s32.totalorder %s18, 3
    %p300 = pnand %p298, %p299
    %p301 = pneg %p300
    // Predicated region
    $region9: #{encoder_attn_forward.2} parent=5 // pred_check
      _
    $region10: #{encoder_attn_forward.2} parent=5 // pred_check_branch
      %303 = sbr.rel (%p300) target = $region12
    $region11: #{encoder_attn_forward.2} parent=5 // pred_region
      %s304 = ssub.s32 %s18, 1
      // Predicated region
      $region13: #{encoder_attn_forward.2} parent=11 // pred_check
        %p305 = pneg %p65
      $region14: #{encoder_attn_forward.2} parent=11 // pred_check_branch
        %307 = sbr.rel (%p305) target = $region16
      $region15: #{encoder_attn_forward.2} parent=11 // pred_region
        _
      $region16: #{encoder_attn_forward.2} parent=11 // pred_fallthru
        _
      // Predicated region
      $region17: #{encoder_attn_forward.2} parent=11 // pred_check
        %p308 = pneg %p86
      $region18: #{encoder_attn_forward.2} parent=11 // pred_check_branch
        %310 = sbr.rel (%p308) target = $region20
      $region19: #{encoder_attn_forward.2} parent=11 // pred_region
        _
      $region20: #{encoder_attn_forward.2} parent=11 // pred_fallthru
        _
      // Predicated region
      $region21: #{encoder_attn_forward.2} parent=11 // pred_check
        %p311 = pneg %p107
      $region22: #{encoder_attn_forward.2} parent=11 // pred_check_branch
        %313 = sbr.rel (%p311) target = $region24
      $region23: #{encoder_attn_forward.2} parent=11 // pred_region
        _
      $region24: #{encoder_attn_forward.2} parent=11 // pred_fallthru
        _
      // Predicated region
      $region25: #{encoder_attn_forward.2} parent=11 // pred_check
        %p314 = pneg %p128
      $region26: #{encoder_attn_forward.2} parent=11 // pred_check_branch
        %316 = sbr.rel (%p314) target = $region28
      $region27: #{encoder_attn_forward.2} parent=11 // pred_region
        _
      $region28: #{encoder_attn_forward.2} parent=11 // pred_fallthru
        _
      // Predicated region
      $region29: #{encoder_attn_forward.2} parent=11 // pred_check
        %p317 = pneg %p149
      $region30: #{encoder_attn_forward.2} parent=11 // pred_check_branch
        %319 = sbr.rel (%p317) target = $region32
      $region31: #{encoder_attn_forward.2} parent=11 // pred_region
        _
      $region32: #{encoder_attn_forward.2} parent=11 // pred_fallthru
        _
      // Predicated region
      $region33: #{encoder_attn_forward.2} parent=11 // pred_check
        %p320 = pneg %p170
      $region34: #{encoder_attn_forward.2} parent=11 // pred_check_branch
        %322 = sbr.rel (%p320) target = $region36
      $region35: #{encoder_attn_forward.2} parent=11 // pred_region
        _
      $region36: #{encoder_attn_forward.2} parent=11 // pred_fallthru
        _
      // Predicated region
      $region37: #{encoder_attn_forward.2} parent=11 // pred_check
        %p323 = pneg %p191
      $region38: #{encoder_attn_forward.2} parent=11 // pred_check_branch
        %325 = sbr.rel (%p323) target = $region40
      $region39: #{encoder_attn_forward.2} parent=11 // pred_region
        _
      $region40: #{encoder_attn_forward.2} parent=11 // pred_fallthru
        _
      // Predicated region
      $region41: #{encoder_attn_forward.2} parent=11 // pred_check
        %p326 = pneg %p212
      $region42: #{encoder_attn_forward.2} parent=11 // pred_check_branch
        %328 = sbr.rel (%p326) target = $region44
      $region43: #{encoder_attn_forward.2} parent=11 // pred_region
        _
      $region44: #{encoder_attn_forward.2} parent=11 // pred_fallthru
        _
    $region12: #{encoder_attn_forward.2} parent=5 // pred_fallthru
      _
    %p329 = scmp.lt.s32.totalorder %s18, 2
    // Predicated region
    $region45: #{encoder_attn_forward.2} parent=5 // pred_check
      %p330 = pneg %p329
    $region46: #{encoder_attn_forward.2} parent=5 // pred_check_branch
      %332 = sbr.rel (%p330) target = $region48
    $region47: #{encoder_attn_forward.2} parent=5 // pred_region
      // Predicated region
      $region49: #{encoder_attn_forward.2} parent=47 // pred_check
        %p333 = pneg %p38
      $region50: #{encoder_attn_forward.2} parent=47 // pred_check_branch
        %335 = sbr.rel (%p333) target = $region52
      $region51: #{encoder_attn_forward.2} parent=47 // pred_region
        %s336 = smul.u32 4, %s18
        %p337 = scmp.lt.s32.totalorder %s336, 7
        %s338 = scalar_select %p337, %s336, 7
        %s339 = smul.addr %s338, 8
        %s340 = scalar_lea.vmem %s0, %s339
        %s341 = smul.u32 4, %s18
      $region52: #{encoder_attn_forward.2} parent=47 // pred_fallthru
        _
    $region48: #{encoder_attn_forward.2} parent=5 // pred_fallthru
      _
    %p342 = scmp.le.s32.totalorder 1, %s18
    %p343 = scmp.lt.s32.totalorder %s18, 3
    %p344 = pnand %p342, %p343
    %p345 = pneg %p344
    // Predicated region
    $region53: #{encoder_attn_forward.2} parent=5 // pred_check
      _
    $region54: #{encoder_attn_forward.2} parent=5 // pred_check_branch
      %347 = sbr.rel (%p344) target = $region56
    $region55: #{encoder_attn_forward.2} parent=5 // pred_region
      %s348 = ssub.s32 %s18, 1
      %s349 = smul.u32 4, %s23
      %p350 = scmp.lt.s32.totalorder %s349, 7
      %s351 = scalar_select %p350, %s349, 7
      %s352 = smul.addr %s351, 8
      %s353 = scalar_lea.vmem %s0, %s352
      %p354 = pneg %p44
      %p355 = pneg %p41
      %p356 = pneg %p65
      %p357 = pneg %p62
      %p358 = pneg %p86
      %p359 = pneg %p83
      %p360 = pneg %p107
      %p361 = pneg %p104
      %p362 = pneg %p128
      %p363 = pneg %p125
      %p364 = pneg %p149
      %p365 = pneg %p146
      %p366 = pneg %p170
      %p367 = pneg %p167
      %p368 = pneg %p191
      %p369 = pneg %p188
      %p370 = pneg %p212
      %p371 = pneg %p209
      %p372 = pneg %p238
      %p373 = pneg %p235
      %s374 = smul.u32 4, %s23
      %p375 = scmp.lt.s32.totalorder %s374, 7
      %s376 = scalar_select %p375, %s374, 7
      %s377 = smul.addr %s376, 8
      %s378 = scalar_lea.vmem %s9, %s377
      %p379 = pneg %p264
      %p380 = pneg %p261
      %s381 = smul.u32 4, %s23
      %p382 = scmp.lt.s32.totalorder %s381, 7
      %s383 = scalar_select %p382, %s381, 7
      %s384 = smul.addr %s383, 8
      %s385 = scalar_lea.vmem %s10, %s384
      %p386 = pneg %p290
      %p387 = pneg %p287
      %s388 = smul.u32 4, %s23
      %p389 = scmp.lt.s32.totalorder %s388, 7
      %s390 = scalar_select %p389, %s388, 7
      %s391 = smul.addr %s390, 8
      %s392 = scalar_lea.vmem %s11, %s391
      %s393 = smul.u32 4, %s23
      %p394 = scmp.lt.s32.totalorder %s393, 7
      %s395 = scalar_select %p394, %s393, 7
      %s396 = smul.addr %s395, 8
      %s397 = scalar_lea.vmem %s0, %s396
      %s398 = smul.u32 4, %s23
      %s399 = smul.u32 4, %s23
      %p400 = scmp.lt.s32.totalorder %s399, 7
      %s401 = scalar_select %p400, %s399, 7
      %s402 = smul.addr %s401, 8
      %s403 = scalar_lea.vmem %s9, %s402
      %s404 = smul.u32 4, %s23
      %s405 = smul.u32 4, %s23
      %p406 = scmp.lt.s32.totalorder %s405, 7
      %s407 = scalar_select %p406, %s405, 7
      %s408 = smul.addr %s407, 8
      %s409 = scalar_lea.vmem %s10, %s408
      %s410 = smul.u32 4, %s23
      %s411 = smul.u32 4, %s23
      %p412 = scmp.lt.s32.totalorder %s411, 7
      %s413 = scalar_select %p412, %s411, 7
      %s414 = smul.addr %s413, 8
      %s415 = scalar_lea.vmem %s11, %s414
      %s416 = smul.u32 4, %s23
      %v417 = vld [vmem:[%s397] sm:$0xff]
      %v418 = vld [vmem:[%s397 + $0x8] sm:$0xff]
      %v419 = vld [vmem:[%s397 + $0x10] sm:$0xff]
      %v420 = vld [vmem:[%s397 + $0x18] sm:$0xff]
      %v421 = vld [vmem:[%s1] sm:$0xff]
      %v422 = vld [vmem:[%s1 + $0x8] sm:$0xff]
      %v423 = vld [vmem:[%s2] sm:$0x1]
      %v425 = vlaneseq
      %v426 = vshrl.u32 %v425, 7
      %v427 = vsub.s32 0, %v426
      %v428 = vrot.slane %v423, %v427
      %vm430 = vcmask 130048
      %v432 = vsel %vm430, %v417, 0
      %v435 = vsel %vm430, %v418, 0
      %v438 = vsel %vm430, %v419, 0
      %v441 = vsel %vm430, %v420, 0
      %443 = vmatprep.subr.mxu0 0.0
      %444 = vmatpush1.msra.mxu0 %v421
      %445 = vmatprep.subr.mxu0 0.0
      %446 = vmatpush1.msra.mxu0 %v422
      %447 = vmatprep.subr.mxu0 0.0
      %448 = vmatpush1.msra.mxu0 0.0
      %449 = vmatprep.subr.mxu0 0.0
      %450 = vmatpush1.msra.mxu0 0.0
      %451 = vmatprep.subr.mxu0 0.0
      %452 = vmatpush1.msra.mxu0 0.0
      %453 = vmatprep.subr.mxu0 0.0
      %454 = vmatpush1.msra.mxu0 0.0
      %455 = vmatprep.subr.mxu0 0.0
      %456 = vmatpush1.msra.mxu0 0.0
      %457 = vmatprep.subr.mxu0 0.0
      %458 = vmatpush1.msra.mxu0 0.0
      %459 = vmatprep.subr.mxu0 0.0
      %460 = vmatpush1.msra.mxu0 0.0
      %461 = vmatprep.subr.mxu0 0.0
      %462 = vmatpush1.msra.mxu0 0.0
      %463 = vmatprep.subr.mxu0 0.0
      %464 = vmatpush1.msra.mxu0 0.0
      %465 = vmatprep.subr.mxu0 0.0
      %466 = vmatpush1.msra.mxu0 0.0
      %467 = vmatprep.subr.mxu0 0.0
      %468 = vmatpush1.msra.mxu0 0.0
      %469 = vmatprep.subr.mxu0 0.0
      %470 = vmatpush1.msra.mxu0 0.0
      %471 = vmatprep.subr.mxu0 0.0
      %472 = vmatpush1.msra.mxu0 0.0
      %473 = vmatprep.subr.mxu0 0.0
      %474 = vmatpush1.msra.mxu0 0.0
      %475 = vmatprep.subr.mxu0 0.0
      %476 = vmatpush1.msra.mxu0 0.0
      %477 = vmatprep.subr.mxu0 0.0
      %478 = vmatpush1.msra.mxu0 0.0
      %479 = vmatprep.subr.mxu0 0.0
      %480 = vmatpush1.msra.mxu0 0.0
      %481 = vmatprep.subr.mxu0 0.0
      %482 = vmatpush1.msra.mxu0 0.0
      %483 = vmatprep.subr.mxu0 0.0
      %484 = vmatpush1.msra.mxu0 0.0
      %485 = vmatprep.subr.mxu0 0.0
      %486 = vmatpush1.msra.mxu0 0.0
      %487 = vmatprep.subr.mxu0 0.0
      %488 = vmatpush1.msra.mxu0 0.0
      %489 = vmatprep.subr.mxu0 0.0
      %490 = vmatpush1.msra.mxu0 0.0
      %491 = vmatprep.subr.mxu0 0.0
      %492 = vmatpush1.msra.mxu0 0.0
      %493 = vmatprep.subr.mxu0 0.0
      %494 = vmatpush1.msra.mxu0 0.0
      %495 = vmatprep.subr.mxu0 0.0
      %496 = vmatpush1.msra.mxu0 0.0
      %497 = vmatprep.subr.mxu0 0.0
      %498 = vmatpush1.msra.mxu0 0.0
      %499 = vmatprep.subr.mxu0 0.0
      %500 = vmatpush1.msra.mxu0 0.0
      %501 = vmatprep.subr.mxu0 0.0
      %502 = vmatpush1.msra.mxu0 0.0
      %503 = vmatprep.subr.mxu0 0.0
      %504 = vmatpush1.msra.mxu0 0.0
      %505 = vmatprep.subr.mxu0 0.0
      %506 = vmatpush1.msra.mxu0 0.0
      %507 = vmatprep.mubr.f32.mxu0 0.0
      %508 = vmatmul.mubr.f32.gmra.mrb[0].mxu0 %v432
      %v509 = vpop.f32.mrb[0].mxu0
      %v510 = vadd.f32 %v428, %v509
      %v511 = vpop.f32.mrb[0].mxu0
      %512 = vmatprep.mubr.f32.mxu0 0.0
      %513 = vmatmul.mubr.f32.gmra.mrb[0].mxu0 %v435
      %v514 = vpop.f32.mrb[0].mxu0
      %v515 = vadd.f32 %v428, %v514
      %v516 = vpop.f32.mrb[0].mxu0
      %517 = vmatprep.mubr.f32.mxu0 0.0
      %518 = vmatmul.mubr.f32.gmra.mrb[0].mxu0 %v438
      %v519 = vpop.f32.mrb[0].mxu0
      %v520 = vadd.f32 %v428, %v519
      %v521 = vpop.f32.mrb[0].mxu0
      %522 = vmatprep.mubr.f32.mxu0 0.0
      %523 = vmatmul.mubr.f32.gmra.mrb[0].mxu0 %v441
      %v524 = vpop.f32.mrb[0].mxu0
      %v525 = vadd.f32 %v428, %v524
      %v526 = vpop.f32.mrb[0].mxu0
      %527 = vdwg.mxu0
      %v528 = vld [vmem:[%s3] sm:$0xff]
      %v529 = vld [vmem:[%s3 + $0x8] sm:$0xff]
      %v530 = vld [vmem:[%s3 + $0x10] sm:$0xff]
      %v531 = vld [vmem:[%s3 + $0x18] sm:$0xff]
      %v532 = vld [vmem:[%s4] sm:$0x1]
      %v534 = vlaneseq
      %v535 = vshrl.u32 %v534, 7
      %v536 = vsub.s32 0, %v535
      %v537 = vrot.slane %v532, %v536
      %vm539 = vcmask 261120
      %v541 = vsel %vm539, %v510, 0
      %v544 = vsel %vm539, %v515, 0
      %v547 = vsel %vm539, %v520, 0
      %v550 = vsel %vm539, %v525, 0
      %552 = vmatprep.subr.mxu0 0.0
      %553 = vmatpush1.msra.mxu0 %v528
      %554 = vmatprep.subr.mxu0 0.0
      %555 = vmatpush1.msra.mxu0 %v529
      %556 = vmatprep.subr.mxu0 0.0
      %557 = vmatpush1.msra.mxu0 %v530
      %558 = vmatprep.subr.mxu0 0.0
      %559 = vmatpush1.msra.mxu0 %v531
      %560 = vmatprep.subr.mxu0 0.0
      %561 = vmatpush1.msra.mxu0 0.0
      %562 = vmatprep.subr.mxu0 0.0
      %563 = vmatpush1.msra.mxu0 0.0
      %564 = vmatprep.subr.mxu0 0.0
      %565 = vmatpush1.msra.mxu0 0.0
      %566 = vmatprep.subr.mxu0 0.0
      %567 = vmatpush1.msra.mxu0 0.0
      %568 = vmatprep.subr.mxu0 0.0
      %569 = vmatpush1.msra.mxu0 0.0
      %570 = vmatprep.subr.mxu0 0.0
      %571 = vmatpush1.msra.mxu0 0.0
      %572 = vmatprep.subr.mxu0 0.0
      %573 = vmatpush1.msra.mxu0 0.0
      %574 = vmatprep.subr.mxu0 0.0
      %575 = vmatpush1.msra.mxu0 0.0
      %576 = vmatprep.subr.mxu0 0.0
      %577 = vmatpush1.msra.mxu0 0.0
      %578 = vmatprep.subr.mxu0 0.0
      %579 = vmatpush1.msra.mxu0 0.0
      %580 = vmatprep.subr.mxu0 0.0
      %581 = vmatpush1.msra.mxu0 0.0
      %582 = vmatprep.subr.mxu0 0.0
      %583 = vmatpush1.msra.mxu0 0.0
      %584 = vmatprep.subr.mxu0 0.0
      %585 = vmatpush1.msra.mxu0 0.0
      %586 = vmatprep.subr.mxu0 0.0
      %587 = vmatpush1.msra.mxu0 0.0
      %588 = vmatprep.subr.mxu0 0.0
      %589 = vmatpush1.msra.mxu0 0.0
      %590 = vmatprep.subr.mxu0 0.0
      %591 = vmatpush1.msra.mxu0 0.0
      %592 = vmatprep.subr.mxu0 0.0
      %593 = vmatpush1.msra.mxu0 0.0
      %594 = vmatprep.subr.mxu0 0.0
      %595 = vmatpush1.msra.mxu0 0.0
      %596 = vmatprep.subr.mxu0 0.0
      %597 = vmatpush1.msra.mxu0 0.0
      %598 = vmatprep.subr.mxu0 0.0
      %599 = vmatpush1.msra.mxu0 0.0
      %600 = vmatprep.subr.mxu0 0.0
      %601 = vmatpush1.msra.mxu0 0.0
      %602 = vmatprep.subr.mxu0 0.0
      %603 = vmatpush1.msra.mxu0 0.0
      %604 = vmatprep.subr.mxu0 0.0
      %605 = vmatpush1.msra.mxu0 0.0
      %606 = vmatprep.subr.mxu0 0.0
      %607 = vmatpush1.msra.mxu0 0.0
      %608 = vmatprep.subr.mxu0 0.0
      %609 = vmatpush1.msra.mxu0 0.0
      %610 = vmatprep.subr.mxu0 0.0
      %611 = vmatpush1.msra.mxu0 0.0
      %612 = vmatprep.subr.mxu0 0.0
      %613 = vmatpush1.msra.mxu0 0.0
      %614 = vmatprep.subr.mxu0 0.0
      %615 = vmatpush1.msra.mxu0 0.0
      %616 = vmatprep.mubr.f32.mxu0 0.0
      %617 = vmatmul.mubr.f32.gmra.mrb[0].mxu0 %v541
      %v618 = vpop.f32.mrb[0].mxu0
      %v619 = vadd.f32 %v537, %v618
      %v620 = vpop.f32.mrb[0].mxu0
      %621 = vmatprep.mubr.f32.mxu0 0.0
      %622 = vmatmul.mubr.f32.gmra.mrb[0].mxu0 %v544
      %v623 = vpop.f32.mrb[0].mxu0
      %v624 = vadd.f32 %v537, %v623
      %v625 = vpop.f32.mrb[0].mxu0
      %626 = vmatprep.mubr.f32.mxu0 0.0
      %627 = vmatmul.mubr.f32.gmra.mrb[0].mxu0 %v547
      %v628 = vpop.f32.mrb[0].mxu0
      %v629 = vadd.f32 %v537, %v628
      %v630 = vpop.f32.mrb[0].mxu0
      %631 = vmatprep.mubr.f32.mxu0 0.0
      %632 = vmatmul.mubr.f32.gmra.mrb[0].mxu0 %v550
      %v633 = vpop.f32.mrb[0].mxu0
      %v634 = vadd.f32 %v537, %v633
      %v635 = vpop.f32.mrb[0].mxu0
      %636 = vdwg.mxu0
      %v637 = vld [vmem:[%s5] sm:$0xff]
      %v638 = vld [vmem:[%s5 + $0x8] sm:$0xff]
      %v639 = vld [vmem:[%s5 + $0x10] sm:$0xff]
      %v640 = vld [vmem:[%s5 + $0x18] sm:$0xff]
      %v641 = vld [vmem:[%s6] sm:$0x1]
      %v643 = vlaneseq
      %v644 = vshrl.u32 %v643, 7
      %v645 = vsub.s32 0, %v644
      %v646 = vrot.slane %v641, %v645
      %648 = vmatprep.subr.mxu0 0.0
      %649 = vmatpush1.msra.mxu0 %v637
      %650 = vmatprep.subr.mxu0 0.0
      %651 = vmatpush1.msra.mxu0 %v638
      %652 = vmatprep.subr.mxu0 0.0
      %653 = vmatpush1.msra.mxu0 %v639
      %654 = vmatprep.subr.mxu0 0.0
      %655 = vmatpush1.msra.mxu0 %v640
      %656 = vmatprep.subr.mxu0 0.0
      %657 = vmatpush1.msra.mxu0 0.0
      %658 = vmatprep.subr.mxu0 0.0
      %659 = vmatpush1.msra.mxu0 0.0
      %660 = vmatprep.subr.mxu0 0.0
      %661 = vmatpush1.msra.mxu0 0.0
      %662 = vmatprep.subr.mxu0 0.0
      %663 = vmatpush1.msra.mxu0 0.0
      %664 = vmatprep.subr.mxu0 0.0
      %665 = vmatpush1.msra.mxu0 0.0
      %666 = vmatprep.subr.mxu0 0.0
      %667 = vmatpush1.msra.mxu0 0.0
      %668 = vmatprep.subr.mxu0 0.0
      %669 = vmatpush1.msra.mxu0 0.0
      %670 = vmatprep.subr.mxu0 0.0
      %671 = vmatpush1.msra.mxu0 0.0
      %672 = vmatprep.subr.mxu0 0.0
      %673 = vmatpush1.msra.mxu0 0.0
      %674 = vmatprep.subr.mxu0 0.0
      %675 = vmatpush1.msra.mxu0 0.0
      %676 = vmatprep.subr.mxu0 0.0
      %677 = vmatpush1.msra.mxu0 0.0
      %678 = vmatprep.subr.mxu0 0.0
      %679 = vmatpush1.msra.mxu0 0.0
      %680 = vmatprep.subr.mxu0 0.0
      %681 = vmatpush1.msra.mxu0 0.0
      %682 = vmatprep.subr.mxu0 0.0
      %683 = vmatpush1.msra.mxu0 0.0
      %684 = vmatprep.subr.mxu0 0.0
      %685 = vmatpush1.msra.mxu0 0.0
      %686 = vmatprep.subr.mxu0 0.0
      %687 = vmatpush1.msra.mxu0 0.0
      %688 = vmatprep.subr.mxu0 0.0
      %689 = vmatpush1.msra.mxu0 0.0
      %690 = vmatprep.subr.mxu0 0.0
      %691 = vmatpush1.msra.mxu0 0.0
      %692 = vmatprep.subr.mxu0 0.0
      %693 = vmatpush1.msra.mxu0 0.0
      %694 = vmatprep.subr.mxu0 0.0
      %695 = vmatpush1.msra.mxu0 0.0
      %696 = vmatprep.subr.mxu0 0.0
      %697 = vmatpush1.msra.mxu0 0.0
      %698 = vmatprep.subr.mxu0 0.0
      %699 = vmatpush1.msra.mxu0 0.0
      %700 = vmatprep.subr.mxu0 0.0
      %701 = vmatpush1.msra.mxu0 0.0
      %702 = vmatprep.subr.mxu0 0.0
      %703 = vmatpush1.msra.mxu0 0.0
      %704 = vmatprep.subr.mxu0 0.0
      %705 = vmatpush1.msra.mxu0 0.0
      %706 = vmatprep.subr.mxu0 0.0
      %707 = vmatpush1.msra.mxu0 0.0
      %708 = vmatprep.subr.mxu0 0.0
      %709 = vmatpush1.msra.mxu0 0.0
      %710 = vmatprep.subr.mxu0 0.0
      %711 = vmatpush1.msra.mxu0 0.0
      %712 = vmatprep.mubr.f32.mxu0 0.0
      %713 = vmatmul.mubr.f32.gmra.mrb[0].mxu0 %v541
      %v714 = vpop.f32.mrb[0].mxu0
      %v715 = vadd.f32 %v646, %v714
      %v716 = vpop.f32.mrb[0].mxu0
      %717 = vmatprep.mubr.f32.mxu0 0.0
      %718 = vmatmul.mubr.f32.gmra.mrb[0].mxu0 %v544
      %v719 = vpop.f32.mrb[0].mxu0
      %v720 = vadd.f32 %v646, %v719
      %v721 = vpop.f32.mrb[0].mxu0
      %722 = vmatprep.mubr.f32.mxu0 0.0
      %723 = vmatmul.mubr.f32.gmra.mrb[0].mxu0 %v547
      %v724 = vpop.f32.mrb[0].mxu0
      %v725 = vadd.f32 %v646, %v724
      %v726 = vpop.f32.mrb[0].mxu0
      %727 = vmatprep.mubr.f32.mxu0 0.0
      %728 = vmatmul.mubr.f32.gmra.mrb[0].mxu0 %v550
      %v729 = vpop.f32.mrb[0].mxu0
      %v730 = vadd.f32 %v646, %v729
      %v731 = vpop.f32.mrb[0].mxu0
      %732 = vdwg.mxu0
      %v733 = vld [vmem:[%s7] sm:$0xff]
      %v734 = vld [vmem:[%s7 + $0x8] sm:$0xff]
      %v735 = vld [vmem:[%s7 + $0x10] sm:$0xff]
      %v736 = vld [vmem:[%s7 + $0x18] sm:$0xff]
      %v737 = vld [vmem:[%s8] sm:$0x1]
      %v739 = vlaneseq
      %v740 = vshrl.u32 %v739, 7
      %v741 = vsub.s32 0, %v740
      %v742 = vrot.slane %v737, %v741
      %744 = vmatprep.subr.mxu0 0.0
      %745 = vmatpush1.msra.mxu0 %v733
      %746 = vmatprep.subr.mxu0 0.0
      %747 = vmatpush1.msra.mxu0 %v734
      %748 = vmatprep.subr.mxu0 0.0
      %749 = vmatpush1.msra.mxu0 %v735
      %750 = vmatprep.subr.mxu0 0.0
      %751 = vmatpush1.msra.mxu0 %v736
      %752 = vmatprep.subr.mxu0 0.0
      %753 = vmatpush1.msra.mxu0 0.0
      %754 = vmatprep.subr.mxu0 0.0
      %755 = vmatpush1.msra.mxu0 0.0
      %756 = vmatprep.subr.mxu0 0.0
      %757 = vmatpush1.msra.mxu0 0.0
      %758 = vmatprep.subr.mxu0 0.0
      %759 = vmatpush1.msra.mxu0 0.0
      %760 = vmatprep.subr.mxu0 0.0
      %761 = vmatpush1.msra.mxu0 0.0
      %762 = vmatprep.subr.mxu0 0.0
      %763 = vmatpush1.msra.mxu0 0.0
      %764 = vmatprep.subr.mxu0 0.0
      %765 = vmatpush1.msra.mxu0 0.0
      %766 = vmatprep.subr.mxu0 0.0
      %767 = vmatpush1.msra.mxu0 0.0
      %768 = vmatprep.subr.mxu0 0.0
      %769 = vmatpush1.msra.mxu0 0.0
      %770 = vmatprep.subr.mxu0 0.0
      %771 = vmatpush1.msra.mxu0 0.0
      %772 = vmatprep.subr.mxu0 0.0
      %773 = vmatpush1.msra.mxu0 0.0
      %774 = vmatprep.subr.mxu0 0.0
      %775 = vmatpush1.msra.mxu0 0.0
      %776 = vmatprep.subr.mxu0 0.0
      %777 = vmatpush1.msra.mxu0 0.0
      %778 = vmatprep.subr.mxu0 0.0
      %779 = vmatpush1.msra.mxu0 0.0
      %780 = vmatprep.subr.mxu0 0.0
      %781 = vmatpush1.msra.mxu0 0.0
      %782 = vmatprep.subr.mxu0 0.0
      %783 = vmatpush1.msra.mxu0 0.0
      %784 = vmatprep.subr.mxu0 0.0
      %785 = vmatpush1.msra.mxu0 0.0
      %786 = vmatprep.subr.mxu0 0.0
      %787 = vmatpush1.msra.mxu0 0.0
      %788 = vmatprep.subr.mxu0 0.0
      %789 = vmatpush1.msra.mxu0 0.0
      %790 = vmatprep.subr.mxu0 0.0
      %791 = vmatpush1.msra.mxu0 0.0
      %792 = vmatprep.subr.mxu0 0.0
      %793 = vmatpush1.msra.mxu0 0.0
      %794 = vmatprep.subr.mxu0 0.0
      %795 = vmatpush1.msra.mxu0 0.0
      %796 = vmatprep.subr.mxu0 0.0
      %797 = vmatpush1.msra.mxu0 0.0
      %798 = vmatprep.subr.mxu0 0.0
      %799 = vmatpush1.msra.mxu0 0.0
      %800 = vmatprep.subr.mxu0 0.0
      %801 = vmatpush1.msra.mxu0 0.0
      %802 = vmatprep.subr.mxu0 0.0
      %803 = vmatpush1.msra.mxu0 0.0
      %804 = vmatprep.subr.mxu0 0.0
      %805 = vmatpush1.msra.mxu0 0.0
      %806 = vmatprep.subr.mxu0 0.0
      %807 = vmatpush1.msra.mxu0 0.0
      %808 = vmatprep.mubr.f32.mxu0 0.0
      %809 = vmatmul.mubr.f32.gmra.mrb[0].mxu0 %v541
      %v810 = vpop.f32.mrb[0].mxu0
      %v811 = vadd.f32 %v742, %v810
      %v812 = vpop.f32.mrb[0].mxu0
      %813 = vmatprep.mubr.f32.mxu0 0.0
      %814 = vmatmul.mubr.f32.gmra.mrb[0].mxu0 %v544
      %v815 = vpop.f32.mrb[0].mxu0
      %v816 = vadd.f32 %v742, %v815
      %v817 = vpop.f32.mrb[0].mxu0
      %818 = vmatprep.mubr.f32.mxu0 0.0
      %819 = vmatmul.mubr.f32.gmra.mrb[0].mxu0 %v547
      %v820 = vpop.f32.mrb[0].mxu0
      %v821 = vadd.f32 %v742, %v820
      %v822 = vpop.f32.mrb[0].mxu0
      %823 = vmatprep.mubr.f32.mxu0 0.0
      %824 = vmatmul.mubr.f32.gmra.mrb[0].mxu0 %v550
      %v825 = vpop.f32.mrb[0].mxu0
      %v826 = vadd.f32 %v742, %v825
      %v827 = vpop.f32.mrb[0].mxu0
      %828 = vdwg.mxu0
      %829 = vst.msk [vmem:[%s403] sm:$0xff] %vm539, %v619
      %830 = vst.msk [vmem:[%s403 + $0x8] sm:$0xff] %vm539, %v624
      %831 = vst.msk [vmem:[%s403 + $0x10] sm:$0xff] %vm539, %v629
      %832 = vst.msk [vmem:[%s403 + $0x18] sm:$0xff] %vm539, %v634
      %833 = vst.msk [vmem:[%s409] sm:$0xff] %vm539, %v715
      %834 = vst.msk [vmem:[%s409 + $0x8] sm:$0xff] %vm539, %v720
      %835 = vst.msk [vmem:[%s409 + $0x10] sm:$0xff] %vm539, %v725
      %836 = vst.msk [vmem:[%s409 + $0x18] sm:$0xff] %vm539, %v730
      %837 = vst.msk [vmem:[%s415] sm:$0xff] %vm539, %v811
      %838 = vst.msk [vmem:[%s415 + $0x8] sm:$0xff] %vm539, %v816
      %839 = vst.msk [vmem:[%s415 + $0x10] sm:$0xff] %vm539, %v821
      %840 = vst.msk [vmem:[%s415 + $0x18] sm:$0xff] %vm539, %v826
      %s841 = smul.u32 4, %s23
      %p842 = scmp.lt.s32.totalorder %s841, 7
      %s843 = scalar_select %p842, %s841, 7
      %s844 = smul.addr %s843, 8
      %s845 = scalar_lea.vmem %s9, %s844
      %s846 = smul.u32 4, %s23
      %p847 = scmp.lt.s32.totalorder %s846, 7
      %s848 = scalar_select %p847, %s846, 7
      %s849 = smul.addr %s848, 8
      %s850 = scalar_lea.vmem %s10, %s849
      %s851 = smul.u32 4, %s23
      %p852 = scmp.lt.s32.totalorder %s851, 7
      %s853 = scalar_select %p852, %s851, 7
      %s854 = smul.addr %s853, 8
      %s855 = scalar_lea.vmem %s11, %s854
      // Predicated region
      $region57: #{encoder_attn_forward.2} parent=55 // pred_check
        %p856 = pneg %p235
      $region58: #{encoder_attn_forward.2} parent=55 // pred_check_branch
        %858 = sbr.rel (%p856) target = $region60
      $region59: #{encoder_attn_forward.2} parent=55 // pred_region
        %s859 = smul.u32 4, %s23
      $region60: #{encoder_attn_forward.2} parent=55 // pred_fallthru
        _
      // Predicated region
      $region61: #{encoder_attn_forward.2} parent=55 // pred_check
        %p860 = pneg %p261
      $region62: #{encoder_attn_forward.2} parent=55 // pred_check_branch
        %862 = sbr.rel (%p860) target = $region64
      $region63: #{encoder_attn_forward.2} parent=55 // pred_region
        %s863 = smul.u32 4, %s23
      $region64: #{encoder_attn_forward.2} parent=55 // pred_fallthru
        _
      // Predicated region
      $region65: #{encoder_attn_forward.2} parent=55 // pred_check
        %p864 = pneg %p287
      $region66: #{encoder_attn_forward.2} parent=55 // pred_check_branch
        %866 = sbr.rel (%p864) target = $region68
      $region67: #{encoder_attn_forward.2} parent=55 // pred_region
        %s867 = smul.u32 4, %s23
      $region68: #{encoder_attn_forward.2} parent=55 // pred_fallthru
        _
    $region56: #{encoder_attn_forward.2} parent=5 // pred_fallthru
      _
    %p868 = scmp.le.s32.totalorder 2, %s18
    // Predicated region
    $region69: #{encoder_attn_forward.2} parent=5 // pred_check
      %p869 = pneg %p868
    $region70: #{encoder_attn_forward.2} parent=5 // pred_check_branch
      %871 = sbr.rel (%p869) target = $region72
    $region71: #{encoder_attn_forward.2} parent=5 // pred_region
      %s872 = ssub.s32 %s18, 2
      // Predicated region
      $region73: #{encoder_attn_forward.2} parent=71 // pred_check
        %p873 = pneg %p241
      $region74: #{encoder_attn_forward.2} parent=71 // pred_check_branch
        %875 = sbr.rel (%p873) target = $region76
      $region75: #{encoder_attn_forward.2} parent=71 // pred_region
        %s876 = smul.u32 4, %s24
        %p877 = scmp.lt.s32.totalorder %s876, 7
        %s878 = scalar_select %p877, %s876, 7
        %s879 = smul.addr %s878, 8
        %s880 = scalar_lea.vmem %s9, %s879
      $region76: #{encoder_attn_forward.2} parent=71 // pred_fallthru
        _
      // Predicated region
      $region77: #{encoder_attn_forward.2} parent=71 // pred_check
        %p881 = pneg %p267
      $region78: #{encoder_attn_forward.2} parent=71 // pred_check_branch
        %883 = sbr.rel (%p881) target = $region80
      $region79: #{encoder_attn_forward.2} parent=71 // pred_region
        %s884 = smul.u32 4, %s24
        %p885 = scmp.lt.s32.totalorder %s884, 7
        %s886 = scalar_select %p885, %s884, 7
        %s887 = smul.addr %s886, 8
        %s888 = scalar_lea.vmem %s10, %s887
      $region80: #{encoder_attn_forward.2} parent=71 // pred_fallthru
        _
      // Predicated region
      $region81: #{encoder_attn_forward.2} parent=71 // pred_check
        %p889 = pneg %p293
      $region82: #{encoder_attn_forward.2} parent=71 // pred_check_branch
        %891 = sbr.rel (%p889) target = $region84
      $region83: #{encoder_attn_forward.2} parent=71 // pred_region
        %s892 = smul.u32 4, %s24
        %p893 = scmp.lt.s32.totalorder %s892, 7
        %s894 = scalar_select %p893, %s892, 7
        %s895 = smul.addr %s894, 8
        %s896 = scalar_lea.vmem %s11, %s895
      $region84: #{encoder_attn_forward.2} parent=71 // pred_fallthru
        _
    $region72: #{encoder_attn_forward.2} parent=5 // pred_fallthru
      _
  $region6: #{encoder_attn_forward.2} parent=0 // loop_footer
    %s22 = sadd.s32 1, %s18
  $region7: #{encoder_attn_forward.2} parent=0 // loop_footer_branch
    %17 = sbr.rel target = $region3
  $region8: #{encoder_attn_forward.2} parent=0 // loop_exit
    _

// kernel: encoder_attn_forward.3
$region0: #{encoder_attn_forward.3}
  #allocation0 [shape = 'u32[]', space=smem, size = 0x4, offset = 0x4, fixed_abs, tag = 'smem constant byte address 0x4 - core index']
  #allocation1 [shape = 'u32[144,128]{1,0:T(1,128)}', space=vmem, size = 0x12000, scoped, tag = 'internal scratch']
  %s0 = inlined_call_operand.vmem [shape: f32[2,32,32], index: 0, kind: input, shape index: {}]
  %s1 = inlined_call_operand.vmem [shape: f32[2,32,8,32], index: 1, kind: input, shape index: {}]
  %s2 = inlined_call_operand.vmem [shape: f32[2,32,8,32], index: 2, kind: input, shape index: {}]
  %s3 = inlined_call_operand.vmem [shape: f32[2,32,8,16], index: 3, kind: input, shape index: {}]
  %s4 = inlined_call_operand.vmem [shape: f32[2,32,16], index: 4, kind: input, shape index: {}]
  %s5 = inlined_call_operand.vmem [shape: f32[2,32,16], index: 5, kind: input, shape index: {}]
  %s6 = inlined_call_operand.vmem [shape: f32[1,16], index: 6, kind: input, shape index: {}]
  %s7 = inlined_call_operand.vmem [shape: f32[16,32], index: 7, kind: input, shape index: {}]
  %s8 = inlined_call_operand.vmem [shape: f32[1,32], index: 8, kind: input, shape index: {}]
  %s9 = inlined_call_operand.vmem [shape: f32[32,16], index: 9, kind: input, shape index: {}]
  %s10 = inlined_call_operand.vmem [shape: f32[1,16], index: 10, kind: input, shape index: {}]
  %s11 = inlined_call_operand.vmem [shape: f32[16,32], index: 11, kind: input, shape index: {}]
  %s12 = inlined_call_operand.vmem [shape: f32[1,32], index: 12, kind: input, shape index: {}]
  %s13 = inlined_call_operand.vmem [shape: f32[32,16], index: 13, kind: input, shape index: {}]
  %s14 = inlined_call_operand.vmem [shape: f32[1,16], index: 14, kind: input, shape index: {}]
  %s15 = inlined_call_operand.vmem [shape: f32[2,32,16], index: 15, kind: output, shape index: {}]
  %s16 = sld [smem:[#allocation0]]
  $region93: #{encoder_attn_forward.3} parent=0
    _
  %s18 = ssub.s32 1, %s16
  %s19 = scalar_select 0, %s18, %s16
  loop: start=0, step=1, limit=6
  $region2: #{encoder_attn_forward.3} parent=0 // loop_pre_header
    _
  $region3: #{encoder_attn_forward.3} parent=0 // loop_header
    %s21 = sphi 0, %s25
    %p22 = scmp.ge.s32.totalorder %s21, 6
    %s28 = sphi 0, %s40
    %s29 = sphi 0, %s36
    %s30 = sphi 0, %s28
    %s31 = sphi 0, %s29
    %s32 = sphi 0, %s30
    %s33 = sphi 0, %s31
    %s45 = sphi 0, %s47
    %s48 = sphi 0, %s45
    %s49 = sphi 0, %s48
    %s65 = sphi 0, %s49
    %s73 = sphi 0, %s75
    %s76 = sphi 0, %s73
    %s77 = sphi 0, %s76
    %s93 = sphi 0, %s77
    %s101 = sphi 0, %s103
    %s104 = sphi 0, %s101
    %s105 = sphi 0, %s104
    %s121 = sphi 0, %s105
    %s129 = sphi 0, %s131
    %s132 = sphi 0, %s129
    %s133 = sphi 0, %s132
    %s149 = sphi 0, %s133
    %s157 = sphi 0, %s159
    %s160 = sphi 0, %s157
    %s161 = sphi 0, %s160
    %s177 = sphi 0, %s161
    %s185 = sphi 0, %s187
    %s188 = sphi 0, %s185
    %s189 = sphi 0, %s188
    %s205 = sphi 0, %s189
    %s209 = sphi 0, %s209
    %s211 = sphi 0, %s209
    %s212 = sphi 0, %s211
    %s226 = sphi 0, %s212
    %s230 = sphi 0, %s230
    %s232 = sphi 0, %s230
    %s233 = sphi 0, %s232
    %s247 = sphi 0, %s233
    %s251 = sphi 0, %s251
    %s253 = sphi 0, %s251
    %s254 = sphi 0, %s253
    %s268 = sphi 0, %s254
    %s272 = sphi 0, %s272
    %s274 = sphi 0, %s272
    %s275 = sphi 0, %s274
    %s289 = sphi 0, %s275
    %s293 = sphi 0, %s293
    %s295 = sphi 0, %s293
    %s296 = sphi 0, %s295
    %s310 = sphi 0, %s296
    %s314 = sphi 0, %s314
    %s316 = sphi 0, %s314
    %s317 = sphi 0, %s316
    %s331 = sphi 0, %s317
    %s335 = sphi 0, %s335
    %s337 = sphi 0, %s335
    %s338 = sphi 0, %s337
    %s352 = sphi 0, %s338
    %s356 = sphi 0, %s356
    %s358 = sphi 0, %s356
    %s359 = sphi 0, %s358
    %s373 = sphi 0, %s359
    %s377 = sphi 0, %s377
    %s379 = sphi 0, %s377
    %s380 = sphi 0, %s379
    %s394 = sphi 0, %s380
    %s402 = sphi 0, %s404
    %s405 = sphi 0, %s402
    %s406 = sphi 0, %s405
    %s422 = sphi 0, %s406
  $region4: #{encoder_attn_forward.3} parent=0 // loop_header_branch
    %24 = sbr.rel (%p22) target = $region8
  $region5: #{encoder_attn_forward.3} parent=0 // loop_body
    %s26 = ssub.s32 %s21, 1
    %s27 = ssub.s32 %s21, 2
    %s34 = sadd.s32 1, %s29
    %p35 = scmp.ge.s32.totalorder %s34, 2
    %s36 = scalar_select %p35, 0, %s34
    %s37 = sadd.s32 1, %s28
    %s38 = scalar_select %p35, %s37, %s28
    %p39 = scmp.ge.s32.totalorder %s38, 2
    %s40 = scalar_select %p39, 0, %s38
    %s41 = ssub.s32 %s28, %s40
    %s42 = ssub.s32 %s29, %s36
    %s43 = sor.u32 %s41, %s42
    %p44 = scmp.eq.s32.totalorder %s43, 0
    %s46 = sadd.s32 %s45, 1
    %s47 = scalar_select %p44, %s45, %s46
    %p50 = pneg %p44
    %p51 = scmp.eq.s32.totalorder %s21, 3
    %p52 = por %p50, %p51
    %p53 = scmp.ne.s32.totalorder %s45, %s48
    %p54 = scmp.eq.s32.totalorder %s21, 0
    %p55 = por %p53, %p54
    %p56 = scmp.ne.s32.totalorder %s45, %s48
    %p57 = scmp.eq.s32.totalorder %s26, 3
    %p58 = por %p56, %p57
    %p59 = scmp.ne.s32.totalorder %s48, %s49
    %p60 = scmp.eq.s32.totalorder %s26, 0
    %p61 = por %p59, %p60
    %p62 = scmp.ne.s32.totalorder %s48, %s49
    %p63 = scmp.eq.s32.totalorder %s27, 3
    %p64 = por %p62, %p63
    %p66 = scmp.ne.s32.totalorder %s49, %s65
    %p67 = scmp.eq.s32.totalorder %s27, 0
    %p68 = por %p66, %p67
    %s69 = ssub.s32 %s28, %s40
    %s70 = ssub.s32 %s29, %s36
    %s71 = sor.u32 %s69, %s70
    %p72 = scmp.eq.s32.totalorder %s71, 0
    %s74 = sadd.s32 %s73, 1
    %s75 = scalar_select %p72, %s73, %s74
    %p78 = pneg %p72
    %p79 = scmp.eq.s32.totalorder %s21, 3
    %p80 = por %p78, %p79
    %p81 = scmp.ne.s32.totalorder %s73, %s76
    %p82 = scmp.eq.s32.totalorder %s21, 0
    %p83 = por %p81, %p82
    %p84 = scmp.ne.s32.totalorder %s73, %s76
    %p85 = scmp.eq.s32.totalorder %s26, 3
    %p86 = por %p84, %p85
    %p87 = scmp.ne.s32.totalorder %s76, %s77
    %p88 = scmp.eq.s32.totalorder %s26, 0
    %p89 = por %p87, %p88
    %p90 = scmp.ne.s32.totalorder %s76, %s77
    %p91 = scmp.eq.s32.totalorder %s27, 3
    %p92 = por %p90, %p91
    %p94 = scmp.ne.s32.totalorder %s77, %s93
    %p95 = scmp.eq.s32.totalorder %s27, 0
    %p96 = por %p94, %p95
    %s97 = ssub.s32 %s28, %s40
    %s98 = ssub.s32 %s29, %s36
    %s99 = sor.u32 %s97, %s98
    %p100 = scmp.eq.s32.totalorder %s99, 0
    %s102 = sadd.s32 %s101, 1
    %s103 = scalar_select %p100, %s101, %s102
    %p106 = pneg %p100
    %p107 = scmp.eq.s32.totalorder %s21, 3
    %p108 = por %p106, %p107
    %p109 = scmp.ne.s32.totalorder %s101, %s104
    %p110 = scmp.eq.s32.totalorder %s21, 0
    %p111 = por %p109, %p110
    %p112 = scmp.ne.s32.totalorder %s101, %s104
    %p113 = scmp.eq.s32.totalorder %s26, 3
    %p114 = por %p112, %p113
    %p115 = scmp.ne.s32.totalorder %s104, %s105
    %p116 = scmp.eq.s32.totalorder %s26, 0
    %p117 = por %p115, %p116
    %p118 = scmp.ne.s32.totalorder %s104, %s105
    %p119 = scmp.eq.s32.totalorder %s27, 3
    %p120 = por %p118, %p119
    %p122 = scmp.ne.s32.totalorder %s105, %s121
    %p123 = scmp.eq.s32.totalorder %s27, 0
    %p124 = por %p122, %p123
    %s125 = ssub.s32 %s28, %s40
    %s126 = ssub.s32 %s29, %s36
    %s127 = sor.u32 %s125, %s126
    %p128 = scmp.eq.s32.totalorder %s127, 0
    %s130 = sadd.s32 %s129, 1
    %s131 = scalar_select %p128, %s129, %s130
    %p134 = pneg %p128
    %p135 = scmp.eq.s32.totalorder %s21, 3
    %p136 = por %p134, %p135
    %p137 = scmp.ne.s32.totalorder %s129, %s132
    %p138 = scmp.eq.s32.totalorder %s21, 0
    %p139 = por %p137, %p138
    %p140 = scmp.ne.s32.totalorder %s129, %s132
    %p141 = scmp.eq.s32.totalorder %s26, 3
    %p142 = por %p140, %p141
    %p143 = scmp.ne.s32.totalorder %s132, %s133
    %p144 = scmp.eq.s32.totalorder %s26, 0
    %p145 = por %p143, %p144
    %p146 = scmp.ne.s32.totalorder %s132, %s133
    %p147 = scmp.eq.s32.totalorder %s27, 3
    %p148 = por %p146, %p147
    %p150 = scmp.ne.s32.totalorder %s133, %s149
    %p151 = scmp.eq.s32.totalorder %s27, 0
    %p152 = por %p150, %p151
    %s153 = ssub.s32 %s28, %s40
    %s154 = ssub.s32 %s29, %s36
    %s155 = sor.u32 %s153, %s154
    %p156 = scmp.eq.s32.totalorder %s155, 0
    %s158 = sadd.s32 %s157, 1
    %s159 = scalar_select %p156, %s157, %s158
    %p162 = pneg %p156
    %p163 = scmp.eq.s32.totalorder %s21, 3
    %p164 = por %p162, %p163
    %p165 = scmp.ne.s32.totalorder %s157, %s160
    %p166 = scmp.eq.s32.totalorder %s21, 0
    %p167 = por %p165, %p166
    %p168 = scmp.ne.s32.totalorder %s157, %s160
    %p169 = scmp.eq.s32.totalorder %s26, 3
    %p170 = por %p168, %p169
    %p171 = scmp.ne.s32.totalorder %s160, %s161
    %p172 = scmp.eq.s32.totalorder %s26, 0
    %p173 = por %p171, %p172
    %p174 = scmp.ne.s32.totalorder %s160, %s161
    %p175 = scmp.eq.s32.totalorder %s27, 3
    %p176 = por %p174, %p175
    %p178 = scmp.ne.s32.totalorder %s161, %s177
    %p179 = scmp.eq.s32.totalorder %s27, 0
    %p180 = por %p178, %p179
    %s181 = ssub.s32 %s28, %s40
    %s182 = ssub.s32 %s29, %s36
    %s183 = sor.u32 %s181, %s182
    %p184 = scmp.eq.s32.totalorder %s183, 0
    %s186 = sadd.s32 %s185, 1
    %s187 = scalar_select %p184, %s185, %s186
    %p190 = pneg %p184
    %p191 = scmp.eq.s32.totalorder %s21, 3
    %p192 = por %p190, %p191
    %p193 = scmp.ne.s32.totalorder %s185, %s188
    %p194 = scmp.eq.s32.totalorder %s21, 0
    %p195 = por %p193, %p194
    %p196 = scmp.ne.s32.totalorder %s185, %s188
    %p197 = scmp.eq.s32.totalorder %s26, 3
    %p198 = por %p196, %p197
    %p199 = scmp.ne.s32.totalorder %s188, %s189
    %p200 = scmp.eq.s32.totalorder %s26, 0
    %p201 = por %p199, %p200
    %p202 = scmp.ne.s32.totalorder %s188, %s189
    %p203 = scmp.eq.s32.totalorder %s27, 3
    %p204 = por %p202, %p203
    %p206 = scmp.ne.s32.totalorder %s189, %s205
    %p207 = scmp.eq.s32.totalorder %s27, 0
    %p208 = por %p206, %p207
    %s210 = sadd.s32 %s209, 1
    %p213 = scmp.eq.s32.totalorder %s21, 3
    %p214 = scmp.ne.s32.totalorder %s209, %s211
    %p215 = scmp.eq.s32.totalorder %s21, 0
    %p216 = por %p214, %p215
    %p217 = scmp.ne.s32.totalorder %s209, %s211
    %p218 = scmp.eq.s32.totalorder %s26, 3
    %p219 = por %p217, %p218
    %p220 = scmp.ne.s32.totalorder %s211, %s212
    %p221 = scmp.eq.s32.totalorder %s26, 0
    %p222 = por %p220, %p221
    %p223 = scmp.ne.s32.totalorder %s211, %s212
    %p224 = scmp.eq.s32.totalorder %s27, 3
    %p225 = por %p223, %p224
    %p227 = scmp.ne.s32.totalorder %s212, %s226
    %p228 = scmp.eq.s32.totalorder %s27, 0
    %p229 = por %p227, %p228
    %s231 = sadd.s32 %s230, 1
    %p234 = scmp.eq.s32.totalorder %s21, 3
    %p235 = scmp.ne.s32.totalorder %s230, %s232
    %p236 = scmp.eq.s32.totalorder %s21, 0
    %p237 = por %p235, %p236
    %p238 = scmp.ne.s32.totalorder %s230, %s232
    %p239 = scmp.eq.s32.totalorder %s26, 3
    %p240 = por %p238, %p239
    %p241 = scmp.ne.s32.totalorder %s232, %s233
    %p242 = scmp.eq.s32.totalorder %s26, 0
    %p243 = por %p241, %p242
    %p244 = scmp.ne.s32.totalorder %s232, %s233
    %p245 = scmp.eq.s32.totalorder %s27, 3
    %p246 = por %p244, %p245
    %p248 = scmp.ne.s32.totalorder %s233, %s247
    %p249 = scmp.eq.s32.totalorder %s27, 0
    %p250 = por %p248, %p249
    %s252 = sadd.s32 %s251, 1
    %p255 = scmp.eq.s32.totalorder %s21, 3
    %p256 = scmp.ne.s32.totalorder %s251, %s253
    %p257 = scmp.eq.s32.totalorder %s21, 0
    %p258 = por %p256, %p257
    %p259 = scmp.ne.s32.totalorder %s251, %s253
    %p260 = scmp.eq.s32.totalorder %s26, 3
    %p261 = por %p259, %p260
    %p262 = scmp.ne.s32.totalorder %s253, %s254
    %p263 = scmp.eq.s32.totalorder %s26, 0
    %p264 = por %p262, %p263
    %p265 = scmp.ne.s32.totalorder %s253, %s254
    %p266 = scmp.eq.s32.totalorder %s27, 3
    %p267 = por %p265, %p266
    %p269 = scmp.ne.s32.totalorder %s254, %s268
    %p270 = scmp.eq.s32.totalorder %s27, 0
    %p271 = por %p269, %p270
    %s273 = sadd.s32 %s272, 1
    %p276 = scmp.eq.s32.totalorder %s21, 3
    %p277 = scmp.ne.s32.totalorder %s272, %s274
    %p278 = scmp.eq.s32.totalorder %s21, 0
    %p279 = por %p277, %p278
    %p280 = scmp.ne.s32.totalorder %s272, %s274
    %p281 = scmp.eq.s32.totalorder %s26, 3
    %p282 = por %p280, %p281
    %p283 = scmp.ne.s32.totalorder %s274, %s275
    %p284 = scmp.eq.s32.totalorder %s26, 0
    %p285 = por %p283, %p284
    %p286 = scmp.ne.s32.totalorder %s274, %s275
    %p287 = scmp.eq.s32.totalorder %s27, 3
    %p288 = por %p286, %p287
    %p290 = scmp.ne.s32.totalorder %s275, %s289
    %p291 = scmp.eq.s32.totalorder %s27, 0
    %p292 = por %p290, %p291
    %s294 = sadd.s32 %s293, 1
    %p297 = scmp.eq.s32.totalorder %s21, 3
    %p298 = scmp.ne.s32.totalorder %s293, %s295
    %p299 = scmp.eq.s32.totalorder %s21, 0
    %p300 = por %p298, %p299
    %p301 = scmp.ne.s32.totalorder %s293, %s295
    %p302 = scmp.eq.s32.totalorder %s26, 3
    %p303 = por %p301, %p302
    %p304 = scmp.ne.s32.totalorder %s295, %s296
    %p305 = scmp.eq.s32.totalorder %s26, 0
    %p306 = por %p304, %p305
    %p307 = scmp.ne.s32.totalorder %s295, %s296
    %p308 = scmp.eq.s32.totalorder %s27, 3
    %p309 = por %p307, %p308
    %p311 = scmp.ne.s32.totalorder %s296, %s310
    %p312 = scmp.eq.s32.totalorder %s27, 0
    %p313 = por %p311, %p312
    %s315 = sadd.s32 %s314, 1
    %p318 = scmp.eq.s32.totalorder %s21, 3
    %p319 = scmp.ne.s32.totalorder %s314, %s316
    %p320 = scmp.eq.s32.totalorder %s21, 0
    %p321 = por %p319, %p320
    %p322 = scmp.ne.s32.totalorder %s314, %s316
    %p323 = scmp.eq.s32.totalorder %s26, 3
    %p324 = por %p322, %p323
    %p325 = scmp.ne.s32.totalorder %s316, %s317
    %p326 = scmp.eq.s32.totalorder %s26, 0
    %p327 = por %p325, %p326
    %p328 = scmp.ne.s32.totalorder %s316, %s317
    %p329 = scmp.eq.s32.totalorder %s27, 3
    %p330 = por %p328, %p329
    %p332 = scmp.ne.s32.totalorder %s317, %s331
    %p333 = scmp.eq.s32.totalorder %s27, 0
    %p334 = por %p332, %p333
    %s336 = sadd.s32 %s335, 1
    %p339 = scmp.eq.s32.totalorder %s21, 3
    %p340 = scmp.ne.s32.totalorder %s335, %s337
    %p341 = scmp.eq.s32.totalorder %s21, 0
    %p342 = por %p340, %p341
    %p343 = scmp.ne.s32.totalorder %s335, %s337
    %p344 = scmp.eq.s32.totalorder %s26, 3
    %p345 = por %p343, %p344
    %p346 = scmp.ne.s32.totalorder %s337, %s338
    %p347 = scmp.eq.s32.totalorder %s26, 0
    %p348 = por %p346, %p347
    %p349 = scmp.ne.s32.totalorder %s337, %s338
    %p350 = scmp.eq.s32.totalorder %s27, 3
    %p351 = por %p349, %p350
    %p353 = scmp.ne.s32.totalorder %s338, %s352
    %p354 = scmp.eq.s32.totalorder %s27, 0
    %p355 = por %p353, %p354
    %s357 = sadd.s32 %s356, 1
    %p360 = scmp.eq.s32.totalorder %s21, 3
    %p361 = scmp.ne.s32.totalorder %s356, %s358
    %p362 = scmp.eq.s32.totalorder %s21, 0
    %p363 = por %p361, %p362
    %p364 = scmp.ne.s32.totalorder %s356, %s358
    %p365 = scmp.eq.s32.totalorder %s26, 3
    %p366 = por %p364, %p365
    %p367 = scmp.ne.s32.totalorder %s358, %s359
    %p368 = scmp.eq.s32.totalorder %s26, 0
    %p369 = por %p367, %p368
    %p370 = scmp.ne.s32.totalorder %s358, %s359
    %p371 = scmp.eq.s32.totalorder %s27, 3
    %p372 = por %p370, %p371
    %p374 = scmp.ne.s32.totalorder %s359, %s373
    %p375 = scmp.eq.s32.totalorder %s27, 0
    %p376 = por %p374, %p375
    %s378 = sadd.s32 %s377, 1
    %p381 = scmp.eq.s32.totalorder %s21, 3
    %p382 = scmp.ne.s32.totalorder %s377, %s379
    %p383 = scmp.eq.s32.totalorder %s21, 0
    %p384 = por %p382, %p383
    %p385 = scmp.ne.s32.totalorder %s377, %s379
    %p386 = scmp.eq.s32.totalorder %s26, 3
    %p387 = por %p385, %p386
    %p388 = scmp.ne.s32.totalorder %s379, %s380
    %p389 = scmp.eq.s32.totalorder %s26, 0
    %p390 = por %p388, %p389
    %p391 = scmp.ne.s32.totalorder %s379, %s380
    %p392 = scmp.eq.s32.totalorder %s27, 3
    %p393 = por %p391, %p392
    %p395 = scmp.ne.s32.totalorder %s380, %s394
    %p396 = scmp.eq.s32.totalorder %s27, 0
    %p397 = por %p395, %p396
    %s398 = ssub.s32 %s28, %s40
    %s399 = ssub.s32 %s29, %s36
    %s400 = sor.u32 %s398, %s399
    %p401 = scmp.eq.s32.totalorder %s400, 0
    %s403 = sadd.s32 %s402, 1
    %s404 = scalar_select %p401, %s402, %s403
    %p407 = pneg %p401
    %p408 = scmp.eq.s32.totalorder %s21, 3
    %p409 = por %p407, %p408
    %p410 = scmp.ne.s32.totalorder %s402, %s405
    %p411 = scmp.eq.s32.totalorder %s21, 0
    %p412 = por %p410, %p411
    %p413 = scmp.ne.s32.totalorder %s402, %s405
    %p414 = scmp.eq.s32.totalorder %s26, 3
    %p415 = por %p413, %p414
    %p416 = scmp.ne.s32.totalorder %s405, %s406
    %p417 = scmp.eq.s32.totalorder %s26, 0
    %p418 = por %p416, %p417
    %p419 = scmp.ne.s32.totalorder %s405, %s406
    %p420 = scmp.eq.s32.totalorder %s27, 3
    %p421 = por %p419, %p420
    %p423 = scmp.ne.s32.totalorder %s406, %s422
    %p424 = scmp.eq.s32.totalorder %s27, 0
    %p425 = por %p423, %p424
    %p426 = scmp.le.s32.totalorder 1, %s21
    %p427 = scmp.lt.s32.totalorder %s21, 5
    %p428 = pnand %p426, %p427
    %p429 = pneg %p428
    // Predicated region
    $region9: #{encoder_attn_forward.3} parent=5 // pred_check
      _
    $region10: #{encoder_attn_forward.3} parent=5 // pred_check_branch
      %431 = sbr.rel (%p428) target = $region12
    $region11: #{encoder_attn_forward.3} parent=5 // pred_region
      %s432 = ssub.s32 %s21, 1
      // Predicated region
      $region13: #{encoder_attn_forward.3} parent=11 // pred_check
        %p433 = pneg %p222
      $region14: #{encoder_attn_forward.3} parent=11 // pred_check_branch
        %435 = sbr.rel (%p433) target = $region16
      $region15: #{encoder_attn_forward.3} parent=11 // pred_region
        _
      $region16: #{encoder_attn_forward.3} parent=11 // pred_fallthru
        _
      // Predicated region
      $region17: #{encoder_attn_forward.3} parent=11 // pred_check
        %p436 = pneg %p243
      $region18: #{encoder_attn_forward.3} parent=11 // pred_check_branch
        %438 = sbr.rel (%p436) target = $region20
      $region19: #{encoder_attn_forward.3} parent=11 // pred_region
        _
      $region20: #{encoder_attn_forward.3} parent=11 // pred_fallthru
        _
      // Predicated region
      $region21: #{encoder_attn_forward.3} parent=11 // pred_check
        %p439 = pneg %p264
      $region22: #{encoder_attn_forward.3} parent=11 // pred_check_branch
        %441 = sbr.rel (%p439) target = $region24
      $region23: #{encoder_attn_forward.3} parent=11 // pred_region
        _
      $region24: #{encoder_attn_forward.3} parent=11 // pred_fallthru
        _
      // Predicated region
      $region25: #{encoder_attn_forward.3} parent=11 // pred_check
        %p442 = pneg %p285
      $region26: #{encoder_attn_forward.3} parent=11 // pred_check_branch
        %444 = sbr.rel (%p442) target = $region28
      $region27: #{encoder_attn_forward.3} parent=11 // pred_region
        _
      $region28: #{encoder_attn_forward.3} parent=11 // pred_fallthru
        _
      // Predicated region
      $region29: #{encoder_attn_forward.3} parent=11 // pred_check
        %p445 = pneg %p306
      $region30: #{encoder_attn_forward.3} parent=11 // pred_check_branch
        %447 = sbr.rel (%p445) target = $region32
      $region31: #{encoder_attn_forward.3} parent=11 // pred_region
        _
      $region32: #{encoder_attn_forward.3} parent=11 // pred_fallthru
        _
      // Predicated region
      $region33: #{encoder_attn_forward.3} parent=11 // pred_check
        %p448 = pneg %p327
      $region34: #{encoder_attn_forward.3} parent=11 // pred_check_branch
        %450 = sbr.rel (%p448) target = $region36
      $region35: #{encoder_attn_forward.3} parent=11 // pred_region
        _
      $region36: #{encoder_attn_forward.3} parent=11 // pred_fallthru
        _
      // Predicated region
      $region37: #{encoder_attn_forward.3} parent=11 // pred_check
        %p451 = pneg %p348
      $region38: #{encoder_attn_forward.3} parent=11 // pred_check_branch
        %453 = sbr.rel (%p451) target = $region40
      $region39: #{encoder_attn_forward.3} parent=11 // pred_region
        _
      $region40: #{encoder_attn_forward.3} parent=11 // pred_fallthru
        _
      // Predicated region
      $region41: #{encoder_attn_forward.3} parent=11 // pred_check
        %p454 = pneg %p369
      $region42: #{encoder_attn_forward.3} parent=11 // pred_check_branch
        %456 = sbr.rel (%p454) target = $region44
      $region43: #{encoder_attn_forward.3} parent=11 // pred_region
        _
      $region44: #{encoder_attn_forward.3} parent=11 // pred_fallthru
        _
      // Predicated region
      $region45: #{encoder_attn_forward.3} parent=11 // pred_check
        %p457 = pneg %p390
      $region46: #{encoder_attn_forward.3} parent=11 // pred_check_branch
        %459 = sbr.rel (%p457) target = $region48
      $region47: #{encoder_attn_forward.3} parent=11 // pred_region
        _
      $region48: #{encoder_attn_forward.3} parent=11 // pred_fallthru
        _
    $region12: #{encoder_attn_forward.3} parent=5 // pred_fallthru
      _
    %p460 = scmp.lt.s32.totalorder %s21, 4
    // Predicated region
    $region49: #{encoder_attn_forward.3} parent=5 // pred_check
      %p461 = pneg %p460
    $region50: #{encoder_attn_forward.3} parent=5 // pred_check_branch
      %463 = sbr.rel (%p461) target = $region52
    $region51: #{encoder_attn_forward.3} parent=5 // pred_region
      // Predicated region
      $region53: #{encoder_attn_forward.3} parent=51 // pred_check
        %p464 = pneg %p55
      $region54: #{encoder_attn_forward.3} parent=51 // pred_check_branch
        %466 = sbr.rel (%p464) target = $region56
      $region55: #{encoder_attn_forward.3} parent=51 // pred_region
        %s467 = smul.u32 2, %s29
        %p468 = scmp.lt.s32.totalorder %s28, 1
        %s469 = scalar_select %p468, %s28, 1
        %p470 = scmp.lt.s32.totalorder %s467, 3
        %s471 = scalar_select %p470, %s467, 3
        %s472 = smul.addr %s469, 4
        %s473 = sadd.s32 %s471, %s472
        %s474 = smul.addr %s473, 8
        %s475 = scalar_lea.vmem %s0, %s474
        %s476 = smul.u32 2, %s29
      $region56: #{encoder_attn_forward.3} parent=51 // pred_fallthru
        _
      // Predicated region
      $region57: #{encoder_attn_forward.3} parent=51 // pred_check
        %p477 = pneg %p83
      $region58: #{encoder_attn_forward.3} parent=51 // pred_check_branch
        %479 = sbr.rel (%p477) target = $region60
      $region59: #{encoder_attn_forward.3} parent=51 // pred_region
        %s480 = smul.u32 16, %s29
        %p481 = scmp.lt.s32.totalorder %s28, 1
        %s482 = scalar_select %p481, %s28, 1
        %p483 = scmp.lt.s32.totalorder %s480, 31
        %s484 = scalar_select %p483, %s480, 31
        %s485 = smul.addr %s482, 32
        %s486 = sadd.s32 %s484, %s485
        %s487 = smul.addr %s486, 8
        %s488 = scalar_lea.vmem %s1, %s487
        %s489 = smul.u32 16, %s29
      $region60: #{encoder_attn_forward.3} parent=51 // pred_fallthru
        _
      // Predicated region
      $region61: #{encoder_attn_forward.3} parent=51 // pred_check
        %p490 = pneg %p111
      $region62: #{encoder_attn_forward.3} parent=51 // pred_check_branch
        %492 = sbr.rel (%p490) target = $region64
      $region63: #{encoder_attn_forward.3} parent=51 // pred_region
        %s493 = smul.u32 16, %s29
        %p494 = scmp.lt.s32.totalorder %s28, 1
        %s495 = scalar_select %p494, %s28, 1
        %p496 = scmp.lt.s32.totalorder %s493, 31
        %s497 = scalar_select %p496, %s493, 31
        %s498 = smul.addr %s495, 32
        %s499 = sadd.s32 %s497, %s498
        %s500 = smul.addr %s499, 8
        %s501 = scalar_lea.vmem %s2, %s500
        %s502 = smul.u32 16, %s29
      $region64: #{encoder_attn_forward.3} parent=51 // pred_fallthru
        _
      // Predicated region
      $region65: #{encoder_attn_forward.3} parent=51 // pred_check
        %p503 = pneg %p139
      $region66: #{encoder_attn_forward.3} parent=51 // pred_check_branch
        %505 = sbr.rel (%p503) target = $region68
      $region67: #{encoder_attn_forward.3} parent=51 // pred_region
        %s506 = smul.u32 16, %s29
        %p507 = scmp.lt.s32.totalorder %s28, 1
        %s508 = scalar_select %p507, %s28, 1
        %p509 = scmp.lt.s32.totalorder %s506, 31
        %s510 = scalar_select %p509, %s506, 31
        %s511 = smul.addr %s508, 32
        %s512 = sadd.s32 %s510, %s511
        %s513 = smul.addr %s512, 8
        %s514 = scalar_lea.vmem %s3, %s513
        %s515 = smul.u32 16, %s29
      $region68: #{encoder_attn_forward.3} parent=51 // pred_fallthru
        _
      // Predicated region
      $region69: #{encoder_attn_forward.3} parent=51 // pred_check
        %p516 = pneg %p167
      $region70: #{encoder_attn_forward.3} parent=51 // pred_check_branch
        %518 = sbr.rel (%p516) target = $region72
      $region71: #{encoder_attn_forward.3} parent=51 // pred_region
        %s519 = smul.u32 2, %s29
        %p520 = scmp.lt.s32.totalorder %s28, 1
        %s521 = scalar_select %p520, %s28, 1
        %p522 = scmp.lt.s32.totalorder %s519, 3
        %s523 = scalar_select %p522, %s519, 3
        %s524 = smul.addr %s521, 4
        %s525 = sadd.s32 %s523, %s524
        %s526 = smul.addr %s525, 8
        %s527 = scalar_lea.vmem %s4, %s526
        %s528 = smul.u32 2, %s29
      $region72: #{encoder_attn_forward.3} parent=51 // pred_fallthru
        _
      // Predicated region
      $region73: #{encoder_attn_forward.3} parent=51 // pred_check
        %p529 = pneg %p195
      $region74: #{encoder_attn_forward.3} parent=51 // pred_check_branch
        %531 = sbr.rel (%p529) target = $region76
      $region75: #{encoder_attn_forward.3} parent=51 // pred_region
        %s532 = smul.u32 2, %s29
        %p533 = scmp.lt.s32.totalorder %s28, 1
        %s534 = scalar_select %p533, %s28, 1
        %p535 = scmp.lt.s32.totalorder %s532, 3
        %s536 = scalar_select %p535, %s532, 3
        %s537 = smul.addr %s534, 4
        %s538 = sadd.s32 %s536, %s537
        %s539 = smul.addr %s538, 8
        %s540 = scalar_lea.vmem %s5, %s539
        %s541 = smul.u32 2, %s29
      $region76: #{encoder_attn_forward.3} parent=51 // pred_fallthru
        _
    $region52: #{encoder_attn_forward.3} parent=5 // pred_fallthru
      _
    %p542 = scmp.le.s32.totalorder 1, %s21
    %p543 = scmp.lt.s32.totalorder %s21, 5
    %p544 = pnand %p542, %p543
    %p545 = pneg %p544
    // Predicated region
    $region77: #{encoder_attn_forward.3} parent=5 // pred_check
      _
    $region78: #{encoder_attn_forward.3} parent=5 // pred_check_branch
      %547 = sbr.rel (%p544) target = $region80
    $region79: #{encoder_attn_forward.3} parent=5 // pred_region
      %s548 = ssub.s32 %s21, 1
      %s549 = smul.u32 2, %s31
      %p550 = scmp.lt.s32.totalorder %s30, 1
      %s551 = scalar_select %p550, %s30, 1
      %p552 = scmp.lt.s32.totalorder %s549, 3
      %s553 = scalar_select %p552, %s549, 3
      %s554 = smul.addr %s551, 4
      %s555 = sadd.s32 %s553, %s554
      %s556 = smul.addr %s555, 8
      %s557 = scalar_lea.vmem %s0, %s556
      %p558 = pneg %p61
      %p559 = pneg %p58
      %s560 = smul.u32 16, %s31
      %p561 = scmp.lt.s32.totalorder %s30, 1
      %s562 = scalar_select %p561, %s30, 1
      %p563 = scmp.lt.s32.totalorder %s560, 31
      %s564 = scalar_select %p563, %s560, 31
      %s565 = smul.addr %s562, 32
      %s566 = sadd.s32 %s564, %s565
      %s567 = smul.addr %s566, 8
      %s568 = scalar_lea.vmem %s1, %s567
      %p569 = pneg %p89
      %p570 = pneg %p86
      %s571 = smul.u32 16, %s31
      %p572 = scmp.lt.s32.totalorder %s30, 1
      %s573 = scalar_select %p572, %s30, 1
      %p574 = scmp.lt.s32.totalorder %s571, 31
      %s575 = scalar_select %p574, %s571, 31
      %s576 = smul.addr %s573, 32
      %s577 = sadd.s32 %s575, %s576
      %s578 = smul.addr %s577, 8
      %s579 = scalar_lea.vmem %s2, %s578
      %p580 = pneg %p117
      %p581 = pneg %p114
      %s582 = smul.u32 16, %s31
      %p583 = scmp.lt.s32.totalorder %s30, 1
      %s584 = scalar_select %p583, %s30, 1
      %p585 = scmp.lt.s32.totalorder %s582, 31
      %s586 = scalar_select %p585, %s582, 31
      %s587 = smul.addr %s584, 32
      %s588 = sadd.s32 %s586, %s587
      %s589 = smul.addr %s588, 8
      %s590 = scalar_lea.vmem %s3, %s589
      %p591 = pneg %p145
      %p592 = pneg %p142
      %s593 = smul.u32 2, %s31
      %p594 = scmp.lt.s32.totalorder %s30, 1
      %s595 = scalar_select %p594, %s30, 1
      %p596 = scmp.lt.s32.totalorder %s593, 3
      %s597 = scalar_select %p596, %s593, 3
      %s598 = smul.addr %s595, 4
      %s599 = sadd.s32 %s597, %s598
      %s600 = smul.addr %s599, 8
      %s601 = scalar_lea.vmem %s4, %s600
      %p602 = pneg %p173
      %p603 = pneg %p170
      %s604 = smul.u32 2, %s31
      %p605 = scmp.lt.s32.totalorder %s30, 1
      %s606 = scalar_select %p605, %s30, 1
      %p607 = scmp.lt.s32.totalorder %s604, 3
      %s608 = scalar_select %p607, %s604, 3
      %s609 = smul.addr %s606, 4
      %s610 = sadd.s32 %s608, %s609
      %s611 = smul.addr %s610, 8
      %s612 = scalar_lea.vmem %s5, %s611
      %p613 = pneg %p201
      %p614 = pneg %p198
      %p615 = pneg %p222
      %p616 = pneg %p219
      %p617 = pneg %p243
      %p618 = pneg %p240
      %p619 = pneg %p264
      %p620 = pneg %p261
      %p621 = pneg %p285
      %p622 = pneg %p282
      %p623 = pneg %p306
      %p624 = pneg %p303
      %p625 = pneg %p327
      %p626 = pneg %p324
      %p627 = pneg %p348
      %p628 = pneg %p345
      %p629 = pneg %p369
      %p630 = pneg %p366
      %p631 = pneg %p390
      %p632 = pneg %p387
      %p633 = pneg %p418
      %p634 = pneg %p415
      %s635 = smul.u32 2, %s31
      %p636 = scmp.lt.s32.totalorder %s30, 1
      %s637 = scalar_select %p636, %s30, 1
      %p638 = scmp.lt.s32.totalorder %s635, 3
      %s639 = scalar_select %p638, %s635, 3
      %s640 = smul.addr %s637, 4
      %s641 = sadd.s32 %s639, %s640
      %s642 = smul.addr %s641, 8
      %s643 = scalar_lea.vmem %s15, %s642
      %s644 = smul.u32 2, %s31
      %p645 = scmp.lt.s32.totalorder %s30, 1
      %s646 = scalar_select %p645, %s30, 1
      %p647 = scmp.lt.s32.totalorder %s644, 3
      %s648 = scalar_select %p647, %s644, 3
      %s649 = smul.addr %s646, 4
      %s650 = sadd.s32 %s648, %s649
      %s651 = smul.addr %s650, 8
      %s652 = scalar_lea.vmem %s0, %s651
      %s653 = smul.u32 2, %s31
      %s654 = smul.u32 16, %s31
      %p655 = scmp.lt.s32.totalorder %s30, 1
      %s656 = scalar_select %p655, %s30, 1
      %p657 = scmp.lt.s32.totalorder %s654, 31
      %s658 = scalar_select %p657, %s654, 31
      %s659 = smul.addr %s656, 32
      %s660 = sadd.s32 %s658, %s659
      %s661 = smul.addr %s660, 8
      %s662 = scalar_lea.vmem %s1, %s661
      %s663 = smul.u32 16, %s31
      %s664 = smul.u32 16, %s31
      %p665 = scmp.lt.s32.totalorder %s30, 1
      %s666 = scalar_select %p665, %s30, 1
      %p667 = scmp.lt.s32.totalorder %s664, 31
      %s668 = scalar_select %p667, %s664, 31
      %s669 = smul.addr %s666, 32
      %s670 = sadd.s32 %s668, %s669
      %s671 = smul.addr %s670, 8
      %s672 = scalar_lea.vmem %s2, %s671
      %s673 = smul.u32 16, %s31
      %s674 = smul.u32 16, %s31
      %p675 = scmp.lt.s32.totalorder %s30, 1
      %s676 = scalar_select %p675, %s30, 1
      %p677 = scmp.lt.s32.totalorder %s674, 31
      %s678 = scalar_select %p677, %s674, 31
      %s679 = smul.addr %s676, 32
      %s680 = sadd.s32 %s678, %s679
      %s681 = smul.addr %s680, 8
      %s682 = scalar_lea.vmem %s3, %s681
      %s683 = smul.u32 16, %s31
      %s684 = smul.u32 2, %s31
      %p685 = scmp.lt.s32.totalorder %s30, 1
      %s686 = scalar_select %p685, %s30, 1
      %p687 = scmp.lt.s32.totalorder %s684, 3
      %s688 = scalar_select %p687, %s684, 3
      %s689 = smul.addr %s686, 4
      %s690 = sadd.s32 %s688, %s689
      %s691 = smul.addr %s690, 8
      %s692 = scalar_lea.vmem %s4, %s691
      %s693 = smul.u32 2, %s31
      %s694 = smul.u32 2, %s31
      %p695 = scmp.lt.s32.totalorder %s30, 1
      %s696 = scalar_select %p695, %s30, 1
      %p697 = scmp.lt.s32.totalorder %s694, 3
      %s698 = scalar_select %p697, %s694, 3
      %s699 = smul.addr %s696, 4
      %s700 = sadd.s32 %s698, %s699
      %s701 = smul.addr %s700, 8
      %s702 = scalar_lea.vmem %s5, %s701
      %s703 = smul.u32 2, %s31
      %s704 = smul.u32 2, %s31
      %p705 = scmp.lt.s32.totalorder %s30, 1
      %s706 = scalar_select %p705, %s30, 1
      %p707 = scmp.lt.s32.totalorder %s704, 3
      %s708 = scalar_select %p707, %s704, 3
      %s709 = smul.addr %s706, 4
      %s710 = sadd.s32 %s708, %s709
      %s711 = smul.addr %s710, 8
      %s712 = scalar_lea.vmem %s15, %s711
      %s713 = smul.u32 2, %s31
      %v714 = vld [vmem:[%s682] sm:$0xff]
      %v715 = vld [vmem:[%s682 + $0x8] sm:$0xff]
      %v716 = vld [vmem:[%s682 + $0x10] sm:$0xff]
      %v717 = vld [vmem:[%s682 + $0x18] sm:$0xff]
      %v718 = vld [vmem:[%s682 + $0x20] sm:$0xff]
      %v719 = vld [vmem:[%s682 + $0x28] sm:$0xff]
      %v720 = vld [vmem:[%s682 + $0x30] sm:$0xff]
      %v721 = vld [vmem:[%s682 + $0x38] sm:$0xff]
      %v722 = vld [vmem:[%s682 + $0x40] sm:$0xff]
      %v723 = vld [vmem:[%s682 + $0x48] sm:$0xff]
      %v724 = vld [vmem:[%s682 + $0x50] sm:$0xff]
      %v725 = vld [vmem:[%s682 + $0x58] sm:$0xff]
      %v726 = vld [vmem:[%s682 + $0x60] sm:$0xff]
      %v727 = vld [vmem:[%s682 + $0x68] sm:$0xff]
      %v728 = vld [vmem:[%s682 + $0x70] sm:$0xff]
      %v729 = vld [vmem:[%s682 + $0x78] sm:$0xff]
      %v730 = vld [vmem:[%s692] sm:$0xff]
      %v731 = vld [vmem:[%s692 + $0x8] sm:$0xff]
      %v734 = vcombine.high %v730, %v730
      %v736 = vunpack.c.l.s4 1966171168
      %v737 = vunpack.c.0.s8 %v736
      %v738 = vlaneseq
      %v739 = vshrl.u32 %v738, 7
      %v740 = vsub.s32 %v737, %v739
      %v741 = vrot.slane %v730, %v740
      %v743 = vunpack.c.l.s4 1966171168
      %v744 = vunpack.c.0.s8 %v743
      %v745 = vlaneseq
      %v746 = vshrl.u32 %v745, 7
      %v747 = vsub.s32 %v744, %v746
      %v748 = vrot.slane %v734, %v747
      %v749 = vcombine.high %v741, %v741
      %v750 = vcombine.high %v748, %v748
      %v752 = vunpack.c.l.s4 1966171168
      %v753 = vunpack.c.0.s8 %v752
      %v754 = vlaneseq
      %v755 = vshrl.u32 %v754, 7
      %v756 = vsub.s32 %v753, %v755
      %v757 = vrot.slane %v741, %v756
      %v759 = vunpack.c.l.s4 1966171168
      %v760 = vunpack.c.0.s8 %v759
      %v761 = vlaneseq
      %v762 = vshrl.u32 %v761, 7
      %v763 = vsub.s32 %v760, %v762
      %v764 = vrot.slane %v748, %v763
      %v766 = vunpack.c.l.s4 1966171168
      %v767 = vunpack.c.0.s8 %v766
      %v768 = vlaneseq
      %v769 = vshrl.u32 %v768, 7
      %v770 = vsub.s32 %v767, %v769
      %v771 = vrot.slane %v749, %v770
      %v773 = vunpack.c.l.s4 1966171168
      %v774 = vunpack.c.0.s8 %v773
      %v775 = vlaneseq
      %v776 = vshrl.u32 %v775, 7
      %v777 = vsub.s32 %v774, %v776
      %v778 = vrot.slane %v750, %v777
      %v779 = vcombine.high %v757, %v757
      %v780 = vcombine.high %v764, %v764
      %v781 = vcombine.high %v771, %v771
      %v782 = vcombine.high %v778, %v778
      %v783 = vcombine.high %v731, %v731
      %v785 = vunpack.c.l.s4 1966171168
      %v786 = vunpack.c.0.s8 %v785
      %v787 = vlaneseq
      %v788 = vshrl.u32 %v787, 7
      %v789 = vsub.s32 %v786, %v788
      %v790 = vrot.slane %v731, %v789
      %v792 = vunpack.c.l.s4 1966171168
      %v793 = vunpack.c.0.s8 %v792
      %v794 = vlaneseq
      %v795 = vshrl.u32 %v794, 7
      %v796 = vsub.s32 %v793, %v795
      %v797 = vrot.slane %v783, %v796
      %v798 = vcombine.high %v790, %v790
      %v799 = vcombine.high %v797, %v797
      %v801 = vunpack.c.l.s4 1966171168
      %v802 = vunpack.c.0.s8 %v801
      %v803 = vlaneseq
      %v804 = vshrl.u32 %v803, 7
      %v805 = vsub.s32 %v802, %v804
      %v806 = vrot.slane %v790, %v805
      %v808 = vunpack.c.l.s4 1966171168
      %v809 = vunpack.c.0.s8 %v808
      %v810 = vlaneseq
      %v811 = vshrl.u32 %v810, 7
      %v812 = vsub.s32 %v809, %v811
      %v813 = vrot.slane %v797, %v812
      %v815 = vunpack.c.l.s4 1966171168
      %v816 = vunpack.c.0.s8 %v815
      %v817 = vlaneseq
      %v818 = vshrl.u32 %v817, 7
      %v819 = vsub.s32 %v816, %v818
      %v820 = vrot.slane %v798, %v819
      %v822 = vunpack.c.l.s4 1966171168
      %v823 = vunpack.c.0.s8 %v822
      %v824 = vlaneseq
      %v825 = vshrl.u32 %v824, 7
      %v826 = vsub.s32 %v823, %v825
      %v827 = vrot.slane %v799, %v826
      %v828 = vcombine.high %v806, %v806
      %v829 = vcombine.high %v813, %v813
      %v830 = vcombine.high %v820, %v820
      %v831 = vcombine.high %v827, %v827
      %v832 = vlaneseq
      %v833 = vshrl.u32 %v832, 7
      %v834 = vsub.s32 0, %v833
      %v835 = vrot.slane %v757, %v834
      %v836 = vlaneseq
      %v837 = vshrl.u32 %v836, 7
      %v838 = vsub.s32 0, %v837
      %v839 = vrot.slane %v771, %v838
      %v840 = vlaneseq
      %v841 = vshrl.u32 %v840, 7
      %v842 = vsub.s32 0, %v841
      %v843 = vrot.slane %v779, %v842
      %v844 = vlaneseq
      %v845 = vshrl.u32 %v844, 7
      %v846 = vsub.s32 0, %v845
      %v847 = vrot.slane %v781, %v846
      %v848 = vlaneseq
      %v849 = vshrl.u32 %v848, 7
      %v850 = vsub.s32 0, %v849
      %v851 = vrot.slane %v764, %v850
      %v852 = vlaneseq
      %v853 = vshrl.u32 %v852, 7
      %v854 = vsub.s32 0, %v853
      %v855 = vrot.slane %v778, %v854
      %v856 = vlaneseq
      %v857 = vshrl.u32 %v856, 7
      %v858 = vsub.s32 0, %v857
      %v859 = vrot.slane %v780, %v858
      %v860 = vlaneseq
      %v861 = vshrl.u32 %v860, 7
      %v862 = vsub.s32 0, %v861
      %v863 = vrot.slane %v782, %v862
      %v864 = vlaneseq
      %v865 = vshrl.u32 %v864, 7
      %v866 = vsub.s32 0, %v865
      %v867 = vrot.slane %v806, %v866
      %v868 = vlaneseq
      %v869 = vshrl.u32 %v868, 7
      %v870 = vsub.s32 0, %v869
      %v871 = vrot.slane %v820, %v870
      %v872 = vlaneseq
      %v873 = vshrl.u32 %v872, 7
      %v874 = vsub.s32 0, %v873
      %v875 = vrot.slane %v828, %v874
      %v876 = vlaneseq
      %v877 = vshrl.u32 %v876, 7
      %v878 = vsub.s32 0, %v877
      %v879 = vrot.slane %v830, %v878
      %v880 = vlaneseq
      %v881 = vshrl.u32 %v880, 7
      %v882 = vsub.s32 0, %v881
      %v883 = vrot.slane %v813, %v882
      %v884 = vlaneseq
      %v885 = vshrl.u32 %v884, 7
      %v886 = vsub.s32 0, %v885
      %v887 = vrot.slane %v827, %v886
      %v888 = vlaneseq
      %v889 = vshrl.u32 %v888, 7
      %v890 = vsub.s32 0, %v889
      %v891 = vrot.slane %v829, %v890
      %v892 = vlaneseq
      %v893 = vshrl.u32 %v892, 7
      %v894 = vsub.s32 0, %v893
      %v895 = vrot.slane %v831, %v894
      %v912 = vsub.f32 %v714, %v835
      %v913 = vsub.f32 %v715, %v839
      %v914 = vsub.f32 %v716, %v843
      %v915 = vsub.f32 %v717, %v847
      %v916 = vsub.f32 %v718, %v851
      %v917 = vsub.f32 %v719, %v855
      %v918 = vsub.f32 %v720, %v859
      %v919 = vsub.f32 %v721, %v863
      %v920 = vsub.f32 %v722, %v867
      %v921 = vsub.f32 %v723, %v871
      %v922 = vsub.f32 %v724, %v875
      %v923 = vsub.f32 %v725, %v879
      %v924 = vsub.f32 %v726, %v883
      %v925 = vsub.f32 %v727, %v887
      %v926 = vsub.f32 %v728, %v891
      %v927 = vsub.f32 %v729, %v895
      %v928 = vld [vmem:[%s6] sm:$0x1]
      %v930 = vlaneseq
      %v931 = vshrl.u32 %v930, 7
      %v932 = vsub.s32 0, %v931
      %v933 = vrot.slane %v928, %v932
      %v935 = vadd.f32 %v912, %v933
      %v936 = vadd.f32 %v913, %v933
      %v937 = vadd.f32 %v914, %v933
      %v938 = vadd.f32 %v915, %v933
      %v939 = vadd.f32 %v916, %v933
      %v940 = vadd.f32 %v917, %v933
      %v941 = vadd.f32 %v918, %v933
      %v942 = vadd.f32 %v919, %v933
      %v943 = vadd.f32 %v920, %v933
      %v944 = vadd.f32 %v921, %v933
      %v945 = vadd.f32 %v922, %v933
      %v946 = vadd.f32 %v923, %v933
      %v947 = vadd.f32 %v924, %v933
      %v948 = vadd.f32 %v925, %v933
      %v949 = vadd.f32 %v926, %v933
      %v950 = vadd.f32 %v927, %v933
      %v951 = vmax.f32 %v935, 0.0
      %v952 = vmax.f32 %v936, 0.0
      %v953 = vmax.f32 %v937, 0.0
      %v954 = vmax.f32 %v938, 0.0
      %v955 = vmax.f32 %v939, 0.0
      %v956 = vmax.f32 %v940, 0.0
      %v957 = vmax.f32 %v941, 0.0
      %v958 = vmax.f32 %v942, 0.0
      %v959 = vmax.f32 %v943, 0.0
      %v960 = vmax.f32 %v944, 0.0
      %v961 = vmax.f32 %v945, 0.0
      %v962 = vmax.f32 %v946, 0.0
      %v963 = vmax.f32 %v947, 0.0
      %v964 = vmax.f32 %v948, 0.0
      %v965 = vmax.f32 %v949, 0.0
      %v966 = vmax.f32 %v950, 0.0
      %v967 = vld [vmem:[%s7] sm:$0xff]
      %v968 = vld [vmem:[%s7 + $0x8] sm:$0xff]
      %v969 = vld [vmem:[%s8] sm:$0x1]
      %v971 = vlaneseq
      %v972 = vshrl.u32 %v971, 7
      %v973 = vsub.s32 0, %v972
      %v974 = vrot.slane %v969, %v973
      %vm976 = vcmask 130048
      %v978 = vsel %vm976, %v951, 0
      %v981 = vsel %vm976, %v952, 0
      %v984 = vsel %vm976, %v953, 0
      %v987 = vsel %vm976, %v954, 0
      %v990 = vsel %vm976, %v955, 0
      %v993 = vsel %vm976, %v956, 0
      %v996 = vsel %vm976, %v957, 0
      %v999 = vsel %vm976, %v958, 0
      %v1002 = vsel %vm976, %v959, 0
      %v1005 = vsel %vm976, %v960, 0
      %v1008 = vsel %vm976, %v961, 0
      %v1011 = vsel %vm976, %v962, 0
      %v1014 = vsel %vm976, %v963, 0
      %v1017 = vsel %vm976, %v964, 0
      %v1020 = vsel %vm976, %v965, 0
      %v1023 = vsel %vm976, %v966, 0
      %1025 = vmatprep.subr.mxu0 0.0
      %1026 = vmatpush1.msra.mxu0 %v967
      %1027 = vmatprep.subr.mxu0 0.0
      %1028 = vmatpush1.msra.mxu0 %v968
      %1029 = vmatprep.subr.mxu0 0.0
      %1030 = vmatpush1.msra.mxu0 0.0
      %1031 = vmatprep.subr.mxu0 0.0
      %1032 = vmatpush1.msra.mxu0 0.0
      %1033 = vmatprep.subr.mxu0 0.0
      %1034 = vmatpush1.msra.mxu0 0.0
      %1035 = vmatprep.subr.mxu0 0.0
      %1036 = vmatpush1.msra.mxu0 0.0
      %1037 = vmatprep.subr.mxu0 0.0
      %1038 = vmatpush1.msra.mxu0 0.0
      %1039 = vmatprep.subr.mxu0 0.0
      %1040 = vmatpush1.msra.mxu0 0.0
      %1041 = vmatprep.subr.mxu0 0.0
      %1042 = vmatpush1.msra.mxu0 0.0
      %1043 = vmatprep.subr.mxu0 0.0
      %1044 = vmatpush1.msra.mxu0 0.0
      %1045 = vmatprep.subr.mxu0 0.0
      %1046 = vmatpush1.msra.mxu0 0.0
      %1047 = vmatprep.subr.mxu0 0.0
      %1048 = vmatpush1.msra.mxu0 0.0
      %1049 = vmatprep.subr.mxu0 0.0
      %1050 = vmatpush1.msra.mxu0 0.0
      %1051 = vmatprep.subr.mxu0 0.0
      %1052 = vmatpush1.msra.mxu0 0.0
      %1053 = vmatprep.subr.mxu0 0.0
      %1054 = vmatpush1.msra.mxu0 0.0
      %1055 = vmatprep.subr.mxu0 0.0
      %1056 = vmatpush1.msra.mxu0 0.0
      %1057 = vmatprep.subr.mxu0 0.0
      %1058 = vmatpush1.msra.mxu0 0.0
      %1059 = vmatprep.subr.mxu0 0.0
      %1060 = vmatpush1.msra.mxu0 0.0
      %1061 = vmatprep.subr.mxu0 0.0
      %1062 = vmatpush1.msra.mxu0 0.0
      %1063 = vmatprep.subr.mxu0 0.0
      %1064 = vmatpush1.msra.mxu0 0.0
      %1065 = vmatprep.subr.mxu0 0.0
      %1066 = vmatpush1.msra.mxu0 0.0
      %1067 = vmatprep.subr.mxu0 0.0
      %1068 = vmatpush1.msra.mxu0 0.0
      %1069 = vmatprep.subr.mxu0 0.0
      %1070 = vmatpush1.msra.mxu0 0.0
      %1071 = vmatprep.subr.mxu0 0.0
      %1072 = vmatpush1.msra.mxu0 0.0
      %1073 = vmatprep.subr.mxu0 0.0
      %1074 = vmatpush1.msra.mxu0 0.0
      %1075 = vmatprep.subr.mxu0 0.0
      %1076 = vmatpush1.msra.mxu0 0.0
      %1077 = vmatprep.subr.mxu0 0.0
      %1078 = vmatpush1.msra.mxu0 0.0
      %1079 = vmatprep.subr.mxu0 0.0
      %1080 = vmatpush1.msra.mxu0 0.0
      %1081 = vmatprep.subr.mxu0 0.0
      %1082 = vmatpush1.msra.mxu0 0.0
      %1083 = vmatprep.subr.mxu0 0.0
      %1084 = vmatpush1.msra.mxu0 0.0
      %1085 = vmatprep.subr.mxu0 0.0
      %1086 = vmatpush1.msra.mxu0 0.0
      %1087 = vmatprep.subr.mxu0 0.0
      %1088 = vmatpush1.msra.mxu0 0.0
      %1089 = vmatprep.mubr.f32.mxu0 0.0
      %1090 = vmatmul.mubr.f32.gmra.mrb[0].mxu0 %v978
      %v1091 = vpop.f32.mrb[0].mxu0
      %v1092 = vadd.f32 %v974, %v1091
      %v1093 = vpop.f32.mrb[0].mxu0
      %1094 = vmatprep.mubr.f32.mxu0 0.0
      %1095 = vmatmul.mubr.f32.gmra.mrb[0].mxu0 %v981
      %v1096 = vpop.f32.mrb[0].mxu0
      %v1097 = vadd.f32 %v974, %v1096
      %v1098 = vpop.f32.mrb[0].mxu0
      %1099 = vmatprep.mubr.f32.mxu0 0.0
      %1100 = vmatmul.mubr.f32.gmra.mrb[0].mxu0 %v984
      %v1101 = vpop.f32.mrb[0].mxu0
      %v1102 = vadd.f32 %v974, %v1101
      %v1103 = vpop.f32.mrb[0].mxu0
      %1104 = vmatprep.mubr.f32.mxu0 0.0
      %1105 = vmatmul.mubr.f32.gmra.mrb[0].mxu0 %v987
      %v1106 = vpop.f32.mrb[0].mxu0
      %v1107 = vadd.f32 %v974, %v1106
      %v1108 = vpop.f32.mrb[0].mxu0
      %1109 = vmatprep.mubr.f32.mxu0 0.0
      %1110 = vmatmul.mubr.f32.gmra.mrb[0].mxu0 %v990
      %v1111 = vpop.f32.mrb[0].mxu0
      %v1112 = vadd.f32 %v974, %v1111
      %v1113 = vpop.f32.mrb[0].mxu0
      %1114 = vmatprep.mubr.f32.mxu0 0.0
      %1115 = vmatmul.mubr.f32.gmra.mrb[0].mxu0 %v993
      %v1116 = vpop.f32.mrb[0].mxu0
      %v1117 = vadd.f32 %v974, %v1116
      %v1118 = vpop.f32.mrb[0].mxu0
      %1119 = vmatprep.mubr.f32.mxu0 0.0
      %1120 = vmatmul.mubr.f32.gmra.mrb[0].mxu0 %v996
      %v1121 = vpop.f32.mrb[0].mxu0
      %v1122 = vadd.f32 %v974, %v1121
      %v1123 = vpop.f32.mrb[0].mxu0
      %1124 = vmatprep.mubr.f32.mxu0 0.0
      %1125 = vmatmul.mubr.f32.gmra.mrb[0].mxu0 %v999
      %v1126 = vpop.f32.mrb[0].mxu0
      %v1127 = vadd.f32 %v974, %v1126
      %v1128 = vpop.f32.mrb[0].mxu0
      %1129 = vmatprep.mubr.f32.mxu0 0.0
      %1130 = vmatmul.mubr.f32.gmra.mrb[0].mxu0 %v1002
      %v1131 = vpop.f32.mrb[0].mxu0
      %v1132 = vadd.f32 %v974, %v1131
      %v1133 = vpop.f32.mrb[0].mxu0
      %1134 = vmatprep.mubr.f32.mxu0 0.0
      %1135 = vmatmul.mubr.f32.gmra.mrb[0].mxu0 %v1005
      %v1136 = vpop.f32.mrb[0].mxu0
      %v1137 = vadd.f32 %v974, %v1136
      %v1138 = vpop.f32.mrb[0].mxu0
      %1139 = vmatprep.mubr.f32.mxu0 0.0
      %1140 = vmatmul.mubr.f32.gmra.mrb[0].mxu0 %v1008
      %v1141 = vpop.f32.mrb[0].mxu0
      %v1142 = vadd.f32 %v974, %v1141
      %v1143 = vpop.f32.mrb[0].mxu0
      %1144 = vmatprep.mubr.f32.mxu0 0.0
      %1145 = vmatmul.mubr.f32.gmra.mrb[0].mxu0 %v1011
      %v1146 = vpop.f32.mrb[0].mxu0
      %v1147 = vadd.f32 %v974, %v1146
      %v1148 = vpop.f32.mrb[0].mxu0
      %1149 = vmatprep.mubr.f32.mxu0 0.0
      %1150 = vmatmul.mubr.f32.gmra.mrb[0].mxu0 %v1014
      %v1151 = vpop.f32.mrb[0].mxu0
      %v1152 = vadd.f32 %v974, %v1151
      %v1153 = vpop.f32.mrb[0].mxu0
      %1154 = vmatprep.mubr.f32.mxu0 0.0
      %1155 = vmatmul.mubr.f32.gmra.mrb[0].mxu0 %v1017
      %v1156 = vpop.f32.mrb[0].mxu0
      %v1157 = vadd.f32 %v974, %v1156
      %v1158 = vpop.f32.mrb[0].mxu0
      %1159 = vmatprep.mubr.f32.mxu0 0.0
      %1160 = vmatmul.mubr.f32.gmra.mrb[0].mxu0 %v1020
      %v1161 = vpop.f32.mrb[0].mxu0
      %v1162 = vadd.f32 %v974, %v1161
      %v1163 = vpop.f32.mrb[0].mxu0
      %1164 = vmatprep.mubr.f32.mxu0 0.0
      %1165 = vmatmul.mubr.f32.gmra.mrb[0].mxu0 %v1023
      %v1166 = vpop.f32.mrb[0].mxu0
      %v1167 = vadd.f32 %v974, %v1166
      %v1168 = vpop.f32.mrb[0].mxu0
      %1169 = vdwg.mxu0
      %v1170 = vld [vmem:[%s652] sm:$0xff]
      %v1171 = vld [vmem:[%s652 + $0x8] sm:$0xff]
      %v1172 = vld [vmem:[%s662] sm:$0xff]
      %v1173 = vld [vmem:[%s662 + $0x8] sm:$0xff]
      %v1174 = vld [vmem:[%s662 + $0x10] sm:$0xff]
      %v1175 = vld [vmem:[%s662 + $0x18] sm:$0xff]
      %v1176 = vld [vmem:[%s662 + $0x20] sm:$0xff]
      %v1177 = vld [vmem:[%s662 + $0x28] sm:$0xff]
      %v1178 = vld [vmem:[%s662 + $0x30] sm:$0xff]
      %v1179 = vld [vmem:[%s662 + $0x38] sm:$0xff]
      %v1180 = vld [vmem:[%s662 + $0x40] sm:$0xff]
      %v1181 = vld [vmem:[%s662 + $0x48] sm:$0xff]
      %v1182 = vld [vmem:[%s662 + $0x50] sm:$0xff]
      %v1183 = vld [vmem:[%s662 + $0x58] sm:$0xff]
      %v1184 = vld [vmem:[%s662 + $0x60] sm:$0xff]
      %v1185 = vld [vmem:[%s662 + $0x68] sm:$0xff]
      %v1186 = vld [vmem:[%s662 + $0x70] sm:$0xff]
      %v1187 = vld [vmem:[%s662 + $0x78] sm:$0xff]
      %v1190 = vcombine.high %v1170, %v1170
      %v1192 = vunpack.c.l.s4 1966171168
      %v1193 = vunpack.c.0.s8 %v1192
      %v1194 = vlaneseq
      %v1195 = vshrl.u32 %v1194, 7
      %v1196 = vsub.s32 %v1193, %v1195
      %v1197 = vrot.slane %v1170, %v1196
      %v1199 = vunpack.c.l.s4 1966171168
      %v1200 = vunpack.c.0.s8 %v1199
      %v1201 = vlaneseq
      %v1202 = vshrl.u32 %v1201, 7
      %v1203 = vsub.s32 %v1200, %v1202
      %v1204 = vrot.slane %v1190, %v1203
      %v1205 = vcombine.high %v1197, %v1197
      %v1206 = vcombine.high %v1204, %v1204
      %v1208 = vunpack.c.l.s4 1966171168
      %v1209 = vunpack.c.0.s8 %v1208
      %v1210 = vlaneseq
      %v1211 = vshrl.u32 %v1210, 7
      %v1212 = vsub.s32 %v1209, %v1211
      %v1213 = vrot.slane %v1197, %v1212
      %v1215 = vunpack.c.l.s4 1966171168
      %v1216 = vunpack.c.0.s8 %v1215
      %v1217 = vlaneseq
      %v1218 = vshrl.u32 %v1217, 7
      %v1219 = vsub.s32 %v1216, %v1218
      %v1220 = vrot.slane %v1204, %v1219
      %v1222 = vunpack.c.l.s4 1966171168
      %v1223 = vunpack.c.0.s8 %v1222
      %v1224 = vlaneseq
      %v1225 = vshrl.u32 %v1224, 7
      %v1226 = vsub.s32 %v1223, %v1225
      %v1227 = vrot.slane %v1205, %v1226
      %v1229 = vunpack.c.l.s4 1966171168
      %v1230 = vunpack.c.0.s8 %v1229
      %v1231 = vlaneseq
      %v1232 = vshrl.u32 %v1231, 7
      %v1233 = vsub.s32 %v1230, %v1232
      %v1234 = vrot.slane %v1206, %v1233
      %v1235 = vcombine.high %v1213, %v1213
      %v1236 = vcombine.high %v1220, %v1220
      %v1237 = vcombine.high %v1227, %v1227
      %v1238 = vcombine.high %v1234, %v1234
      %v1239 = vcombine.high %v1171, %v1171
      %v1241 = vunpack.c.l.s4 1966171168
      %v1242 = vunpack.c.0.s8 %v1241
      %v1243 = vlaneseq
      %v1244 = vshrl.u32 %v1243, 7
      %v1245 = vsub.s32 %v1242, %v1244
      %v1246 = vrot.slane %v1171, %v1245
      %v1248 = vunpack.c.l.s4 1966171168
      %v1249 = vunpack.c.0.s8 %v1248
      %v1250 = vlaneseq
      %v1251 = vshrl.u32 %v1250, 7
      %v1252 = vsub.s32 %v1249, %v1251
      %v1253 = vrot.slane %v1239, %v1252
      %v1254 = vcombine.high %v1246, %v1246
      %v1255 = vcombine.high %v1253, %v1253
      %v1257 = vunpack.c.l.s4 1966171168
      %v1258 = vunpack.c.0.s8 %v1257
      %v1259 = vlaneseq
      %v1260 = vshrl.u32 %v1259, 7
      %v1261 = vsub.s32 %v1258, %v1260
      %v1262 = vrot.slane %v1246, %v1261
      %v1264 = vunpack.c.l.s4 1966171168
      %v1265 = vunpack.c.0.s8 %v1264
      %v1266 = vlaneseq
      %v1267 = vshrl.u32 %v1266, 7
      %v1268 = vsub.s32 %v1265, %v1267
      %v1269 = vrot.slane %v1253, %v1268
      %v1271 = vunpack.c.l.s4 1966171168
      %v1272 = vunpack.c.0.s8 %v1271
      %v1273 = vlaneseq
      %v1274 = vshrl.u32 %v1273, 7
      %v1275 = vsub.s32 %v1272, %v1274
      %v1276 = vrot.slane %v1254, %v1275
      %v1278 = vunpack.c.l.s4 1966171168
      %v1279 = vunpack.c.0.s8 %v1278
      %v1280 = vlaneseq
      %v1281 = vshrl.u32 %v1280, 7
      %v1282 = vsub.s32 %v1279, %v1281
      %v1283 = vrot.slane %v1255, %v1282
      %v1284 = vcombine.high %v1262, %v1262
      %v1285 = vcombine.high %v1269, %v1269
      %v1286 = vcombine.high %v1276, %v1276
      %v1287 = vcombine.high %v1283, %v1283
      %v1288 = vlaneseq
      %v1289 = vshrl.u32 %v1288, 7
      %v1290 = vsub.s32 0, %v1289
      %v1291 = vrot.slane %v1213, %v1290
      %v1292 = vlaneseq
      %v1293 = vshrl.u32 %v1292, 7
      %v1294 = vsub.s32 0, %v1293
      %v1295 = vrot.slane %v1227, %v1294
      %v1296 = vlaneseq
      %v1297 = vshrl.u32 %v1296, 7
      %v1298 = vsub.s32 0, %v1297
      %v1299 = vrot.slane %v1235, %v1298
      %v1300 = vlaneseq
      %v1301 = vshrl.u32 %v1300, 7
      %v1302 = vsub.s32 0, %v1301
      %v1303 = vrot.slane %v1237, %v1302
      %v1304 = vlaneseq
      %v1305 = vshrl.u32 %v1304, 7
      %v1306 = vsub.s32 0, %v1305
      %v1307 = vrot.slane %v1220, %v1306
      %v1308 = vlaneseq
      %v1309 = vshrl.u32 %v1308, 7
      %v1310 = vsub.s32 0, %v1309
      %v1311 = vrot.slane %v1234, %v1310
      %v1312 = vlaneseq
      %v1313 = vshrl.u32 %v1312, 7
      %v1314 = vsub.s32 0, %v1313
      %v1315 = vrot.slane %v1236, %v1314
      %v1316 = vlaneseq
      %v1317 = vshrl.u32 %v1316, 7
      %v1318 = vsub.s32 0, %v1317
      %v1319 = vrot.slane %v1238, %v1318
      %v1320 = vlaneseq
      %v1321 = vshrl.u32 %v1320, 7
      %v1322 = vsub.s32 0, %v1321
      %v1323 = vrot.slane %v1262, %v1322
      %v1324 = vlaneseq
      %v1325 = vshrl.u32 %v1324, 7
      %v1326 = vsub.s32 0, %v1325
      %v1327 = vrot.slane %v1276, %v1326
      %v1328 = vlaneseq
      %v1329 = vshrl.u32 %v1328, 7
      %v1330 = vsub.s32 0, %v1329
      %v1331 = vrot.slane %v1284, %v1330
      %v1332 = vlaneseq
      %v1333 = vshrl.u32 %v1332, 7
      %v1334 = vsub.s32 0, %v1333
      %v1335 = vrot.slane %v1286, %v1334
      %v1336 = vlaneseq
      %v1337 = vshrl.u32 %v1336, 7
      %v1338 = vsub.s32 0, %v1337
      %v1339 = vrot.slane %v1269, %v1338
      %v1340 = vlaneseq
      %v1341 = vshrl.u32 %v1340, 7
      %v1342 = vsub.s32 0, %v1341
      %v1343 = vrot.slane %v1283, %v1342
      %v1344 = vlaneseq
      %v1345 = vshrl.u32 %v1344, 7
      %v1346 = vsub.s32 0, %v1345
      %v1347 = vrot.slane %v1285, %v1346
      %v1348 = vlaneseq
      %v1349 = vshrl.u32 %v1348, 7
      %v1350 = vsub.s32 0, %v1349
      %v1351 = vrot.slane %v1287, %v1350
      %v1368 = vsub.f32 %v1172, %v1291
      %v1369 = vsub.f32 %v1173, %v1295
      %v1370 = vsub.f32 %v1174, %v1299
      %v1371 = vsub.f32 %v1175, %v1303
      %v1372 = vsub.f32 %v1176, %v1307
      %v1373 = vsub.f32 %v1177, %v1311
      %v1374 = vsub.f32 %v1178, %v1315
      %v1375 = vsub.f32 %v1179, %v1319
      %v1376 = vsub.f32 %v1180, %v1323
      %v1377 = vsub.f32 %v1181, %v1327
      %v1378 = vsub.f32 %v1182, %v1331
      %v1379 = vsub.f32 %v1183, %v1335
      %v1380 = vsub.f32 %v1184, %v1339
      %v1381 = vsub.f32 %v1185, %v1343
      %v1382 = vsub.f32 %v1186, %v1347
      %v1383 = vsub.f32 %v1187, %v1351
      %v1384 = vadd.f32 %v1368, %v1092
      %v1385 = vadd.f32 %v1369, %v1097
      %v1386 = vadd.f32 %v1370, %v1102
      %v1387 = vadd.f32 %v1371, %v1107
      %v1388 = vadd.f32 %v1372, %v1112
      %v1389 = vadd.f32 %v1373, %v1117
      %v1390 = vadd.f32 %v1374, %v1122
      %v1391 = vadd.f32 %v1375, %v1127
      %v1392 = vadd.f32 %v1376, %v1132
      %v1393 = vadd.f32 %v1377, %v1137
      %v1394 = vadd.f32 %v1378, %v1142
      %v1395 = vadd.f32 %v1379, %v1147
      %v1396 = vadd.f32 %v1380, %v1152
      %v1397 = vadd.f32 %v1381, %v1157
      %v1398 = vadd.f32 %v1382, %v1162
      %v1399 = vadd.f32 %v1383, %v1167
      %v1400 = vld [vmem:[%s9] sm:$0xff]
      %v1401 = vld [vmem:[%s9 + $0x8] sm:$0xff]
      %v1402 = vld [vmem:[%s9 + $0x10] sm:$0xff]
      %v1403 = vld [vmem:[%s9 + $0x18] sm:$0xff]
      %v1404 = vld [vmem:[%s10] sm:$0x1]
      %v1406 = vlaneseq
      %v1407 = vshrl.u32 %v1406, 7
      %v1408 = vsub.s32 0, %v1407
      %v1409 = vrot.slane %v1404, %v1408
      %vm1411 = vcmask 261120
      %v1413 = vsel %vm1411, %v1384, 0
      %v1416 = vsel %vm1411, %v1385, 0
      %v1419 = vsel %vm1411, %v1386, 0
      %v1422 = vsel %vm1411, %v1387, 0
      %v1425 = vsel %vm1411, %v1388, 0
      %v1428 = vsel %vm1411, %v1389, 0
      %v1431 = vsel %vm1411, %v1390, 0
      %v1434 = vsel %vm1411, %v1391, 0
      %v1437 = vsel %vm1411, %v1392, 0
      %v1440 = vsel %vm1411, %v1393, 0
      %v1443 = vsel %vm1411, %v1394, 0
      %v1446 = vsel %vm1411, %v1395, 0
      %v1449 = vsel %vm1411, %v1396, 0
      %v1452 = vsel %vm1411, %v1397, 0
      %v1455 = vsel %vm1411, %v1398, 0
      %v1458 = vsel %vm1411, %v1399, 0
      %1460 = vmatprep.subr.mxu0 0.0
      %1461 = vmatpush1.msra.mxu0 %v1400
      %1462 = vmatprep.subr.mxu0 0.0
      %1463 = vmatpush1.msra.mxu0 %v1401
      %1464 = vmatprep.subr.mxu0 0.0
      %1465 = vmatpush1.msra.mxu0 %v1402
      %1466 = vmatprep.subr.mxu0 0.0
      %1467 = vmatpush1.msra.mxu0 %v1403
      %1468 = vmatprep.subr.mxu0 0.0
      %1469 = vmatpush1.msra.mxu0 0.0
      %1470 = vmatprep.subr.mxu0 0.0
      %1471 = vmatpush1.msra.mxu0 0.0
      %1472 = vmatprep.subr.mxu0 0.0
      %1473 = vmatpush1.msra.mxu0 0.0
      %1474 = vmatprep.subr.mxu0 0.0
      %1475 = vmatpush1.msra.mxu0 0.0
      %1476 = vmatprep.subr.mxu0 0.0
      %1477 = vmatpush1.msra.mxu0 0.0
      %1478 = vmatprep.subr.mxu0 0.0
      %1479 = vmatpush1.msra.mxu0 0.0
      %1480 = vmatprep.subr.mxu0 0.0
      %1481 = vmatpush1.msra.mxu0 0.0
      %1482 = vmatprep.subr.mxu0 0.0
      %1483 = vmatpush1.msra.mxu0 0.0
      %1484 = vmatprep.subr.mxu0 0.0
      %1485 = vmatpush1.msra.mxu0 0.0
      %1486 = vmatprep.subr.mxu0 0.0
      %1487 = vmatpush1.msra.mxu0 0.0
      %1488 = vmatprep.subr.mxu0 0.0
      %1489 = vmatpush1.msra.mxu0 0.0
      %1490 = vmatprep.subr.mxu0 0.0
      %1491 = vmatpush1.msra.mxu0 0.0
      %1492 = vmatprep.subr.mxu0 0.0
      %1493 = vmatpush1.msra.mxu0 0.0
      %1494 = vmatprep.subr.mxu0 0.0
      %1495 = vmatpush1.msra.mxu0 0.0
      %1496 = vmatprep.subr.mxu0 0.0
      %1497 = vmatpush1.msra.mxu0 0.0
      %1498 = vmatprep.subr.mxu0 0.0
      %1499 = vmatpush1.msra.mxu0 0.0
      %1500 = vmatprep.subr.mxu0 0.0
      %1501 = vmatpush1.msra.mxu0 0.0
      %1502 = vmatprep.subr.mxu0 0.0
      %1503 = vmatpush1.msra.mxu0 0.0
      %1504 = vmatprep.subr.mxu0 0.0
      %1505 = vmatpush1.msra.mxu0 0.0
      %1506 = vmatprep.subr.mxu0 0.0
      %1507 = vmatpush1.msra.mxu0 0.0
      %1508 = vmatprep.subr.mxu0 0.0
      %1509 = vmatpush1.msra.mxu0 0.0
      %1510 = vmatprep.subr.mxu0 0.0
      %1511 = vmatpush1.msra.mxu0 0.0
      %1512 = vmatprep.subr.mxu0 0.0
      %1513 = vmatpush1.msra.mxu0 0.0
      %1514 = vmatprep.subr.mxu0 0.0
      %1515 = vmatpush1.msra.mxu0 0.0
      %1516 = vmatprep.subr.mxu0 0.0
      %1517 = vmatpush1.msra.mxu0 0.0
      %1518 = vmatprep.subr.mxu0 0.0
      %1519 = vmatpush1.msra.mxu0 0.0
      %1520 = vmatprep.subr.mxu0 0.0
      %1521 = vmatpush1.msra.mxu0 0.0
      %1522 = vmatprep.subr.mxu0 0.0
      %1523 = vmatpush1.msra.mxu0 0.0
      %1524 = vmatprep.mubr.f32.mxu0 0.0
      %1525 = vmatmul.mubr.f32.gmra.mrb[0].mxu0 %v1413
      %v1526 = vpop.f32.mrb[0].mxu0
      %v1527 = vadd.f32 %v1409, %v1526
      %v1528 = vpop.f32.mrb[0].mxu0
      %1529 = vmatprep.mubr.f32.mxu0 0.0
      %1530 = vmatmul.mubr.f32.gmra.mrb[0].mxu0 %v1416
      %v1531 = vpop.f32.mrb[0].mxu0
      %v1532 = vadd.f32 %v1409, %v1531
      %v1533 = vpop.f32.mrb[0].mxu0
      %1534 = vmatprep.mubr.f32.mxu0 0.0
      %1535 = vmatmul.mubr.f32.gmra.mrb[0].mxu0 %v1419
      %v1536 = vpop.f32.mrb[0].mxu0
      %v1537 = vadd.f32 %v1409, %v1536
      %v1538 = vpop.f32.mrb[0].mxu0
      %1539 = vmatprep.mubr.f32.mxu0 0.0
      %1540 = vmatmul.mubr.f32.gmra.mrb[0].mxu0 %v1422
      %v1541 = vpop.f32.mrb[0].mxu0
      %v1542 = vadd.f32 %v1409, %v1541
      %v1543 = vpop.f32.mrb[0].mxu0
      %1544 = vmatprep.mubr.f32.mxu0 0.0
      %1545 = vmatmul.mubr.f32.gmra.mrb[0].mxu0 %v1425
      %v1546 = vpop.f32.mrb[0].mxu0
      %v1547 = vadd.f32 %v1409, %v1546
      %v1548 = vpop.f32.mrb[0].mxu0
      %1549 = vmatprep.mubr.f32.mxu0 0.0
      %1550 = vmatmul.mubr.f32.gmra.mrb[0].mxu0 %v1428
      %v1551 = vpop.f32.mrb[0].mxu0
      %v1552 = vadd.f32 %v1409, %v1551
      %v1553 = vpop.f32.mrb[0].mxu0
      %1554 = vmatprep.mubr.f32.mxu0 0.0
      %1555 = vmatmul.mubr.f32.gmra.mrb[0].mxu0 %v1431
      %v1556 = vpop.f32.mrb[0].mxu0
      %v1557 = vadd.f32 %v1409, %v1556
      %v1558 = vpop.f32.mrb[0].mxu0
      %1559 = vmatprep.mubr.f32.mxu0 0.0
      %1560 = vmatmul.mubr.f32.gmra.mrb[0].mxu0 %v1434
      %v1561 = vpop.f32.mrb[0].mxu0
      %v1562 = vadd.f32 %v1409, %v1561
      %v1563 = vpop.f32.mrb[0].mxu0
      %1564 = vmatprep.mubr.f32.mxu0 0.0
      %1565 = vmatmul.mubr.f32.gmra.mrb[0].mxu0 %v1437
      %v1566 = vpop.f32.mrb[0].mxu0
      %v1567 = vadd.f32 %v1409, %v1566
      %v1568 = vpop.f32.mrb[0].mxu0
      %1569 = vmatprep.mubr.f32.mxu0 0.0
      %1570 = vmatmul.mubr.f32.gmra.mrb[0].mxu0 %v1440
      %v1571 = vpop.f32.mrb[0].mxu0
      %v1572 = vadd.f32 %v1409, %v1571
      %v1573 = vpop.f32.mrb[0].mxu0
      %1574 = vmatprep.mubr.f32.mxu0 0.0
      %1575 = vmatmul.mubr.f32.gmra.mrb[0].mxu0 %v1443
      %v1576 = vpop.f32.mrb[0].mxu0
      %v1577 = vadd.f32 %v1409, %v1576
      %v1578 = vpop.f32.mrb[0].mxu0
      %1579 = vmatprep.mubr.f32.mxu0 0.0
      %1580 = vmatmul.mubr.f32.gmra.mrb[0].mxu0 %v1446
      %v1581 = vpop.f32.mrb[0].mxu0
      %v1582 = vadd.f32 %v1409, %v1581
      %v1583 = vpop.f32.mrb[0].mxu0
      %1584 = vmatprep.mubr.f32.mxu0 0.0
      %1585 = vmatmul.mubr.f32.gmra.mrb[0].mxu0 %v1449
      %v1586 = vpop.f32.mrb[0].mxu0
      %v1587 = vadd.f32 %v1409, %v1586
      %v1588 = vpop.f32.mrb[0].mxu0
      %1589 = vmatprep.mubr.f32.mxu0 0.0
      %1590 = vmatmul.mubr.f32.gmra.mrb[0].mxu0 %v1452
      %v1591 = vpop.f32.mrb[0].mxu0
      %v1592 = vadd.f32 %v1409, %v1591
      %v1593 = vpop.f32.mrb[0].mxu0
      %1594 = vmatprep.mubr.f32.mxu0 0.0
      %1595 = vmatmul.mubr.f32.gmra.mrb[0].mxu0 %v1455
      %v1596 = vpop.f32.mrb[0].mxu0
      %v1597 = vadd.f32 %v1409, %v1596
      %v1598 = vpop.f32.mrb[0].mxu0
      %1599 = vmatprep.mubr.f32.mxu0 0.0
      %1600 = vmatmul.mubr.f32.gmra.mrb[0].mxu0 %v1458
      %v1601 = vpop.f32.mrb[0].mxu0
      %v1602 = vadd.f32 %v1409, %v1601
      %v1603 = vpop.f32.mrb[0].mxu0
      %1604 = vdwg.mxu0
      %v1605 = vmax.f32 %v1527, 0.0
      %v1606 = vmax.f32 %v1532, 0.0
      %v1607 = vmax.f32 %v1537, 0.0
      %v1608 = vmax.f32 %v1542, 0.0
      %v1609 = vmax.f32 %v1547, 0.0
      %v1610 = vmax.f32 %v1552, 0.0
      %v1611 = vmax.f32 %v1557, 0.0
      %v1612 = vmax.f32 %v1562, 0.0
      %v1613 = vmax.f32 %v1567, 0.0
      %v1614 = vmax.f32 %v1572, 0.0
      %v1615 = vmax.f32 %v1577, 0.0
      %v1616 = vmax.f32 %v1582, 0.0
      %v1617 = vmax.f32 %v1587, 0.0
      %v1618 = vmax.f32 %v1592, 0.0
      %v1619 = vmax.f32 %v1597, 0.0
      %v1620 = vmax.f32 %v1602, 0.0
      %v1621 = vld [vmem:[%s11] sm:$0xff]
      %v1622 = vld [vmem:[%s11 + $0x8] sm:$0xff]
      %v1623 = vld [vmem:[%s12] sm:$0x1]
      %v1625 = vlaneseq
      %v1626 = vshrl.u32 %v1625, 7
      %v1627 = vsub.s32 0, %v1626
      %v1628 = vrot.slane %v1623, %v1627
      %v1631 = vsel %vm976, %v1605, 0
      %v1634 = vsel %vm976, %v1606, 0
      %v1637 = vsel %vm976, %v1607, 0
      %v1640 = vsel %vm976, %v1608, 0
      %v1643 = vsel %vm976, %v1609, 0
      %v1646 = vsel %vm976, %v1610, 0
      %v1649 = vsel %vm976, %v1611, 0
      %v1652 = vsel %vm976, %v1612, 0
      %v1655 = vsel %vm976, %v1613, 0
      %v1658 = vsel %vm976, %v1614, 0
      %v1661 = vsel %vm976, %v1615, 0
      %v1664 = vsel %vm976, %v1616, 0
      %v1667 = vsel %vm976, %v1617, 0
      %v1670 = vsel %vm976, %v1618, 0
      %v1673 = vsel %vm976, %v1619, 0
      %v1676 = vsel %vm976, %v1620, 0
      %1678 = vmatprep.subr.mxu0 0.0
      %1679 = vmatpush1.msra.mxu0 %v1621
      %1680 = vmatprep.subr.mxu0 0.0
      %1681 = vmatpush1.msra.mxu0 %v1622
      %1682 = vmatprep.subr.mxu0 0.0
      %1683 = vmatpush1.msra.mxu0 0.0
      %1684 = vmatprep.subr.mxu0 0.0
      %1685 = vmatpush1.msra.mxu0 0.0
      %1686 = vmatprep.subr.mxu0 0.0
      %1687 = vmatpush1.msra.mxu0 0.0
      %1688 = vmatprep.subr.mxu0 0.0
      %1689 = vmatpush1.msra.mxu0 0.0
      %1690 = vmatprep.subr.mxu0 0.0
      %1691 = vmatpush1.msra.mxu0 0.0
      %1692 = vmatprep.subr.mxu0 0.0
      %1693 = vmatpush1.msra.mxu0 0.0
      %1694 = vmatprep.subr.mxu0 0.0
      %1695 = vmatpush1.msra.mxu0 0.0
      %1696 = vmatprep.subr.mxu0 0.0
      %1697 = vmatpush1.msra.mxu0 0.0
      %1698 = vmatprep.subr.mxu0 0.0
      %1699 = vmatpush1.msra.mxu0 0.0
      %1700 = vmatprep.subr.mxu0 0.0
      %1701 = vmatpush1.msra.mxu0 0.0
      %1702 = vmatprep.subr.mxu0 0.0
      %1703 = vmatpush1.msra.mxu0 0.0
      %1704 = vmatprep.subr.mxu0 0.0
      %1705 = vmatpush1.msra.mxu0 0.0
      %1706 = vmatprep.subr.mxu0 0.0
      %1707 = vmatpush1.msra.mxu0 0.0
      %1708 = vmatprep.subr.mxu0 0.0
      %1709 = vmatpush1.msra.mxu0 0.0
      %1710 = vmatprep.subr.mxu0 0.0
      %1711 = vmatpush1.msra.mxu0 0.0
      %1712 = vmatprep.subr.mxu0 0.0
      %1713 = vmatpush1.msra.mxu0 0.0
      %1714 = vmatprep.subr.mxu0 0.0
      %1715 = vmatpush1.msra.mxu0 0.0
      %1716 = vmatprep.subr.mxu0 0.0
      %1717 = vmatpush1.msra.mxu0 0.0
      %1718 = vmatprep.subr.mxu0 0.0
      %1719 = vmatpush1.msra.mxu0 0.0
      %1720 = vmatprep.subr.mxu0 0.0
      %1721 = vmatpush1.msra.mxu0 0.0
      %1722 = vmatprep.subr.mxu0 0.0
      %1723 = vmatpush1.msra.mxu0 0.0
      %1724 = vmatprep.subr.mxu0 0.0
      %1725 = vmatpush1.msra.mxu0 0.0
      %1726 = vmatprep.subr.mxu0 0.0
      %1727 = vmatpush1.msra.mxu0 0.0
      %1728 = vmatprep.subr.mxu0 0.0
      %1729 = vmatpush1.msra.mxu0 0.0
      %1730 = vmatprep.subr.mxu0 0.0
      %1731 = vmatpush1.msra.mxu0 0.0
      %1732 = vmatprep.subr.mxu0 0.0
      %1733 = vmatpush1.msra.mxu0 0.0
      %1734 = vmatprep.subr.mxu0 0.0
      %1735 = vmatpush1.msra.mxu0 0.0
      %1736 = vmatprep.subr.mxu0 0.0
      %1737 = vmatpush1.msra.mxu0 0.0
      %1738 = vmatprep.subr.mxu0 0.0
      %1739 = vmatpush1.msra.mxu0 0.0
      %1740 = vmatprep.subr.mxu0 0.0
      %1741 = vmatpush1.msra.mxu0 0.0
      %1742 = vmatprep.mubr.f32.mxu0 0.0
      %1743 = vmatmul.mubr.f32.gmra.mrb[0].mxu0 %v1631
      %v1744 = vpop.f32.mrb[0].mxu0
      %v1745 = vadd.f32 %v1628, %v1744
      %v1746 = vpop.f32.mrb[0].mxu0
      %1747 = vmatprep.mubr.f32.mxu0 0.0
      %1748 = vmatmul.mubr.f32.gmra.mrb[0].mxu0 %v1634
      %v1749 = vpop.f32.mrb[0].mxu0
      %v1750 = vadd.f32 %v1628, %v1749
      %v1751 = vpop.f32.mrb[0].mxu0
      %1752 = vmatprep.mubr.f32.mxu0 0.0
      %1753 = vmatmul.mubr.f32.gmra.mrb[0].mxu0 %v1637
      %v1754 = vpop.f32.mrb[0].mxu0
      %v1755 = vadd.f32 %v1628, %v1754
      %v1756 = vpop.f32.mrb[0].mxu0
      %1757 = vmatprep.mubr.f32.mxu0 0.0
      %1758 = vmatmul.mubr.f32.gmra.mrb[0].mxu0 %v1640
      %v1759 = vpop.f32.mrb[0].mxu0
      %v1760 = vadd.f32 %v1628, %v1759
      %v1761 = vpop.f32.mrb[0].mxu0
      %1762 = vmatprep.mubr.f32.mxu0 0.0
      %1763 = vmatmul.mubr.f32.gmra.mrb[0].mxu0 %v1643
      %v1764 = vpop.f32.mrb[0].mxu0
      %v1765 = vadd.f32 %v1628, %v1764
      %v1766 = vpop.f32.mrb[0].mxu0
      %1767 = vmatprep.mubr.f32.mxu0 0.0
      %1768 = vmatmul.mubr.f32.gmra.mrb[0].mxu0 %v1646
      %v1769 = vpop.f32.mrb[0].mxu0
      %v1770 = vadd.f32 %v1628, %v1769
      %v1771 = vpop.f32.mrb[0].mxu0
      %1772 = vmatprep.mubr.f32.mxu0 0.0
      %1773 = vmatmul.mubr.f32.gmra.mrb[0].mxu0 %v1649
      %v1774 = vpop.f32.mrb[0].mxu0
      %v1775 = vadd.f32 %v1628, %v1774
      %v1776 = vpop.f32.mrb[0].mxu0
      %1777 = vmatprep.mubr.f32.mxu0 0.0
      %1778 = vmatmul.mubr.f32.gmra.mrb[0].mxu0 %v1652
      %v1779 = vpop.f32.mrb[0].mxu0
      %v1780 = vadd.f32 %v1628, %v1779
      %v1781 = vpop.f32.mrb[0].mxu0
      %1782 = vmatprep.mubr.f32.mxu0 0.0
      %1783 = vmatmul.mubr.f32.gmra.mrb[0].mxu0 %v1655
      %v1784 = vpop.f32.mrb[0].mxu0
      %v1785 = vadd.f32 %v1628, %v1784
      %v1786 = vpop.f32.mrb[0].mxu0
      %1787 = vmatprep.mubr.f32.mxu0 0.0
      %1788 = vmatmul.mubr.f32.gmra.mrb[0].mxu0 %v1658
      %v1789 = vpop.f32.mrb[0].mxu0
      %v1790 = vadd.f32 %v1628, %v1789
      %v1791 = vpop.f32.mrb[0].mxu0
      %1792 = vmatprep.mubr.f32.mxu0 0.0
      %1793 = vmatmul.mubr.f32.gmra.mrb[0].mxu0 %v1661
      %v1794 = vpop.f32.mrb[0].mxu0
      %v1795 = vadd.f32 %v1628, %v1794
      %v1796 = vpop.f32.mrb[0].mxu0
      %1797 = vmatprep.mubr.f32.mxu0 0.0
      %1798 = vmatmul.mubr.f32.gmra.mrb[0].mxu0 %v1664
      %v1799 = vpop.f32.mrb[0].mxu0
      %v1800 = vadd.f32 %v1628, %v1799
      %v1801 = vpop.f32.mrb[0].mxu0
      %1802 = vmatprep.mubr.f32.mxu0 0.0
      %1803 = vmatmul.mubr.f32.gmra.mrb[0].mxu0 %v1667
      %v1804 = vpop.f32.mrb[0].mxu0
      %v1805 = vadd.f32 %v1628, %v1804
      %v1806 = vpop.f32.mrb[0].mxu0
      %1807 = vmatprep.mubr.f32.mxu0 0.0
      %1808 = vmatmul.mubr.f32.gmra.mrb[0].mxu0 %v1670
      %v1809 = vpop.f32.mrb[0].mxu0
      %v1810 = vadd.f32 %v1628, %v1809
      %v1811 = vpop.f32.mrb[0].mxu0
      %1812 = vmatprep.mubr.f32.mxu0 0.0
      %1813 = vmatmul.mubr.f32.gmra.mrb[0].mxu0 %v1673
      %v1814 = vpop.f32.mrb[0].mxu0
      %v1815 = vadd.f32 %v1628, %v1814
      %v1816 = vpop.f32.mrb[0].mxu0
      %1817 = vmatprep.mubr.f32.mxu0 0.0
      %1818 = vmatmul.mubr.f32.gmra.mrb[0].mxu0 %v1676
      %v1819 = vpop.f32.mrb[0].mxu0
      %v1820 = vadd.f32 %v1628, %v1819
      %v1821 = vpop.f32.mrb[0].mxu0
      %1822 = vdwg.mxu0
      %v1823 = vsel %vm1411, %v1745, -inf
      %v1824 = vrot.slane %v1823, 4
      %v1825 = vmax.f32 %v1823, %v1824
      %v1826 = vrot.slane %v1825, 2
      %v1827 = vmax.f32 %v1825, %v1826
      %v1828 = vrot.slane %v1827, 1
      %v1829 = vmax.f32 %v1827, %v1828
      %v1830 = vsel %vm1411, %v1750, -inf
      %v1831 = vrot.slane %v1830, 4
      %v1832 = vmax.f32 %v1830, %v1831
      %v1833 = vrot.slane %v1832, 2
      %v1834 = vmax.f32 %v1832, %v1833
      %v1835 = vrot.slane %v1834, 1
      %v1836 = vmax.f32 %v1834, %v1835
      %v1837 = vsel %vm1411, %v1755, -inf
      %v1838 = vrot.slane %v1837, 4
      %v1839 = vmax.f32 %v1837, %v1838
      %v1840 = vrot.slane %v1839, 2
      %v1841 = vmax.f32 %v1839, %v1840
      %v1842 = vrot.slane %v1841, 1
      %v1843 = vmax.f32 %v1841, %v1842
      %v1844 = vsel %vm1411, %v1760, -inf
      %v1845 = vrot.slane %v1844, 4
      %v1846 = vmax.f32 %v1844, %v1845
      %v1847 = vrot.slane %v1846, 2
      %v1848 = vmax.f32 %v1846, %v1847
      %v1849 = vrot.slane %v1848, 1
      %v1850 = vmax.f32 %v1848, %v1849
      %v1851 = vsel %vm1411, %v1765, -inf
      %v1852 = vrot.slane %v1851, 4
      %v1853 = vmax.f32 %v1851, %v1852
      %v1854 = vrot.slane %v1853, 2
      %v1855 = vmax.f32 %v1853, %v1854
      %v1856 = vrot.slane %v1855, 1
      %v1857 = vmax.f32 %v1855, %v1856
      %v1858 = vsel %vm1411, %v1770, -inf
      %v1859 = vrot.slane %v1858, 4
      %v1860 = vmax.f32 %v1858, %v1859
      %v1861 = vrot.slane %v1860, 2
      %v1862 = vmax.f32 %v1860, %v1861
      %v1863 = vrot.slane %v1862, 1
      %v1864 = vmax.f32 %v1862, %v1863
      %v1865 = vsel %vm1411, %v1775, -inf
      %v1866 = vrot.slane %v1865, 4
      %v1867 = vmax.f32 %v1865, %v1866
      %v1868 = vrot.slane %v1867, 2
      %v1869 = vmax.f32 %v1867, %v1868
      %v1870 = vrot.slane %v1869, 1
      %v1871 = vmax.f32 %v1869, %v1870
      %v1872 = vsel %vm1411, %v1780, -inf
      %v1873 = vrot.slane %v1872, 4
      %v1874 = vmax.f32 %v1872, %v1873
      %v1875 = vrot.slane %v1874, 2
      %v1876 = vmax.f32 %v1874, %v1875
      %v1877 = vrot.slane %v1876, 1
      %v1878 = vmax.f32 %v1876, %v1877
      %v1879 = vsel %vm1411, %v1785, -inf
      %v1880 = vrot.slane %v1879, 4
      %v1881 = vmax.f32 %v1879, %v1880
      %v1882 = vrot.slane %v1881, 2
      %v1883 = vmax.f32 %v1881, %v1882
      %v1884 = vrot.slane %v1883, 1
      %v1885 = vmax.f32 %v1883, %v1884
      %v1886 = vsel %vm1411, %v1790, -inf
      %v1887 = vrot.slane %v1886, 4
      %v1888 = vmax.f32 %v1886, %v1887
      %v1889 = vrot.slane %v1888, 2
      %v1890 = vmax.f32 %v1888, %v1889
      %v1891 = vrot.slane %v1890, 1
      %v1892 = vmax.f32 %v1890, %v1891
      %v1893 = vsel %vm1411, %v1795, -inf
      %v1894 = vrot.slane %v1893, 4
      %v1895 = vmax.f32 %v1893, %v1894
      %v1896 = vrot.slane %v1895, 2
      %v1897 = vmax.f32 %v1895, %v1896
      %v1898 = vrot.slane %v1897, 1
      %v1899 = vmax.f32 %v1897, %v1898
      %v1900 = vsel %vm1411, %v1800, -inf
      %v1901 = vrot.slane %v1900, 4
      %v1902 = vmax.f32 %v1900, %v1901
      %v1903 = vrot.slane %v1902, 2
      %v1904 = vmax.f32 %v1902, %v1903
      %v1905 = vrot.slane %v1904, 1
      %v1906 = vmax.f32 %v1904, %v1905
      %v1907 = vsel %vm1411, %v1805, -inf
      %v1908 = vrot.slane %v1907, 4
      %v1909 = vmax.f32 %v1907, %v1908
      %v1910 = vrot.slane %v1909, 2
      %v1911 = vmax.f32 %v1909, %v1910
      %v1912 = vrot.slane %v1911, 1
      %v1913 = vmax.f32 %v1911, %v1912
      %v1914 = vsel %vm1411, %v1810, -inf
      %v1915 = vrot.slane %v1914, 4
      %v1916 = vmax.f32 %v1914, %v1915
      %v1917 = vrot.slane %v1916, 2
      %v1918 = vmax.f32 %v1916, %v1917
      %v1919 = vrot.slane %v1918, 1
      %v1920 = vmax.f32 %v1918, %v1919
      %v1921 = vsel %vm1411, %v1815, -inf
      %v1922 = vrot.slane %v1921, 4
      %v1923 = vmax.f32 %v1921, %v1922
      %v1924 = vrot.slane %v1923, 2
      %v1925 = vmax.f32 %v1923, %v1924
      %v1926 = vrot.slane %v1925, 1
      %v1927 = vmax.f32 %v1925, %v1926
      %v1928 = vsel %vm1411, %v1820, -inf
      %v1929 = vrot.slane %v1928, 4
      %v1930 = vmax.f32 %v1928, %v1929
      %v1931 = vrot.slane %v1930, 2
      %v1932 = vmax.f32 %v1930, %v1931
      %v1933 = vrot.slane %v1932, 1
      %v1934 = vmax.f32 %v1932, %v1933
      %v1935 = vsub.f32 %v1745, %v1829
      %v1936 = vsub.f32 %v1750, %v1836
      %v1937 = vsub.f32 %v1755, %v1843
      %v1938 = vsub.f32 %v1760, %v1850
      %v1939 = vsub.f32 %v1765, %v1857
      %v1940 = vsub.f32 %v1770, %v1864
      %v1941 = vsub.f32 %v1775, %v1871
      %v1942 = vsub.f32 %v1780, %v1878
      %v1943 = vsub.f32 %v1785, %v1885
      %v1944 = vsub.f32 %v1790, %v1892
      %v1945 = vsub.f32 %v1795, %v1899
      %v1946 = vsub.f32 %v1800, %v1906
      %v1947 = vsub.f32 %v1805, %v1913
      %v1948 = vsub.f32 %v1810, %v1920
      %v1949 = vsub.f32 %v1815, %v1927
      %v1950 = vsub.f32 %v1820, %v1934
      %v1951 = vmul.f32 %v1935, 1.442695
      %v1952 = vpow.pop %v1951
      %v1953 = vmul.f32 %v1936, 1.442695
      %v1954 = vpow.pop %v1953
      %v1955 = vmul.f32 %v1937, 1.442695
      %v1956 = vpow.pop %v1955
      %v1957 = vmul.f32 %v1938, 1.442695
      %v1958 = vpow.pop %v1957
      %v1959 = vmul.f32 %v1939, 1.442695
      %v1960 = vpow.pop %v1959
      %v1961 = vmul.f32 %v1940, 1.442695
      %v1962 = vpow.pop %v1961
      %v1963 = vmul.f32 %v1941, 1.442695
      %v1964 = vpow.pop %v1963
      %v1965 = vmul.f32 %v1942, 1.442695
      %v1966 = vpow.pop %v1965
      %v1967 = vmul.f32 %v1943, 1.442695
      %v1968 = vpow.pop %v1967
      %v1969 = vmul.f32 %v1944, 1.442695
      %v1970 = vpow.pop %v1969
      %v1971 = vmul.f32 %v1945, 1.442695
      %v1972 = vpow.pop %v1971
      %v1973 = vmul.f32 %v1946, 1.442695
      %v1974 = vpow.pop %v1973
      %v1975 = vmul.f32 %v1947, 1.442695
      %v1976 = vpow.pop %v1975
      %v1977 = vmul.f32 %v1948, 1.442695
      %v1978 = vpow.pop %v1977
      %v1979 = vmul.f32 %v1949, 1.442695
      %v1980 = vpow.pop %v1979
      %v1981 = vmul.f32 %v1950, 1.442695
      %v1982 = vpow.pop %v1981
      %v1983 = vsel %vm1411, %v1952, 0.0
      %v1984 = vrot.slane %v1983, 4
      %v1985 = vadd.f32 %v1983, %v1984
      %v1986 = vrot.slane %v1985, 2
      %v1987 = vadd.f32 %v1985, %v1986
      %v1988 = vrot.slane %v1987, 1
      %v1989 = vadd.f32 %v1987, %v1988
      %v1990 = vsel %vm1411, %v1954, 0.0
      %v1991 = vrot.slane %v1990, 4
      %v1992 = vadd.f32 %v1990, %v1991
      %v1993 = vrot.slane %v1992, 2
      %v1994 = vadd.f32 %v1992, %v1993
      %v1995 = vrot.slane %v1994, 1
      %v1996 = vadd.f32 %v1994, %v1995
      %v1997 = vsel %vm1411, %v1956, 0.0
      %v1998 = vrot.slane %v1997, 4
      %v1999 = vadd.f32 %v1997, %v1998
      %v2000 = vrot.slane %v1999, 2
      %v2001 = vadd.f32 %v1999, %v2000
      %v2002 = vrot.slane %v2001, 1
      %v2003 = vadd.f32 %v2001, %v2002
      %v2004 = vsel %vm1411, %v1958, 0.0
      %v2005 = vrot.slane %v2004, 4
      %v2006 = vadd.f32 %v2004, %v2005
      %v2007 = vrot.slane %v2006, 2
      %v2008 = vadd.f32 %v2006, %v2007
      %v2009 = vrot.slane %v2008, 1
      %v2010 = vadd.f32 %v2008, %v2009
      %v2011 = vsel %vm1411, %v1960, 0.0
      %v2012 = vrot.slane %v2011, 4
      %v2013 = vadd.f32 %v2011, %v2012
      %v2014 = vrot.slane %v2013, 2
      %v2015 = vadd.f32 %v2013, %v2014
      %v2016 = vrot.slane %v2015, 1
      %v2017 = vadd.f32 %v2015, %v2016
      %v2018 = vsel %vm1411, %v1962, 0.0
      %v2019 = vrot.slane %v2018, 4
      %v2020 = vadd.f32 %v2018, %v2019
      %v2021 = vrot.slane %v2020, 2
      %v2022 = vadd.f32 %v2020, %v2021
      %v2023 = vrot.slane %v2022, 1
      %v2024 = vadd.f32 %v2022, %v2023
      %v2025 = vsel %vm1411, %v1964, 0.0
      %v2026 = vrot.slane %v2025, 4
      %v2027 = vadd.f32 %v2025, %v2026
      %v2028 = vrot.slane %v2027, 2
      %v2029 = vadd.f32 %v2027, %v2028
      %v2030 = vrot.slane %v2029, 1
      %v2031 = vadd.f32 %v2029, %v2030
      %v2032 = vsel %vm1411, %v1966, 0.0
      %v2033 = vrot.slane %v2032, 4
      %v2034 = vadd.f32 %v2032, %v2033
      %v2035 = vrot.slane %v2034, 2
      %v2036 = vadd.f32 %v2034, %v2035
      %v2037 = vrot.slane %v2036, 1
      %v2038 = vadd.f32 %v2036, %v2037
      %v2039 = vsel %vm1411, %v1968, 0.0
      %v2040 = vrot.slane %v2039, 4
      %v2041 = vadd.f32 %v2039, %v2040
      %v2042 = vrot.slane %v2041, 2
      %v2043 = vadd.f32 %v2041, %v2042
      %v2044 = vrot.slane %v2043, 1
      %v2045 = vadd.f32 %v2043, %v2044
      %v2046 = vsel %vm1411, %v1970, 0.0
      %v2047 = vrot.slane %v2046, 4
      %v2048 = vadd.f32 %v2046, %v2047
      %v2049 = vrot.slane %v2048, 2
      %v2050 = vadd.f32 %v2048, %v2049
      %v2051 = vrot.slane %v2050, 1
      %v2052 = vadd.f32 %v2050, %v2051
      %v2053 = vsel %vm1411, %v1972, 0.0
      %v2054 = vrot.slane %v2053, 4
      %v2055 = vadd.f32 %v2053, %v2054
      %v2056 = vrot.slane %v2055, 2
      %v2057 = vadd.f32 %v2055, %v2056
      %v2058 = vrot.slane %v2057, 1
      %v2059 = vadd.f32 %v2057, %v2058
      %v2060 = vsel %vm1411, %v1974, 0.0
      %v2061 = vrot.slane %v2060, 4
      %v2062 = vadd.f32 %v2060, %v2061
      %v2063 = vrot.slane %v2062, 2
      %v2064 = vadd.f32 %v2062, %v2063
      %v2065 = vrot.slane %v2064, 1
      %v2066 = vadd.f32 %v2064, %v2065
      %v2067 = vsel %vm1411, %v1976, 0.0
      %v2068 = vrot.slane %v2067, 4
      %v2069 = vadd.f32 %v2067, %v2068
      %v2070 = vrot.slane %v2069, 2
      %v2071 = vadd.f32 %v2069, %v2070
      %v2072 = vrot.slane %v2071, 1
      %v2073 = vadd.f32 %v2071, %v2072
      %v2074 = vsel %vm1411, %v1978, 0.0
      %v2075 = vrot.slane %v2074, 4
      %v2076 = vadd.f32 %v2074, %v2075
      %v2077 = vrot.slane %v2076, 2
      %v2078 = vadd.f32 %v2076, %v2077
      %v2079 = vrot.slane %v2078, 1
      %v2080 = vadd.f32 %v2078, %v2079
      %v2081 = vsel %vm1411, %v1980, 0.0
      %v2082 = vrot.slane %v2081, 4
      %v2083 = vadd.f32 %v2081, %v2082
      %v2084 = vrot.slane %v2083, 2
      %v2085 = vadd.f32 %v2083, %v2084
      %v2086 = vrot.slane %v2085, 1
      %v2087 = vadd.f32 %v2085, %v2086
      %v2088 = vsel %vm1411, %v1982, 0.0
      %v2089 = vrot.slane %v2088, 4
      %v2090 = vadd.f32 %v2088, %v2089
      %v2091 = vrot.slane %v2090, 2
      %v2092 = vadd.f32 %v2090, %v2091
      %v2093 = vrot.slane %v2092, 1
      %v2094 = vadd.f32 %v2092, %v2093
      %v2095 = vrcp.pop %v1989
      %v2096 = vrcp.pop %v1996
      %v2097 = vrcp.pop %v2003
      %v2098 = vrcp.pop %v2010
      %v2099 = vrcp.pop %v2017
      %v2100 = vrcp.pop %v2024
      %v2101 = vrcp.pop %v2031
      %v2102 = vrcp.pop %v2038
      %v2103 = vrcp.pop %v2045
      %v2104 = vrcp.pop %v2052
      %v2105 = vrcp.pop %v2059
      %v2106 = vrcp.pop %v2066
      %v2107 = vrcp.pop %v2073
      %v2108 = vrcp.pop %v2080
      %v2109 = vrcp.pop %v2087
      %v2110 = vrcp.pop %v2094
      %v2111 = vmul.f32 %v1952, %v2095
      %v2112 = vmul.f32 %v1954, %v2096
      %v2113 = vmul.f32 %v1956, %v2097
      %v2114 = vmul.f32 %v1958, %v2098
      %v2115 = vmul.f32 %v1960, %v2099
      %v2116 = vmul.f32 %v1962, %v2100
      %v2117 = vmul.f32 %v1964, %v2101
      %v2118 = vmul.f32 %v1966, %v2102
      %v2119 = vmul.f32 %v1968, %v2103
      %v2120 = vmul.f32 %v1970, %v2104
      %v2121 = vmul.f32 %v1972, %v2105
      %v2122 = vmul.f32 %v1974, %v2106
      %v2123 = vmul.f32 %v1976, %v2107
      %v2124 = vmul.f32 %v1978, %v2108
      %v2125 = vmul.f32 %v1980, %v2109
      %v2126 = vmul.f32 %v1982, %v2110
      %v2127 = vld [vmem:[%s672] sm:$0xff]
      %v2128 = vld [vmem:[%s672 + $0x8] sm:$0xff]
      %v2129 = vld [vmem:[%s672 + $0x10] sm:$0xff]
      %v2130 = vld [vmem:[%s672 + $0x18] sm:$0xff]
      %v2131 = vld [vmem:[%s672 + $0x20] sm:$0xff]
      %v2132 = vld [vmem:[%s672 + $0x28] sm:$0xff]
      %v2133 = vld [vmem:[%s672 + $0x30] sm:$0xff]
      %v2134 = vld [vmem:[%s672 + $0x38] sm:$0xff]
      %v2135 = vld [vmem:[%s672 + $0x40] sm:$0xff]
      %v2136 = vld [vmem:[%s672 + $0x48] sm:$0xff]
      %v2137 = vld [vmem:[%s672 + $0x50] sm:$0xff]
      %v2138 = vld [vmem:[%s672 + $0x58] sm:$0xff]
      %v2139 = vld [vmem:[%s672 + $0x60] sm:$0xff]
      %v2140 = vld [vmem:[%s672 + $0x68] sm:$0xff]
      %v2141 = vld [vmem:[%s672 + $0x70] sm:$0xff]
      %v2142 = vld [vmem:[%s672 + $0x78] sm:$0xff]
      %v2143 = vadd.f32 %v2127, %v1092
      %v2144 = vadd.f32 %v2128, %v1097
      %v2145 = vadd.f32 %v2129, %v1102
      %v2146 = vadd.f32 %v2130, %v1107
      %v2147 = vadd.f32 %v2131, %v1112
      %v2148 = vadd.f32 %v2132, %v1117
      %v2149 = vadd.f32 %v2133, %v1122
      %v2150 = vadd.f32 %v2134, %v1127
      %v2151 = vadd.f32 %v2135, %v1132
      %v2152 = vadd.f32 %v2136, %v1137
      %v2153 = vadd.f32 %v2137, %v1142
      %v2154 = vadd.f32 %v2138, %v1147
      %v2155 = vadd.f32 %v2139, %v1152
      %v2156 = vadd.f32 %v2140, %v1157
      %v2157 = vadd.f32 %v2141, %v1162
      %v2158 = vadd.f32 %v2142, %v1167
      %v2159 = vmul.f32 %v2143, %v2111
      %v2160 = vmul.f32 %v2144, %v2112
      %v2161 = vmul.f32 %v2145, %v2113
      %v2162 = vmul.f32 %v2146, %v2114
      %v2163 = vmul.f32 %v2147, %v2115
      %v2164 = vmul.f32 %v2148, %v2116
      %v2165 = vmul.f32 %v2149, %v2117
      %v2166 = vmul.f32 %v2150, %v2118
      %v2167 = vmul.f32 %v2151, %v2119
      %v2168 = vmul.f32 %v2152, %v2120
      %v2169 = vmul.f32 %v2153, %v2121
      %v2170 = vmul.f32 %v2154, %v2122
      %v2171 = vmul.f32 %v2155, %v2123
      %v2172 = vmul.f32 %v2156, %v2124
      %v2173 = vmul.f32 %v2157, %v2125
      %v2174 = vmul.f32 %v2158, %v2126
      %v2175 = vsel %vm1411, %v2159, 0.0
      %v2176 = vrot.slane %v2175, 4
      %v2177 = vadd.f32 %v2175, %v2176
      %v2178 = vrot.slane %v2177, 2
      %v2179 = vadd.f32 %v2177, %v2178
      %v2180 = vrot.slane %v2179, 1
      %v2181 = vadd.f32 %v2179, %v2180
      %v2182 = vsel %vm1411, %v2160, 0.0
      %v2183 = vrot.slane %v2182, 4
      %v2184 = vadd.f32 %v2182, %v2183
      %v2185 = vrot.slane %v2184, 2
      %v2186 = vadd.f32 %v2184, %v2185
      %v2187 = vrot.slane %v2186, 1
      %v2188 = vadd.f32 %v2186, %v2187
      %v2189 = vsel %vm1411, %v2161, 0.0
      %v2190 = vrot.slane %v2189, 4
      %v2191 = vadd.f32 %v2189, %v2190
      %v2192 = vrot.slane %v2191, 2
      %v2193 = vadd.f32 %v2191, %v2192
      %v2194 = vrot.slane %v2193, 1
      %v2195 = vadd.f32 %v2193, %v2194
      %v2196 = vsel %vm1411, %v2162, 0.0
      %v2197 = vrot.slane %v2196, 4
      %v2198 = vadd.f32 %v2196, %v2197
      %v2199 = vrot.slane %v2198, 2
      %v2200 = vadd.f32 %v2198, %v2199
      %v2201 = vrot.slane %v2200, 1
      %v2202 = vadd.f32 %v2200, %v2201
      %v2203 = vsel %vm1411, %v2163, 0.0
      %v2204 = vrot.slane %v2203, 4
      %v2205 = vadd.f32 %v2203, %v2204
      %v2206 = vrot.slane %v2205, 2
      %v2207 = vadd.f32 %v2205, %v2206
      %v2208 = vrot.slane %v2207, 1
      %v2209 = vadd.f32 %v2207, %v2208
      %v2210 = vsel %vm1411, %v2164, 0.0
      %v2211 = vrot.slane %v2210, 4
      %v2212 = vadd.f32 %v2210, %v2211
      %v2213 = vrot.slane %v2212, 2
      %v2214 = vadd.f32 %v2212, %v2213
      %v2215 = vrot.slane %v2214, 1
      %v2216 = vadd.f32 %v2214, %v2215
      %v2217 = vsel %vm1411, %v2165, 0.0
      %v2218 = vrot.slane %v2217, 4
      %v2219 = vadd.f32 %v2217, %v2218
      %v2220 = vrot.slane %v2219, 2
      %v2221 = vadd.f32 %v2219, %v2220
      %v2222 = vrot.slane %v2221, 1
      %v2223 = vadd.f32 %v2221, %v2222
      %v2224 = vsel %vm1411, %v2166, 0.0
      %v2225 = vrot.slane %v2224, 4
      %v2226 = vadd.f32 %v2224, %v2225
      %v2227 = vrot.slane %v2226, 2
      %v2228 = vadd.f32 %v2226, %v2227
      %v2229 = vrot.slane %v2228, 1
      %v2230 = vadd.f32 %v2228, %v2229
      %v2231 = vsel %vm1411, %v2167, 0.0
      %v2232 = vrot.slane %v2231, 4
      %v2233 = vadd.f32 %v2231, %v2232
      %v2234 = vrot.slane %v2233, 2
      %v2235 = vadd.f32 %v2233, %v2234
      %v2236 = vrot.slane %v2235, 1
      %v2237 = vadd.f32 %v2235, %v2236
      %v2238 = vsel %vm1411, %v2168, 0.0
      %v2239 = vrot.slane %v2238, 4
      %v2240 = vadd.f32 %v2238, %v2239
      %v2241 = vrot.slane %v2240, 2
      %v2242 = vadd.f32 %v2240, %v2241
      %v2243 = vrot.slane %v2242, 1
      %v2244 = vadd.f32 %v2242, %v2243
      %v2245 = vsel %vm1411, %v2169, 0.0
      %v2246 = vrot.slane %v2245, 4
      %v2247 = vadd.f32 %v2245, %v2246
      %v2248 = vrot.slane %v2247, 2
      %v2249 = vadd.f32 %v2247, %v2248
      %v2250 = vrot.slane %v2249, 1
      %v2251 = vadd.f32 %v2249, %v2250
      %v2252 = vsel %vm1411, %v2170, 0.0
      %v2253 = vrot.slane %v2252, 4
      %v2254 = vadd.f32 %v2252, %v2253
      %v2255 = vrot.slane %v2254, 2
      %v2256 = vadd.f32 %v2254, %v2255
      %v2257 = vrot.slane %v2256, 1
      %v2258 = vadd.f32 %v2256, %v2257
      %v2259 = vsel %vm1411, %v2171, 0.0
      %v2260 = vrot.slane %v2259, 4
      %v2261 = vadd.f32 %v2259, %v2260
      %v2262 = vrot.slane %v2261, 2
      %v2263 = vadd.f32 %v2261, %v2262
      %v2264 = vrot.slane %v2263, 1
      %v2265 = vadd.f32 %v2263, %v2264
      %v2266 = vsel %vm1411, %v2172, 0.0
      %v2267 = vrot.slane %v2266, 4
      %v2268 = vadd.f32 %v2266, %v2267
      %v2269 = vrot.slane %v2268, 2
      %v2270 = vadd.f32 %v2268, %v2269
      %v2271 = vrot.slane %v2270, 1
      %v2272 = vadd.f32 %v2270, %v2271
      %v2273 = vsel %vm1411, %v2173, 0.0
      %v2274 = vrot.slane %v2273, 4
      %v2275 = vadd.f32 %v2273, %v2274
      %v2276 = vrot.slane %v2275, 2
      %v2277 = vadd.f32 %v2275, %v2276
      %v2278 = vrot.slane %v2277, 1
      %v2279 = vadd.f32 %v2277, %v2278
      %v2280 = vsel %vm1411, %v2174, 0.0
      %v2281 = vrot.slane %v2280, 4
      %v2282 = vadd.f32 %v2280, %v2281
      %v2283 = vrot.slane %v2282, 2
      %v2284 = vadd.f32 %v2282, %v2283
      %v2285 = vrot.slane %v2284, 1
      %v2286 = vadd.f32 %v2284, %v2285
      %v2287 = vld [vmem:[%s13] sm:$0xff]
      %v2288 = vld [vmem:[%s13 + $0x8] sm:$0xff]
      %v2289 = vld [vmem:[%s13 + $0x10] sm:$0xff]
      %v2290 = vld [vmem:[%s13 + $0x18] sm:$0xff]
      %v2291 = vld [vmem:[%s14] sm:$0x1]
      %v2293 = vlaneseq
      %v2294 = vshrl.u32 %v2293, 7
      %v2295 = vsub.s32 0, %v2294
      %v2296 = vrot.slane %v2291, %v2295
      %vm2314 = vcmask 1041409
      %v2315 = vsel %vm2314, %v2188, %v2181
      %vm2316 = vcmask 1042434
      %v2317 = vsel %vm2316, %v2195, %v2315
      %vm2318 = vcmask 1043459
      %v2319 = vsel %vm2318, %v2202, %v2317
      %vm2320 = vcmask 1044484
      %v2321 = vsel %vm2320, %v2209, %v2319
      %vm2322 = vcmask 1045509
      %v2323 = vsel %vm2322, %v2216, %v2321
      %vm2324 = vcmask 1046534
      %v2325 = vsel %vm2324, %v2223, %v2323
      %vm2326 = vcmask 1047559
      %v2327 = vsel %vm2326, %v2230, %v2325
      %v2328 = vsel %vm2314, %v2244, %v2237
      %v2329 = vsel %vm2316, %v2251, %v2328
      %v2330 = vsel %vm2318, %v2258, %v2329
      %v2331 = vsel %vm2320, %v2265, %v2330
      %v2332 = vsel %vm2322, %v2272, %v2331
      %v2333 = vsel %vm2324, %v2279, %v2332
      %v2334 = vsel %vm2326, %v2286, %v2333
      %v2335 = vsel %vm1411, %v2327, 0
      %v2337 = vsel %vm1411, %v2334, 0
      %2339 = vmatprep.subr.mxu0 0.0
      %2340 = vmatpush1.msra.mxu0 %v2287
      %2341 = vmatprep.subr.mxu0 0.0
      %2342 = vmatpush1.msra.mxu0 %v2288
      %2343 = vmatprep.subr.mxu0 0.0
      %2344 = vmatpush1.msra.mxu0 %v2289
      %2345 = vmatprep.subr.mxu0 0.0
      %2346 = vmatpush1.msra.mxu0 %v2290
      %2347 = vmatprep.subr.mxu0 0.0
      %2348 = vmatpush1.msra.mxu0 0.0
      %2349 = vmatprep.subr.mxu0 0.0
      %2350 = vmatpush1.msra.mxu0 0.0
      %2351 = vmatprep.subr.mxu0 0.0
      %2352 = vmatpush1.msra.mxu0 0.0
      %2353 = vmatprep.subr.mxu0 0.0
      %2354 = vmatpush1.msra.mxu0 0.0
      %2355 = vmatprep.subr.mxu0 0.0
      %2356 = vmatpush1.msra.mxu0 0.0
      %2357 = vmatprep.subr.mxu0 0.0
      %2358 = vmatpush1.msra.mxu0 0.0
      %2359 = vmatprep.subr.mxu0 0.0
      %2360 = vmatpush1.msra.mxu0 0.0
      %2361 = vmatprep.subr.mxu0 0.0
      %2362 = vmatpush1.msra.mxu0 0.0
      %2363 = vmatprep.subr.mxu0 0.0
      %2364 = vmatpush1.msra.mxu0 0.0
      %2365 = vmatprep.subr.mxu0 0.0
      %2366 = vmatpush1.msra.mxu0 0.0
      %2367 = vmatprep.subr.mxu0 0.0
      %2368 = vmatpush1.msra.mxu0 0.0
      %2369 = vmatprep.subr.mxu0 0.0
      %2370 = vmatpush1.msra.mxu0 0.0
      %2371 = vmatprep.subr.mxu0 0.0
      %2372 = vmatpush1.msra.mxu0 0.0
      %2373 = vmatprep.subr.mxu0 0.0
      %2374 = vmatpush1.msra.mxu0 0.0
      %2375 = vmatprep.subr.mxu0 0.0
      %2376 = vmatpush1.msra.mxu0 0.0
      %2377 = vmatprep.subr.mxu0 0.0
      %2378 = vmatpush1.msra.mxu0 0.0
      %2379 = vmatprep.subr.mxu0 0.0
      %2380 = vmatpush1.msra.mxu0 0.0
      %2381 = vmatprep.subr.mxu0 0.0
      %2382 = vmatpush1.msra.mxu0 0.0
      %2383 = vmatprep.subr.mxu0 0.0
      %2384 = vmatpush1.msra.mxu0 0.0
      %2385 = vmatprep.subr.mxu0 0.0
      %2386 = vmatpush1.msra.mxu0 0.0
      %2387 = vmatprep.subr.mxu0 0.0
      %2388 = vmatpush1.msra.mxu0 0.0
      %2389 = vmatprep.subr.mxu0 0.0
      %2390 = vmatpush1.msra.mxu0 0.0
      %2391 = vmatprep.subr.mxu0 0.0
      %2392 = vmatpush1.msra.mxu0 0.0
      %2393 = vmatprep.subr.mxu0 0.0
      %2394 = vmatpush1.msra.mxu0 0.0
      %2395 = vmatprep.subr.mxu0 0.0
      %2396 = vmatpush1.msra.mxu0 0.0
      %2397 = vmatprep.subr.mxu0 0.0
      %2398 = vmatpush1.msra.mxu0 0.0
      %2399 = vmatprep.subr.mxu0 0.0
      %2400 = vmatpush1.msra.mxu0 0.0
      %2401 = vmatprep.subr.mxu0 0.0
      %2402 = vmatpush1.msra.mxu0 0.0
      %2403 = vmatprep.mubr.f32.mxu0 0.0
      %2404 = vmatmul.mubr.f32.gmra.mrb[0].mxu0 %v2335
      %v2405 = vpop.f32.mrb[0].mxu0
      %v2406 = vadd.f32 %v2296, %v2405
      %v2407 = vpop.f32.mrb[0].mxu0
      %2408 = vmatprep.mubr.f32.mxu0 0.0
      %2409 = vmatmul.mubr.f32.gmra.mrb[0].mxu0 %v2337
      %v2410 = vpop.f32.mrb[0].mxu0
      %v2411 = vadd.f32 %v2296, %v2410
      %v2412 = vpop.f32.mrb[0].mxu0
      %2413 = vdwg.mxu0
      %v2414 = vld [vmem:[%s702] sm:$0xff]
      %v2415 = vld [vmem:[%s702 + $0x8] sm:$0xff]
      %v2416 = vadd.f32 %v2406, %v2414
      %v2417 = vadd.f32 %v2411, %v2415
      %2418 = vst.msk [vmem:[%s712] sm:$0xff] %vm976, %v2416
      %2419 = vst.msk [vmem:[%s712 + $0x8] sm:$0xff] %vm976, %v2417
      %s2420 = smul.u32 2, %s31
      %p2421 = scmp.lt.s32.totalorder %s30, 1
      %s2422 = scalar_select %p2421, %s30, 1
      %p2423 = scmp.lt.s32.totalorder %s2420, 3
      %s2424 = scalar_select %p2423, %s2420, 3
      %s2425 = smul.addr %s2422, 4
      %s2426 = sadd.s32 %s2424, %s2425
      %s2427 = smul.addr %s2426, 8
      %s2428 = scalar_lea.vmem %s15, %s2427
      // Predicated region
      $region81: #{encoder_attn_forward.3} parent=79 // pred_check
        %p2429 = pneg %p415
      $region82: #{encoder_attn_forward.3} parent=79 // pred_check_branch
        %2431 = sbr.rel (%p2429) target = $region84
      $region83: #{encoder_attn_forward.3} parent=79 // pred_region
        %s2432 = smul.u32 2, %s31
      $region84: #{encoder_attn_forward.3} parent=79 // pred_fallthru
        _
    $region80: #{encoder_attn_forward.3} parent=5 // pred_fallthru
      _
    %p2433 = scmp.le.s32.totalorder 2, %s21
    // Predicated region
    $region85: #{encoder_attn_forward.3} parent=5 // pred_check
      %p2434 = pneg %p2433
    $region86: #{encoder_attn_forward.3} parent=5 // pred_check_branch
      %2436 = sbr.rel (%p2434) target = $region88
    $region87: #{encoder_attn_forward.3} parent=5 // pred_region
      %s2437 = ssub.s32 %s21, 2
      // Predicated region
      $region89: #{encoder_attn_forward.3} parent=87 // pred_check
        %p2438 = pneg %p421
      $region90: #{encoder_attn_forward.3} parent=87 // pred_check_branch
        %2440 = sbr.rel (%p2438) target = $region92
      $region91: #{encoder_attn_forward.3} parent=87 // pred_region
        %s2441 = smul.u32 2, %s33
        %p2442 = scmp.lt.s32.totalorder %s32, 1
        %s2443 = scalar_select %p2442, %s32, 1
        %p2444 = scmp.lt.s32.totalorder %s2441, 3
        %s2445 = scalar_select %p2444, %s2441, 3
        %s2446 = smul.addr %s2443, 4
        %s2447 = sadd.s32 %s2445, %s2446
        %s2448 = smul.addr %s2447, 8
        %s2449 = scalar_lea.vmem %s15, %s2448
      $region92: #{encoder_attn_forward.3} parent=87 // pred_fallthru
        _
    $region88: #{encoder_attn_forward.3} parent=5 // pred_fallthru
      _
  $region6: #{encoder_attn_forward.3} parent=0 // loop_footer
    %s25 = sadd.s32 1, %s21
  $region7: #{encoder_attn_forward.3} parent=0 // loop_footer_branch
    %20 = sbr.rel target = $region3
  $region8: #{encoder_attn_forward.3} parent=0 // loop_exit
    _

</llo_original>
